<compile_context>
chip_gen: v7x
topology: tpu7x:2x2x1
jax: 0.10.0
libtpu: 0.0.40
codegen_flags: <defaults>
</compile_context>

<pallas_src>
import functools

import jax
import jax.numpy as jnp
from jax.experimental import pallas as pl
from jax.experimental.pallas import tpu as pltpu


def _silu(v):
    return v * jax.nn.sigmoid(v)


def middle_block_kernel(
    # activations
    x_ref, t_ref,
    # residual block 1
    r1c1w_ref, r1c1b_ref, r1tw_ref, r1tb_ref, r1c2w_ref, r1c2b_ref,
    # attention (single head)
    wq_ref, bq_ref, wk_ref, bk_ref, wv_ref, bv_ref, wo_ref, bo_ref,
    # residual block 2
    r2c1w_ref, r2c1b_ref, r2tw_ref, r2tb_ref, r2c2w_ref, r2c2b_ref,
    # output
    o_ref,
    *, seq_len, scale,
):
    L = seq_len
    x = x_ref[0]              # (L, C)
    t = t_ref[0]              # (1, Tc)
    t_act = _silu(t)

    # Constant shift matrices, built once and reused by all four convs.
    # (Sd @ h)[i] = h[i-1] (zero row at i=0); (Su @ h)[i] = h[i+1] (zero at L-1).
    row = jax.lax.broadcasted_iota(jnp.int32, (L, L), 0)
    col = jax.lax.broadcasted_iota(jnp.int32, (L, L), 1)
    shift_dn = (col == row - 1).astype(jnp.float32)
    shift_up = (col == row + 1).astype(jnp.float32)

    def conv3(h, w_ref, b_ref):
        # h: (L, Cin); w_ref: (3, Cin, Cout) tap-major; b_ref: (1, Cout)
        h_prev = jnp.dot(shift_dn, h, preferred_element_type=jnp.float32)
        h_next = jnp.dot(shift_up, h, preferred_element_type=jnp.float32)
        y = (jnp.dot(h_prev, w_ref[0], preferred_element_type=jnp.float32)
             + jnp.dot(h, w_ref[1], preferred_element_type=jnp.float32)
             + jnp.dot(h_next, w_ref[2], preferred_element_type=jnp.float32))
        return y + b_ref[...]

    def res_block(h, c1w, c1b, tw, tb, c2w, c2b):
        hh = conv3(_silu(h), c1w, c1b)
        temb = jnp.dot(t_act, tw[...], preferred_element_type=jnp.float32) + tb[...]
        hh = hh + temb                       # broadcast (1, C) over L rows
        # TODO(synk): nn.Dropout is identity here (eval mode, no RNG).
        hh = conv3(_silu(hh), c2w, c2b)
        return hh + h                        # identity shortcut (Cin == Cout)

    # ---- res1 ----
    h = res_block(x, r1c1w_ref, r1c1b_ref, r1tw_ref, r1tb_ref,
                  r1c2w_ref, r1c2b_ref)

    # ---- attention (n_heads=1, d_k=C) ----
    q = jnp.dot(h, wq_ref[...], preferred_element_type=jnp.float32) + bq_ref[...]
    k = jnp.dot(h, wk_ref[...], preferred_element_type=jnp.float32) + bk_ref[...]
    v = jnp.dot(h, wv_ref[...], preferred_element_type=jnp.float32) + bv_ref[...]
    # scores[i, j] = <q_i, k_j> : contract the feature dim of both operands
    scores = jax.lax.dot_general(
        q, k, (((1,), (1,)), ((), ())),
        preferred_element_type=jnp.float32) * scale          # (L, L)
    scores = scores - jnp.max(scores, axis=-1, keepdims=True)
    e = jnp.exp(scores)
    attn = e / jnp.sum(e, axis=-1, keepdims=True)
    ctx = jnp.dot(attn, v, preferred_element_type=jnp.float32)        # (L, C)
    ctx = jnp.dot(ctx, wo_ref[...], preferred_element_type=jnp.float32) + bo_ref[...]
    h = ctx + h

    # ---- res2 ----
    h = res_block(h, r2c1w_ref, r2c1b_ref, r2tw_ref, r2tb_ref,
                  r2c2w_ref, r2c2b_ref)

    o_ref[0] = h.astype(o_ref.dtype)


def middle_block_forward(x_ncl, t, params):
    """MiddleBlock forward: res1 -> attn -> res2.

    x_ncl:  (B, C, L) float32 (PyTorch NCL)
    t:      (B, Tc)   float32
    params: dict of PyTorch-layout weights (see init_params)
    returns (B, C, L)
    """
    B, C, L = x_ncl.shape
    Tc = t.shape[1]

    x_blc = jnp.transpose(x_ncl, (0, 2, 1))          # (B, L, C) channels-last
    t3 = t.reshape(B, 1, Tc)                         # keep last-2 dims = full dims

    def conv_w(w):   # (Cout, Cin, 3) -> (3, Cin, Cout), tap-major in->out
        return jnp.transpose(w, (2, 1, 0))

    def lin_w(w):    # (out, in) -> (in, out)
        return w.T

    def rowb(b):     # (C,) -> (1, C)
        return b.reshape(1, -1)

    r1, at, r2 = params["res1"], params["attn"], params["res2"]

    pw, pb = at["proj_w"], at["proj_b"]              # (3C, C), (3C,)
    wq, wk, wv = pw[0:C], pw[C:2 * C], pw[2 * C:3 * C]
    bq, bk, bv = pb[0:C], pb[C:2 * C], pb[2 * C:3 * C]

    weight_args = (
        conv_w(r1["c1_w"]), rowb(r1["c1_b"]),
        lin_w(r1["t_w"]), rowb(r1["t_b"]),
        conv_w(r1["c2_w"]), rowb(r1["c2_b"]),
        lin_w(wq), rowb(bq), lin_w(wk), rowb(bk), lin_w(wv), rowb(bv),
        lin_w(at["out_w"]), rowb(at["out_b"]),
        conv_w(r2["c1_w"]), rowb(r2["c1_b"]),
        lin_w(r2["t_w"]), rowb(r2["t_b"]),
        conv_w(r2["c2_w"]), rowb(r2["c2_b"]),
    )

    def full_spec(a):
        return pl.BlockSpec(a.shape, lambda b, nd=a.ndim: (0,) * nd)

    in_specs = [
        pl.BlockSpec((1, L, C), lambda b: (b, 0, 0)),      # x
        pl.BlockSpec((1, 1, Tc), lambda b: (b, 0, 0)),     # t
    ] + [full_spec(w) for w in weight_args]

    # Advisory cost estimate (per the whole call).
    conv_mm = 3 * 2 * L * C * C + 2 * 2 * L * L * C        # taps + shift matmuls
    res_flops = 2 * conv_mm + 2 * Tc * C
    attn_flops = 4 * 2 * L * C * C + 2 * 2 * L * L * C
    flops = B * (2 * res_flops + attn_flops)
    transcendentals = B * (2 * (3 * L * C + Tc) + L * L)
    bytes_accessed = 4 * (x_blc.size + t3.size + B * L * C
                          + sum(int(w.size) for w in weight_args))

    kernel = functools.partial(middle_block_kernel, seq_len=L,
                               scale=float(C) ** -0.5)

    out_blc = pl.pallas_call(
        kernel,
        out_shape=jax.ShapeDtypeStruct((B, L, C), x_ncl.dtype),
        grid=(B,),
        in_specs=in_specs,
        out_specs=pl.BlockSpec((1, L, C), lambda b: (b, 0, 0)),
        compiler_params=pltpu.CompilerParams(
            dimension_semantics=("parallel",)),
        cost_estimate=pl.CostEstimate(
            flops=int(flops),
            transcendentals=int(transcendentals),
            bytes_accessed=int(bytes_accessed)),
    )(x_blc, t3, *weight_args)

    return jnp.transpose(out_blc, (0, 2, 1))


# ----------------------------------------------------------------------------
# Pure-JAX reference (f32-exact) of MiddleBlock, for correctness checking.
# ----------------------------------------------------------------------------
def reference_middle_block(x, t, params):
    hp = jax.lax.Precision.HIGHEST

    def silu(v):
        return v * jax.nn.sigmoid(v)

    def conv1d(h, w, b):     # h (B,C,L); w (Cout,Cin,3); pad=1
        y = jax.lax.conv_general_dilated(
            h, w, window_strides=(1,), padding=((1, 1),),
            dimension_numbers=("NCH", "OIH", "NCH"), precision=hp)
        return y + b[None, :, None]

    def linear(h, w, b):     # h (..., in); w (out, in)
        return jnp.dot(h, w.T, precision=hp) + b

    def res_block(xb, tb, p):
        h = conv1d(silu(xb), p["c1_w"], p["c1_b"])
        h = h + linear(silu(tb), p["t_w"], p["t_b"])[:, :, None]
        h = conv1d(silu(h), p["c2_w"], p["c2_b"])
        return h + xb

    def attn_block(xb, p):
        B, C, L = xb.shape
        xl = jnp.transpose(xb, (0, 2, 1))                       # (B, L, C)
        qkv = linear(xl, p["proj_w"], p["proj_b"])              # (B, L, 3C)
        q, k, v = jnp.split(qkv, 3, axis=-1)
        a = jnp.einsum("bid,bjd->bij", q, k, precision=hp) * (C ** -0.5)
        a = jax.nn.softmax(a, axis=-1)
        r = jnp.einsum("bij,bjd->bid", a, v, precision=hp)
        r = linear(r, p["out_w"], p["out_b"]) + xl
        return jnp.transpose(r, (0, 2, 1))

    h = res_block(x, t, params["res1"])
    h = attn_block(h, params["attn"])
    h = res_block(h, t, params["res2"])
    return h


def init_params(key, C, Tc):
    ks = jax.random.split(key, 16)
    it = iter(ks)

    def u(shape, fan_in):
        bound = 1.0 / (fan_in ** 0.5)
        return jax.random.uniform(next(it), shape, jnp.float32, -bound, bound)

    def res_params():
        return dict(
            c1_w=u((C, C, 3), 3 * C), c1_b=u((C,), 3 * C),
            t_w=u((C, Tc), Tc), t_b=u((C,), Tc),
            c2_w=u((C, C, 3), 3 * C), c2_b=u((C,), 3 * C),
        )

    return dict(
        res1=res_params(),
        attn=dict(
            proj_w=u((3 * C, C), C), proj_b=u((3 * C,), C),
            out_w=u((C, C), C), out_b=u((C,), C),
        ),
        res2=res_params(),
    )


if __name__ == "__main__":
    key = jax.random.PRNGKey(0)
    k_x, k_t, k_p = jax.random.split(key, 3)

    B, C, L, Tc = 2, 8, 16, 32   # batch, n_channels, seq_len, time_channels

    x = jax.random.normal(k_x, (B, C, L), jnp.float32)
    t = jax.random.normal(k_t, (B, Tc), jnp.float32)
    params = init_params(k_p, C, Tc)

    out = middle_block_forward(x, t, params)
    out = jax.block_until_ready(out)

    ref = reference_middle_block(x, t, params)
    assert out.shape == (B, C, L), out.shape
    max_err = float(jnp.max(jnp.abs(out - ref)))
    assert jnp.allclose(out, ref, rtol=1e-3, atol=1e-3), max_err

    print("KERNEL_OK")
</pallas_src>

<mosaic_0001>
module attributes {stable_mosaic.version = 11 : i64} {
  func.func @middle_block_kernel(%arg0: i32, %arg1: memref<1x16x8xf32, #tpu.memory_space<vmem>>, %arg2: memref<1x1x32xf32, #tpu.memory_space<vmem>>, %arg3: memref<3x8x8xf32, #tpu.memory_space<vmem>>, %arg4: memref<1x8xf32, #tpu.memory_space<vmem>>, %arg5: memref<32x8xf32, #tpu.memory_space<vmem>>, %arg6: memref<1x8xf32, #tpu.memory_space<vmem>>, %arg7: memref<3x8x8xf32, #tpu.memory_space<vmem>>, %arg8: memref<1x8xf32, #tpu.memory_space<vmem>>, %arg9: memref<8x8xf32, #tpu.memory_space<vmem>>, %arg10: memref<1x8xf32, #tpu.memory_space<vmem>>, %arg11: memref<8x8xf32, #tpu.memory_space<vmem>>, %arg12: memref<1x8xf32, #tpu.memory_space<vmem>>, %arg13: memref<8x8xf32, #tpu.memory_space<vmem>>, %arg14: memref<1x8xf32, #tpu.memory_space<vmem>>, %arg15: memref<8x8xf32, #tpu.memory_space<vmem>>, %arg16: memref<1x8xf32, #tpu.memory_space<vmem>>, %arg17: memref<3x8x8xf32, #tpu.memory_space<vmem>>, %arg18: memref<1x8xf32, #tpu.memory_space<vmem>>, %arg19: memref<32x8xf32, #tpu.memory_space<vmem>>, %arg20: memref<1x8xf32, #tpu.memory_space<vmem>>, %arg21: memref<3x8x8xf32, #tpu.memory_space<vmem>>, %arg22: memref<1x8xf32, #tpu.memory_space<vmem>>, %arg23: memref<1x16x8xf32, #tpu.memory_space<vmem>>) attributes {dimension_semantics = [#tpu.dimension_semantics<parallel>], iteration_bounds = array<i64: 2>, scalar_prefetch = 0 : i64, scratch_operands = 0 : i64, tpu.core_type = #tpu.core_type<tc>, window_params = [{transform_indices = @transform_0, window_bounds = array<i64: 1, 16, 8>}, {transform_indices = @transform_1, window_bounds = array<i64: 1, 1, 32>}, {pipeline_mode = #tpu.pipeline_mode<synchronous>, transform_indices = @transform_2, window_bounds = array<i64: 3, 8, 8>}, {pipeline_mode = #tpu.pipeline_mode<synchronous>, transform_indices = @transform_3, window_bounds = array<i64: 1, 8>}, {pipeline_mode = #tpu.pipeline_mode<synchronous>, transform_indices = @transform_4, window_bounds = array<i64: 32, 8>}, {pipeline_mode = #tpu.pipeline_mode<synchronous>, transform_indices = @transform_5, window_bounds = array<i64: 1, 8>}, {pipeline_mode = #tpu.pipeline_mode<synchronous>, transform_indices = @transform_6, window_bounds = array<i64: 3, 8, 8>}, {pipeline_mode = #tpu.pipeline_mode<synchronous>, transform_indices = @transform_7, window_bounds = array<i64: 1, 8>}, {pipeline_mode = #tpu.pipeline_mode<synchronous>, transform_indices = @transform_8, window_bounds = array<i64: 8, 8>}, {pipeline_mode = #tpu.pipeline_mode<synchronous>, transform_indices = @transform_9, window_bounds = array<i64: 1, 8>}, {pipeline_mode = #tpu.pipeline_mode<synchronous>, transform_indices = @transform_10, window_bounds = array<i64: 8, 8>}, {pipeline_mode = #tpu.pipeline_mode<synchronous>, transform_indices = @transform_11, window_bounds = array<i64: 1, 8>}, {pipeline_mode = #tpu.pipeline_mode<synchronous>, transform_indices = @transform_12, window_bounds = array<i64: 8, 8>}, {pipeline_mode = #tpu.pipeline_mode<synchronous>, transform_indices = @transform_13, window_bounds = array<i64: 1, 8>}, {pipeline_mode = #tpu.pipeline_mode<synchronous>, transform_indices = @transform_14, window_bounds = array<i64: 8, 8>}, {pipeline_mode = #tpu.pipeline_mode<synchronous>, transform_indices = @transform_15, window_bounds = array<i64: 1, 8>}, {pipeline_mode = #tpu.pipeline_mode<synchronous>, transform_indices = @transform_16, window_bounds = array<i64: 3, 8, 8>}, {pipeline_mode = #tpu.pipeline_mode<synchronous>, transform_indices = @transform_17, window_bounds = array<i64: 1, 8>}, {pipeline_mode = #tpu.pipeline_mode<synchronous>, transform_indices = @transform_18, window_bounds = array<i64: 32, 8>}, {pipeline_mode = #tpu.pipeline_mode<synchronous>, transform_indices = @transform_19, window_bounds = array<i64: 1, 8>}, {pipeline_mode = #tpu.pipeline_mode<synchronous>, transform_indices = @transform_20, window_bounds = array<i64: 3, 8, 8>}, {pipeline_mode = #tpu.pipeline_mode<synchronous>, transform_indices = @transform_21, window_bounds = array<i64: 1, 8>}, {transform_indices = @transform_22, window_bounds = array<i64: 1, 16, 8>}]} {
    %c0 = arith.constant 0 : index
    %c0_0 = arith.constant 0 : index
    %c0_1 = arith.constant 0 : index
    %0 = vector.load %arg1[%c0, %c0_0, %c0_1] : memref<1x16x8xf32, #tpu.memory_space<vmem>>, vector<1x16x8xf32>
    %1 = vector.shape_cast %0 : vector<1x16x8xf32> to vector<16x8xf32>
    %c0_2 = arith.constant 0 : index
    %c0_3 = arith.constant 0 : index
    %c0_4 = arith.constant 0 : index
    %2 = vector.load %arg2[%c0_2, %c0_3, %c0_4] : memref<1x1x32xf32, #tpu.memory_space<vmem>>, vector<1x1x32xf32>
    %3 = vector.shape_cast %2 : vector<1x1x32xf32> to vector<1x32xf32>
    %4 = arith.negf %3 : vector<1x32xf32>
    %5 = math.exp %4 : vector<1x32xf32>
    %cst = arith.constant 1.000000e+00 : f32
    %6 = vector.broadcast %cst : f32 to vector<1x32xf32>
    %7 = arith.addf %6, %5 : vector<1x32xf32>
    %8 = arith.divf %6, %7 : vector<1x32xf32>
    %9 = arith.mulf %3, %8 : vector<1x32xf32>
    %10 = tpu.iota {dimensions = array<i32: 0>} : vector<16x16xi32>
    %11 = tpu.iota {dimensions = array<i32: 1>} : vector<16x16xi32>
    %c1_i32 = arith.constant 1 : i32
    %12 = vector.broadcast %c1_i32 : i32 to vector<16x16xi32>
    %13 = arith.subi %10, %12 : vector<16x16xi32>
    %14 = arith.cmpi eq, %11, %13 : vector<16x16xi32>
    %15 = arith.extui %14 : vector<16x16xi1> to vector<16x16xi32>
    %16 = arith.sitofp %15 : vector<16x16xi32> to vector<16x16xf32>
    %c1_i32_5 = arith.constant 1 : i32
    %17 = vector.broadcast %c1_i32_5 : i32 to vector<16x16xi32>
    %18 = arith.addi %10, %17 : vector<16x16xi32>
    %19 = arith.cmpi eq, %11, %18 : vector<16x16xi32>
    %20 = arith.extui %19 : vector<16x16xi1> to vector<16x16xi32>
    %21 = arith.sitofp %20 : vector<16x16xi32> to vector<16x16xf32>
    %22 = arith.negf %1 : vector<16x8xf32>
    %23 = math.exp %22 : vector<16x8xf32>
    %cst_6 = arith.constant 1.000000e+00 : f32
    %24 = vector.broadcast %cst_6 : f32 to vector<16x8xf32>
    %25 = arith.addf %24, %23 : vector<16x8xf32>
    %26 = arith.divf %24, %25 : vector<16x8xf32>
    %27 = arith.mulf %1, %26 : vector<16x8xf32>
    %cst_7 = arith.constant dense<0.000000e+00> : vector<16x8xf32>
    %28 = tpu.matmul %16, %27, %cst_7 {dimension_numbers = #tpu.dot_dimension_numbers<[1], [0], [0], [1], [0, 0, 1, 1], [], []>} : vector<16x16xf32>, vector<16x8xf32>, vector<16x8xf32> -> vector<16x8xf32>
    %cst_8 = arith.constant dense<0.000000e+00> : vector<16x8xf32>
    %29 = tpu.matmul %21, %27, %cst_8 {dimension_numbers = #tpu.dot_dimension_numbers<[1], [0], [0], [1], [0, 0, 1, 1], [], []>} : vector<16x16xf32>, vector<16x8xf32>, vector<16x8xf32> -> vector<16x8xf32>
    %c0_9 = arith.constant 0 : index
    %c0_10 = arith.constant 0 : index
    %c0_11 = arith.constant 0 : index
    %30 = vector.load %arg3[%c0_9, %c0_10, %c0_11] : memref<3x8x8xf32, #tpu.memory_space<vmem>>, vector<1x8x8xf32>
    %31 = vector.shape_cast %30 : vector<1x8x8xf32> to vector<8x8xf32>
    %cst_12 = arith.constant dense<0.000000e+00> : vector<16x8xf32>
    %32 = tpu.matmul %28, %31, %cst_12 {dimension_numbers = #tpu.dot_dimension_numbers<[1], [0], [0], [1], [0, 0, 1, 1], [], []>} : vector<16x8xf32>, vector<8x8xf32>, vector<16x8xf32> -> vector<16x8xf32>
    %c1 = arith.constant 1 : index
    %c0_13 = arith.constant 0 : index
    %c0_14 = arith.constant 0 : index
    %33 = vector.load %arg3[%c1, %c0_13, %c0_14] : memref<3x8x8xf32, #tpu.memory_space<vmem>>, vector<1x8x8xf32>
    %34 = vector.shape_cast %33 : vector<1x8x8xf32> to vector<8x8xf32>
    %cst_15 = arith.constant dense<0.000000e+00> : vector<16x8xf32>
    %35 = tpu.matmul %27, %34, %cst_15 {dimension_numbers = #tpu.dot_dimension_numbers<[1], [0], [0], [1], [0, 0, 1, 1], [], []>} : vector<16x8xf32>, vector<8x8xf32>, vector<16x8xf32> -> vector<16x8xf32>
    %36 = arith.addf %32, %35 : vector<16x8xf32>
    %c2 = arith.constant 2 : index
    %c0_16 = arith.constant 0 : index
    %c0_17 = arith.constant 0 : index
    %37 = vector.load %arg3[%c2, %c0_16, %c0_17] : memref<3x8x8xf32, #tpu.memory_space<vmem>>, vector<1x8x8xf32>
    %38 = vector.shape_cast %37 : vector<1x8x8xf32> to vector<8x8xf32>
    %cst_18 = arith.constant dense<0.000000e+00> : vector<16x8xf32>
    %39 = tpu.matmul %29, %38, %cst_18 {dimension_numbers = #tpu.dot_dimension_numbers<[1], [0], [0], [1], [0, 0, 1, 1], [], []>} : vector<16x8xf32>, vector<8x8xf32>, vector<16x8xf32> -> vector<16x8xf32>
    %40 = arith.addf %36, %39 : vector<16x8xf32>
    %c0_19 = arith.constant 0 : index
    %c0_20 = arith.constant 0 : index
    %41 = vector.load %arg4[%c0_19, %c0_20] : memref<1x8xf32, #tpu.memory_space<vmem>>, vector<1x8xf32>
    %42 = vector.broadcast %41 : vector<1x8xf32> to vector<16x8xf32>
    %43 = arith.addf %40, %42 : vector<16x8xf32>
    %c0_21 = arith.constant 0 : index
    %c0_22 = arith.constant 0 : index
    %44 = vector.load %arg5[%c0_21, %c0_22] : memref<32x8xf32, #tpu.memory_space<vmem>>, vector<32x8xf32>
    %cst_23 = arith.constant dense<0.000000e+00> : vector<1x8xf32>
    %45 = tpu.matmul %9, %44, %cst_23 {dimension_numbers = #tpu.dot_dimension_numbers<[1], [0], [0], [1], [0, 0, 1, 1], [], []>} : vector<1x32xf32>, vector<32x8xf32>, vector<1x8xf32> -> vector<1x8xf32>
    %c0_24 = arith.constant 0 : index
    %c0_25 = arith.constant 0 : index
    %46 = vector.load %arg6[%c0_24, %c0_25] : memref<1x8xf32, #tpu.memory_space<vmem>>, vector<1x8xf32>
    %47 = arith.addf %45, %46 : vector<1x8xf32>
    %48 = vector.broadcast %47 : vector<1x8xf32> to vector<16x8xf32>
    %49 = arith.addf %43, %48 : vector<16x8xf32>
    %50 = arith.negf %49 : vector<16x8xf32>
    %51 = math.exp %50 : vector<16x8xf32>
    %cst_26 = arith.constant 1.000000e+00 : f32
    %52 = vector.broadcast %cst_26 : f32 to vector<16x8xf32>
    %53 = arith.addf %52, %51 : vector<16x8xf32>
    %54 = arith.divf %52, %53 : vector<16x8xf32>
    %55 = arith.mulf %49, %54 : vector<16x8xf32>
    %cst_27 = arith.constant dense<0.000000e+00> : vector<16x8xf32>
    %56 = tpu.matmul %16, %55, %cst_27 {dimension_numbers = #tpu.dot_dimension_numbers<[1], [0], [0], [1], [0, 0, 1, 1], [], []>} : vector<16x16xf32>, vector<16x8xf32>, vector<16x8xf32> -> vector<16x8xf32>
    %cst_28 = arith.constant dense<0.000000e+00> : vector<16x8xf32>
    %57 = tpu.matmul %21, %55, %cst_28 {dimension_numbers = #tpu.dot_dimension_numbers<[1], [0], [0], [1], [0, 0, 1, 1], [], []>} : vector<16x16xf32>, vector<16x8xf32>, vector<16x8xf32> -> vector<16x8xf32>
    %c0_29 = arith.constant 0 : index
    %c0_30 = arith.constant 0 : index
    %c0_31 = arith.constant 0 : index
    %58 = vector.load %arg7[%c0_29, %c0_30, %c0_31] : memref<3x8x8xf32, #tpu.memory_space<vmem>>, vector<1x8x8xf32>
    %59 = vector.shape_cast %58 : vector<1x8x8xf32> to vector<8x8xf32>
    %cst_32 = arith.constant dense<0.000000e+00> : vector<16x8xf32>
    %60 = tpu.matmul %56, %59, %cst_32 {dimension_numbers = #tpu.dot_dimension_numbers<[1], [0], [0], [1], [0, 0, 1, 1], [], []>} : vector<16x8xf32>, vector<8x8xf32>, vector<16x8xf32> -> vector<16x8xf32>
    %c1_33 = arith.constant 1 : index
    %c0_34 = arith.constant 0 : index
    %c0_35 = arith.constant 0 : index
    %61 = vector.load %arg7[%c1_33, %c0_34, %c0_35] : memref<3x8x8xf32, #tpu.memory_space<vmem>>, vector<1x8x8xf32>
    %62 = vector.shape_cast %61 : vector<1x8x8xf32> to vector<8x8xf32>
    %cst_36 = arith.constant dense<0.000000e+00> : vector<16x8xf32>
    %63 = tpu.matmul %55, %62, %cst_36 {dimension_numbers = #tpu.dot_dimension_numbers<[1], [0], [0], [1], [0, 0, 1, 1], [], []>} : vector<16x8xf32>, vector<8x8xf32>, vector<16x8xf32> -> vector<16x8xf32>
    %64 = arith.addf %60, %63 : vector<16x8xf32>
    %c2_37 = arith.constant 2 : index
    %c0_38 = arith.constant 0 : index
    %c0_39 = arith.constant 0 : index
    %65 = vector.load %arg7[%c2_37, %c0_38, %c0_39] : memref<3x8x8xf32, #tpu.memory_space<vmem>>, vector<1x8x8xf32>
    %66 = vector.shape_cast %65 : vector<1x8x8xf32> to vector<8x8xf32>
    %cst_40 = arith.constant dense<0.000000e+00> : vector<16x8xf32>
    %67 = tpu.matmul %57, %66, %cst_40 {dimension_numbers = #tpu.dot_dimension_numbers<[1], [0], [0], [1], [0, 0, 1, 1], [], []>} : vector<16x8xf32>, vector<8x8xf32>, vector<16x8xf32> -> vector<16x8xf32>
    %68 = arith.addf %64, %67 : vector<16x8xf32>
    %c0_41 = arith.constant 0 : index
    %c0_42 = arith.constant 0 : index
    %69 = vector.load %arg8[%c0_41, %c0_42] : memref<1x8xf32, #tpu.memory_space<vmem>>, vector<1x8xf32>
    %70 = vector.broadcast %69 : vector<1x8xf32> to vector<16x8xf32>
    %71 = arith.addf %68, %70 : vector<16x8xf32>
    %72 = arith.addf %71, %1 : vector<16x8xf32>
    %c0_43 = arith.constant 0 : index
    %c0_44 = arith.constant 0 : index
    %73 = vector.load %arg9[%c0_43, %c0_44] : memref<8x8xf32, #tpu.memory_space<vmem>>, vector<8x8xf32>
    %cst_45 = arith.constant dense<0.000000e+00> : vector<16x8xf32>
    %74 = tpu.matmul %72, %73, %cst_45 {dimension_numbers = #tpu.dot_dimension_numbers<[1], [0], [0], [1], [0, 0, 1, 1], [], []>} : vector<16x8xf32>, vector<8x8xf32>, vector<16x8xf32> -> vector<16x8xf32>
    %c0_46 = arith.constant 0 : index
    %c0_47 = arith.constant 0 : index
    %75 = vector.load %arg10[%c0_46, %c0_47] : memref<1x8xf32, #tpu.memory_space<vmem>>, vector<1x8xf32>
    %76 = vector.broadcast %75 : vector<1x8xf32> to vector<16x8xf32>
    %77 = arith.addf %74, %76 : vector<16x8xf32>
    %c0_48 = arith.constant 0 : index
    %c0_49 = arith.constant 0 : index
    %78 = vector.load %arg11[%c0_48, %c0_49] : memref<8x8xf32, #tpu.memory_space<vmem>>, vector<8x8xf32>
    %cst_50 = arith.constant dense<0.000000e+00> : vector<16x8xf32>
    %79 = tpu.matmul %72, %78, %cst_50 {dimension_numbers = #tpu.dot_dimension_numbers<[1], [0], [0], [1], [0, 0, 1, 1], [], []>} : vector<16x8xf32>, vector<8x8xf32>, vector<16x8xf32> -> vector<16x8xf32>
    %c0_51 = arith.constant 0 : index
    %c0_52 = arith.constant 0 : index
    %80 = vector.load %arg12[%c0_51, %c0_52] : memref<1x8xf32, #tpu.memory_space<vmem>>, vector<1x8xf32>
    %81 = vector.broadcast %80 : vector<1x8xf32> to vector<16x8xf32>
    %82 = arith.addf %79, %81 : vector<16x8xf32>
    %c0_53 = arith.constant 0 : index
    %c0_54 = arith.constant 0 : index
    %83 = vector.load %arg13[%c0_53, %c0_54] : memref<8x8xf32, #tpu.memory_space<vmem>>, vector<8x8xf32>
    %cst_55 = arith.constant dense<0.000000e+00> : vector<16x8xf32>
    %84 = tpu.matmul %72, %83, %cst_55 {dimension_numbers = #tpu.dot_dimension_numbers<[1], [0], [0], [1], [0, 0, 1, 1], [], []>} : vector<16x8xf32>, vector<8x8xf32>, vector<16x8xf32> -> vector<16x8xf32>
    %c0_56 = arith.constant 0 : index
    %c0_57 = arith.constant 0 : index
    %85 = vector.load %arg14[%c0_56, %c0_57] : memref<1x8xf32, #tpu.memory_space<vmem>>, vector<1x8xf32>
    %86 = vector.broadcast %85 : vector<1x8xf32> to vector<16x8xf32>
    %87 = arith.addf %84, %86 : vector<16x8xf32>
    %cst_58 = arith.constant dense<0.000000e+00> : vector<16x16xf32>
    %88 = tpu.matmul %77, %82, %cst_58 {dimension_numbers = #tpu.dot_dimension_numbers<[1], [1], [0], [0], [0, 0, 1, 0], [], []>} : vector<16x8xf32>, vector<16x8xf32>, vector<16x16xf32> -> vector<16x16xf32>
    %cst_59 = arith.constant 0.353553385 : f32
    %89 = vector.broadcast %cst_59 : f32 to vector<16x16xf32>
    %90 = arith.mulf %88, %89 : vector<16x16xf32>
    %cst_60 = arith.constant dense<0xFF800000> : vector<16xf32>
    %91 = vector.multi_reduction <maximumf>, %90, %cst_60 [1] : vector<16x16xf32> to vector<16xf32>
    %92 = vector.shape_cast %91 : vector<16xf32> to vector<16x1xf32>
    %93 = vector.broadcast %92 : vector<16x1xf32> to vector<16x16xf32>
    %94 = arith.subf %90, %93 : vector<16x16xf32>
    %95 = math.exp %94 : vector<16x16xf32>
    %cst_61 = arith.constant dense<0.000000e+00> : vector<16xf32>
    %96 = vector.multi_reduction <add>, %95, %cst_61 [1] : vector<16x16xf32> to vector<16xf32>
    %97 = vector.shape_cast %96 : vector<16xf32> to vector<16x1xf32>
    %98 = vector.broadcast %97 : vector<16x1xf32> to vector<16x16xf32>
    %99 = arith.divf %95, %98 : vector<16x16xf32>
    %cst_62 = arith.constant dense<0.000000e+00> : vector<16x8xf32>
    %100 = tpu.matmul %99, %87, %cst_62 {dimension_numbers = #tpu.dot_dimension_numbers<[1], [0], [0], [1], [0, 0, 1, 1], [], []>} : vector<16x16xf32>, vector<16x8xf32>, vector<16x8xf32> -> vector<16x8xf32>
    %c0_63 = arith.constant 0 : index
    %c0_64 = arith.constant 0 : index
    %101 = vector.load %arg15[%c0_63, %c0_64] : memref<8x8xf32, #tpu.memory_space<vmem>>, vector<8x8xf32>
    %cst_65 = arith.constant dense<0.000000e+00> : vector<16x8xf32>
    %102 = tpu.matmul %100, %101, %cst_65 {dimension_numbers = #tpu.dot_dimension_numbers<[1], [0], [0], [1], [0, 0, 1, 1], [], []>} : vector<16x8xf32>, vector<8x8xf32>, vector<16x8xf32> -> vector<16x8xf32>
    %c0_66 = arith.constant 0 : index
    %c0_67 = arith.constant 0 : index
    %103 = vector.load %arg16[%c0_66, %c0_67] : memref<1x8xf32, #tpu.memory_space<vmem>>, vector<1x8xf32>
    %104 = vector.broadcast %103 : vector<1x8xf32> to vector<16x8xf32>
    %105 = arith.addf %102, %104 : vector<16x8xf32>
    %106 = arith.addf %105, %72 : vector<16x8xf32>
    %107 = arith.negf %106 : vector<16x8xf32>
    %108 = math.exp %107 : vector<16x8xf32>
    %cst_68 = arith.constant 1.000000e+00 : f32
    %109 = vector.broadcast %cst_68 : f32 to vector<16x8xf32>
    %110 = arith.addf %109, %108 : vector<16x8xf32>
    %111 = arith.divf %109, %110 : vector<16x8xf32>
    %112 = arith.mulf %106, %111 : vector<16x8xf32>
    %cst_69 = arith.constant dense<0.000000e+00> : vector<16x8xf32>
    %113 = tpu.matmul %16, %112, %cst_69 {dimension_numbers = #tpu.dot_dimension_numbers<[1], [0], [0], [1], [0, 0, 1, 1], [], []>} : vector<16x16xf32>, vector<16x8xf32>, vector<16x8xf32> -> vector<16x8xf32>
    %cst_70 = arith.constant dense<0.000000e+00> : vector<16x8xf32>
    %114 = tpu.matmul %21, %112, %cst_70 {dimension_numbers = #tpu.dot_dimension_numbers<[1], [0], [0], [1], [0, 0, 1, 1], [], []>} : vector<16x16xf32>, vector<16x8xf32>, vector<16x8xf32> -> vector<16x8xf32>
    %c0_71 = arith.constant 0 : index
    %c0_72 = arith.constant 0 : index
    %c0_73 = arith.constant 0 : index
    %115 = vector.load %arg17[%c0_71, %c0_72, %c0_73] : memref<3x8x8xf32, #tpu.memory_space<vmem>>, vector<1x8x8xf32>
    %116 = vector.shape_cast %115 : vector<1x8x8xf32> to vector<8x8xf32>
    %cst_74 = arith.constant dense<0.000000e+00> : vector<16x8xf32>
    %117 = tpu.matmul %113, %116, %cst_74 {dimension_numbers = #tpu.dot_dimension_numbers<[1], [0], [0], [1], [0, 0, 1, 1], [], []>} : vector<16x8xf32>, vector<8x8xf32>, vector<16x8xf32> -> vector<16x8xf32>
    %c1_75 = arith.constant 1 : index
    %c0_76 = arith.constant 0 : index
    %c0_77 = arith.constant 0 : index
    %118 = vector.load %arg17[%c1_75, %c0_76, %c0_77] : memref<3x8x8xf32, #tpu.memory_space<vmem>>, vector<1x8x8xf32>
    %119 = vector.shape_cast %118 : vector<1x8x8xf32> to vector<8x8xf32>
    %cst_78 = arith.constant dense<0.000000e+00> : vector<16x8xf32>
    %120 = tpu.matmul %112, %119, %cst_78 {dimension_numbers = #tpu.dot_dimension_numbers<[1], [0], [0], [1], [0, 0, 1, 1], [], []>} : vector<16x8xf32>, vector<8x8xf32>, vector<16x8xf32> -> vector<16x8xf32>
    %121 = arith.addf %117, %120 : vector<16x8xf32>
    %c2_79 = arith.constant 2 : index
    %c0_80 = arith.constant 0 : index
    %c0_81 = arith.constant 0 : index
    %122 = vector.load %arg17[%c2_79, %c0_80, %c0_81] : memref<3x8x8xf32, #tpu.memory_space<vmem>>, vector<1x8x8xf32>
    %123 = vector.shape_cast %122 : vector<1x8x8xf32> to vector<8x8xf32>
    %cst_82 = arith.constant dense<0.000000e+00> : vector<16x8xf32>
    %124 = tpu.matmul %114, %123, %cst_82 {dimension_numbers = #tpu.dot_dimension_numbers<[1], [0], [0], [1], [0, 0, 1, 1], [], []>} : vector<16x8xf32>, vector<8x8xf32>, vector<16x8xf32> -> vector<16x8xf32>
    %125 = arith.addf %121, %124 : vector<16x8xf32>
    %c0_83 = arith.constant 0 : index
    %c0_84 = arith.constant 0 : index
    %126 = vector.load %arg18[%c0_83, %c0_84] : memref<1x8xf32, #tpu.memory_space<vmem>>, vector<1x8xf32>
    %127 = vector.broadcast %126 : vector<1x8xf32> to vector<16x8xf32>
    %128 = arith.addf %125, %127 : vector<16x8xf32>
    %c0_85 = arith.constant 0 : index
    %c0_86 = arith.constant 0 : index
    %129 = vector.load %arg19[%c0_85, %c0_86] : memref<32x8xf32, #tpu.memory_space<vmem>>, vector<32x8xf32>
    %cst_87 = arith.constant dense<0.000000e+00> : vector<1x8xf32>
    %130 = tpu.matmul %9, %129, %cst_87 {dimension_numbers = #tpu.dot_dimension_numbers<[1], [0], [0], [1], [0, 0, 1, 1], [], []>} : vector<1x32xf32>, vector<32x8xf32>, vector<1x8xf32> -> vector<1x8xf32>
    %c0_88 = arith.constant 0 : index
    %c0_89 = arith.constant 0 : index
    %131 = vector.load %arg20[%c0_88, %c0_89] : memref<1x8xf32, #tpu.memory_space<vmem>>, vector<1x8xf32>
    %132 = arith.addf %130, %131 : vector<1x8xf32>
    %133 = vector.broadcast %132 : vector<1x8xf32> to vector<16x8xf32>
    %134 = arith.addf %128, %133 : vector<16x8xf32>
    %135 = arith.negf %134 : vector<16x8xf32>
    %136 = math.exp %135 : vector<16x8xf32>
    %cst_90 = arith.constant 1.000000e+00 : f32
    %137 = vector.broadcast %cst_90 : f32 to vector<16x8xf32>
    %138 = arith.addf %137, %136 : vector<16x8xf32>
    %139 = arith.divf %137, %138 : vector<16x8xf32>
    %140 = arith.mulf %134, %139 : vector<16x8xf32>
    %cst_91 = arith.constant dense<0.000000e+00> : vector<16x8xf32>
    %141 = tpu.matmul %16, %140, %cst_91 {dimension_numbers = #tpu.dot_dimension_numbers<[1], [0], [0], [1], [0, 0, 1, 1], [], []>} : vector<16x16xf32>, vector<16x8xf32>, vector<16x8xf32> -> vector<16x8xf32>
    %cst_92 = arith.constant dense<0.000000e+00> : vector<16x8xf32>
    %142 = tpu.matmul %21, %140, %cst_92 {dimension_numbers = #tpu.dot_dimension_numbers<[1], [0], [0], [1], [0, 0, 1, 1], [], []>} : vector<16x16xf32>, vector<16x8xf32>, vector<16x8xf32> -> vector<16x8xf32>
    %c0_93 = arith.constant 0 : index
    %c0_94 = arith.constant 0 : index
    %c0_95 = arith.constant 0 : index
    %143 = vector.load %arg21[%c0_93, %c0_94, %c0_95] : memref<3x8x8xf32, #tpu.memory_space<vmem>>, vector<1x8x8xf32>
    %144 = vector.shape_cast %143 : vector<1x8x8xf32> to vector<8x8xf32>
    %cst_96 = arith.constant dense<0.000000e+00> : vector<16x8xf32>
    %145 = tpu.matmul %141, %144, %cst_96 {dimension_numbers = #tpu.dot_dimension_numbers<[1], [0], [0], [1], [0, 0, 1, 1], [], []>} : vector<16x8xf32>, vector<8x8xf32>, vector<16x8xf32> -> vector<16x8xf32>
    %c1_97 = arith.constant 1 : index
    %c0_98 = arith.constant 0 : index
    %c0_99 = arith.constant 0 : index
    %146 = vector.load %arg21[%c1_97, %c0_98, %c0_99] : memref<3x8x8xf32, #tpu.memory_space<vmem>>, vector<1x8x8xf32>
    %147 = vector.shape_cast %146 : vector<1x8x8xf32> to vector<8x8xf32>
    %cst_100 = arith.constant dense<0.000000e+00> : vector<16x8xf32>
    %148 = tpu.matmul %140, %147, %cst_100 {dimension_numbers = #tpu.dot_dimension_numbers<[1], [0], [0], [1], [0, 0, 1, 1], [], []>} : vector<16x8xf32>, vector<8x8xf32>, vector<16x8xf32> -> vector<16x8xf32>
    %149 = arith.addf %145, %148 : vector<16x8xf32>
    %c2_101 = arith.constant 2 : index
    %c0_102 = arith.constant 0 : index
    %c0_103 = arith.constant 0 : index
    %150 = vector.load %arg21[%c2_101, %c0_102, %c0_103] : memref<3x8x8xf32, #tpu.memory_space<vmem>>, vector<1x8x8xf32>
    %151 = vector.shape_cast %150 : vector<1x8x8xf32> to vector<8x8xf32>
    %cst_104 = arith.constant dense<0.000000e+00> : vector<16x8xf32>
    %152 = tpu.matmul %142, %151, %cst_104 {dimension_numbers = #tpu.dot_dimension_numbers<[1], [0], [0], [1], [0, 0, 1, 1], [], []>} : vector<16x8xf32>, vector<8x8xf32>, vector<16x8xf32> -> vector<16x8xf32>
    %153 = arith.addf %149, %152 : vector<16x8xf32>
    %c0_105 = arith.constant 0 : index
    %c0_106 = arith.constant 0 : index
    %154 = vector.load %arg22[%c0_105, %c0_106] : memref<1x8xf32, #tpu.memory_space<vmem>>, vector<1x8xf32>
    %155 = vector.broadcast %154 : vector<1x8xf32> to vector<16x8xf32>
    %156 = arith.addf %153, %155 : vector<16x8xf32>
    %157 = arith.addf %156, %106 : vector<16x8xf32>
    %c0_107 = arith.constant 0 : index
    %c0_108 = arith.constant 0 : index
    %c0_109 = arith.constant 0 : index
    %158 = vector.load %arg23[%c0_107, %c0_108, %c0_109] : memref<1x16x8xf32, #tpu.memory_space<vmem>>, vector<1x16x8xf32>
    %159 = vector.shape_cast %158 : vector<1x16x8xf32> to vector<16x8xf32>
    %160 = vector.shape_cast %157 : vector<16x8xf32> to vector<1x16x8xf32>
    tpu.vector_store %arg23[%c0_107, %c0_108, %c0_109], %160 {strides = array<i32>} : memref<1x16x8xf32, #tpu.memory_space<vmem>>, vector<1x16x8xf32>,
    return
  }
  func.func @transform_0(%arg0: i32) -> (i32, i32, i32) {
    %c0_i32 = arith.constant 0 : i32
    %c0_i32_0 = arith.constant 0 : i32
    %c0_i32_1 = arith.constant 0 : i32
    return %arg0, %c0_i32, %c0_i32_0 : i32, i32, i32
  }
  func.func @transform_1(%arg0: i32) -> (i32, i32, i32) {
    %c0_i32 = arith.constant 0 : i32
    %c0_i32_0 = arith.constant 0 : i32
    %c0_i32_1 = arith.constant 0 : i32
    return %arg0, %c0_i32, %c0_i32_0 : i32, i32, i32
  }
  func.func @transform_2(%arg0: i32) -> (i32, i32, i32) {
    %c0_i32 = arith.constant 0 : i32
    %c0_i32_0 = arith.constant 0 : i32
    %c0_i32_1 = arith.constant 0 : i32
    %c0_i32_2 = arith.constant 0 : i32
    return %c0_i32, %c0_i32_0, %c0_i32_1 : i32, i32, i32
  }
  func.func @transform_3(%arg0: i32) -> (i32, i32) {
    %c0_i32 = arith.constant 0 : i32
    %c0_i32_0 = arith.constant 0 : i32
    %c0_i32_1 = arith.constant 0 : i32
    return %c0_i32, %c0_i32_0 : i32, i32
  }
  func.func @transform_4(%arg0: i32) -> (i32, i32) {
    %c0_i32 = arith.constant 0 : i32
    %c0_i32_0 = arith.constant 0 : i32
    %c0_i32_1 = arith.constant 0 : i32
    return %c0_i32, %c0_i32_0 : i32, i32
  }
  func.func @transform_5(%arg0: i32) -> (i32, i32) {
    %c0_i32 = arith.constant 0 : i32
    %c0_i32_0 = arith.constant 0 : i32
    %c0_i32_1 = arith.constant 0 : i32
    return %c0_i32, %c0_i32_0 : i32, i32
  }
  func.func @transform_6(%arg0: i32) -> (i32, i32, i32) {
    %c0_i32 = arith.constant 0 : i32
    %c0_i32_0 = arith.constant 0 : i32
    %c0_i32_1 = arith.constant 0 : i32
    %c0_i32_2 = arith.constant 0 : i32
    return %c0_i32, %c0_i32_0, %c0_i32_1 : i32, i32, i32
  }
  func.func @transform_7(%arg0: i32) -> (i32, i32) {
    %c0_i32 = arith.constant 0 : i32
    %c0_i32_0 = arith.constant 0 : i32
    %c0_i32_1 = arith.constant 0 : i32
    return %c0_i32, %c0_i32_0 : i32, i32
  }
  func.func @transform_8(%arg0: i32) -> (i32, i32) {
    %c0_i32 = arith.constant 0 : i32
    %c0_i32_0 = arith.constant 0 : i32
    %c0_i32_1 = arith.constant 0 : i32
    return %c0_i32, %c0_i32_0 : i32, i32
  }
  func.func @transform_9(%arg0: i32) -> (i32, i32) {
    %c0_i32 = arith.constant 0 : i32
    %c0_i32_0 = arith.constant 0 : i32
    %c0_i32_1 = arith.constant 0 : i32
    return %c0_i32, %c0_i32_0 : i32, i32
  }
  func.func @transform_10(%arg0: i32) -> (i32, i32) {
    %c0_i32 = arith.constant 0 : i32
    %c0_i32_0 = arith.constant 0 : i32
    %c0_i32_1 = arith.constant 0 : i32
    return %c0_i32, %c0_i32_0 : i32, i32
  }
  func.func @transform_11(%arg0: i32) -> (i32, i32) {
    %c0_i32 = arith.constant 0 : i32
    %c0_i32_0 = arith.constant 0 : i32
    %c0_i32_1 = arith.constant 0 : i32
    return %c0_i32, %c0_i32_0 : i32, i32
  }
  func.func @transform_12(%arg0: i32) -> (i32, i32) {
    %c0_i32 = arith.constant 0 : i32
    %c0_i32_0 = arith.constant 0 : i32
    %c0_i32_1 = arith.constant 0 : i32
    return %c0_i32, %c0_i32_0 : i32, i32
  }
  func.func @transform_13(%arg0: i32) -> (i32, i32) {
    %c0_i32 = arith.constant 0 : i32
    %c0_i32_0 = arith.constant 0 : i32
    %c0_i32_1 = arith.constant 0 : i32
    return %c0_i32, %c0_i32_0 : i32, i32
  }
  func.func @transform_14(%arg0: i32) -> (i32, i32) {
    %c0_i32 = arith.constant 0 : i32
    %c0_i32_0 = arith.constant 0 : i32
    %c0_i32_1 = arith.constant 0 : i32
    return %c0_i32, %c0_i32_0 : i32, i32
  }
  func.func @transform_15(%arg0: i32) -> (i32, i32) {
    %c0_i32 = arith.constant 0 : i32
    %c0_i32_0 = arith.constant 0 : i32
    %c0_i32_1 = arith.constant 0 : i32
    return %c0_i32, %c0_i32_0 : i32, i32
  }
  func.func @transform_16(%arg0: i32) -> (i32, i32, i32) {
    %c0_i32 = arith.constant 0 : i32
    %c0_i32_0 = arith.constant 0 : i32
    %c0_i32_1 = arith.constant 0 : i32
    %c0_i32_2 = arith.constant 0 : i32
    return %c0_i32, %c0_i32_0, %c0_i32_1 : i32, i32, i32
  }
  func.func @transform_17(%arg0: i32) -> (i32, i32) {
    %c0_i32 = arith.constant 0 : i32
    %c0_i32_0 = arith.constant 0 : i32
    %c0_i32_1 = arith.constant 0 : i32
    return %c0_i32, %c0_i32_0 : i32, i32
  }
  func.func @transform_18(%arg0: i32) -> (i32, i32) {
    %c0_i32 = arith.constant 0 : i32
    %c0_i32_0 = arith.constant 0 : i32
    %c0_i32_1 = arith.constant 0 : i32
    return %c0_i32, %c0_i32_0 : i32, i32
  }
  func.func @transform_19(%arg0: i32) -> (i32, i32) {
    %c0_i32 = arith.constant 0 : i32
    %c0_i32_0 = arith.constant 0 : i32
    %c0_i32_1 = arith.constant 0 : i32
    return %c0_i32, %c0_i32_0 : i32, i32
  }
  func.func @transform_20(%arg0: i32) -> (i32, i32, i32) {
    %c0_i32 = arith.constant 0 : i32
    %c0_i32_0 = arith.constant 0 : i32
    %c0_i32_1 = arith.constant 0 : i32
    %c0_i32_2 = arith.constant 0 : i32
    return %c0_i32, %c0_i32_0, %c0_i32_1 : i32, i32, i32
  }
  func.func @transform_21(%arg0: i32) -> (i32, i32) {
    %c0_i32 = arith.constant 0 : i32
    %c0_i32_0 = arith.constant 0 : i32
    %c0_i32_1 = arith.constant 0 : i32
    return %c0_i32, %c0_i32_0 : i32, i32
  }
  func.func @transform_22(%arg0: i32) -> (i32, i32, i32) {
    %c0_i32 = arith.constant 0 : i32
    %c0_i32_0 = arith.constant 0 : i32
    %c0_i32_1 = arith.constant 0 : i32
    return %arg0, %c0_i32, %c0_i32_0 : i32, i32, i32
  }
}

</mosaic_0001>

<llo_original>
// kernel: tpu_custom_call.1
$region0: #{tpu_custom_call.1}
  #allocation0 [shape = 'u32[]', space=smem, size = 0x4, offset = 0x4, fixed_abs, tag = 'smem constant byte address 0x4 - core index']
  #allocation1 [shape = 'u32[144,128]{1,0:T(1,128)}', space=vmem, size = 0x12000, scoped, tag = 'internal scratch']
  %s0 = inlined_call_operand.vmem [shape: f32[2,16,8], index: 0, kind: input, shape index: {}]
  %s1 = inlined_call_operand.vmem [shape: f32[2,1,32], index: 1, kind: input, shape index: {}]
  %s2 = inlined_call_operand.vmem [shape: f32[3,8,8], index: 2, kind: input, shape index: {}]
  %s3 = inlined_call_operand.hbm [shape: f32[1,8], index: 3, kind: input, shape index: {}]
  %s4 = inlined_call_operand.vmem [shape: f32[32,8], index: 4, kind: input, shape index: {}]
  %s5 = inlined_call_operand.hbm [shape: f32[1,8], index: 5, kind: input, shape index: {}]
  %s6 = inlined_call_operand.vmem [shape: f32[3,8,8], index: 6, kind: input, shape index: {}]
  %s7 = inlined_call_operand.vmem [shape: f32[1,8], index: 7, kind: input, shape index: {}]
  %s8 = inlined_call_operand.vmem [shape: f32[8,8], index: 8, kind: input, shape index: {}]
  %s9 = inlined_call_operand.vmem [shape: f32[1,8], index: 9, kind: input, shape index: {}]
  %s10 = inlined_call_operand.vmem [shape: f32[8,8], index: 10, kind: input, shape index: {}]
  %s11 = inlined_call_operand.vmem [shape: f32[1,8], index: 11, kind: input, shape index: {}]
  %s12 = inlined_call_operand.vmem [shape: f32[8,8], index: 12, kind: input, shape index: {}]
  %s13 = inlined_call_operand.vmem [shape: f32[1,8], index: 13, kind: input, shape index: {}]
  %s14 = inlined_call_operand.vmem [shape: f32[8,8], index: 14, kind: input, shape index: {}]
  %s15 = inlined_call_operand.vmem [shape: f32[1,8], index: 15, kind: input, shape index: {}]
  %s16 = inlined_call_operand.vmem [shape: f32[3,8,8], index: 16, kind: input, shape index: {}]
  %s17 = inlined_call_operand.vmem [shape: f32[1,8], index: 17, kind: input, shape index: {}]
  %s18 = inlined_call_operand.vmem [shape: f32[32,8], index: 18, kind: input, shape index: {}]
  %s19 = inlined_call_operand.vmem [shape: f32[1,8], index: 19, kind: input, shape index: {}]
  %s20 = inlined_call_operand.vmem [shape: f32[3,8,8], index: 20, kind: input, shape index: {}]
  %s21 = inlined_call_operand.vmem [shape: f32[1,8], index: 21, kind: input, shape index: {}]
  %s22 = inlined_call_operand.vmem [shape: f32[2,16,8], index: 22, kind: output, shape index: {}]
  %s23 = sld [smem:[#allocation0]]
  $region129: #{tpu_custom_call.1} parent=0
    _
  %s25 = ssub.s32 1, %s23
  %s26 = scalar_select 0, %s25, %s23
  $region1: #{tpu_custom_call.1} parent=0
    #allocation2 [shape = 'u8[512]{0}', space=vmem, size = 0x400, scoped, tag = 'input window, operand 3, single buffered']
    #allocation3 [shape = 's32[2]{0}', space=sflag, size = 0x8, scoped, tag = 'scoped memory for tpu_custom_call.1']
    #allocation4 [shape = 'u8[512]{0}', space=vmem, size = 0x400, scoped, tag = 'input window, operand 5, single buffered']
    #allocation5 [shape = 's32[1]{0}', space=sflag, size = 0x4, scoped, tag = 'scoped memory for tpu_custom_call.1']
    %27 = vsyncpa [#allocation3], 0
    %28 = vsyncpa [#allocation5], 0
    loop: start=0, step=1, limit=4
    $region2: #{tpu_custom_call.1} parent=1 // loop_pre_header
      _
    $region3: #{tpu_custom_call.1} parent=1 // loop_header
      %s30 = sphi 0, %s34
      %p31 = scmp.ge.s32.totalorder %s30, 4
      %s40 = sphi 0, %s42
      %s43 = sphi 0, %s40
      %s44 = sphi 0, %s43
      %s60 = sphi 0, %s44
      %s66 = sphi 0, %s68
      %s69 = sphi 0, %s66
      %s70 = sphi 0, %s69
      %s86 = sphi 0, %s70
      %s90 = sphi 0, %s90
      %s92 = sphi 0, %s90
      %s93 = sphi 0, %s92
      %s107 = sphi 0, %s93
      %s111 = sphi 0, %s111
      %s113 = sphi 0, %s111
      %s114 = sphi 0, %s113
      %s128 = sphi 0, %s114
      %s132 = sphi 0, %s132
      %s134 = sphi 0, %s132
      %s135 = sphi 0, %s134
      %s149 = sphi 0, %s135
      %s153 = sphi 0, %s153
      %s155 = sphi 0, %s153
      %s156 = sphi 0, %s155
      %s170 = sphi 0, %s156
      %s174 = sphi 0, %s174
      %s176 = sphi 0, %s174
      %s177 = sphi 0, %s176
      %s191 = sphi 0, %s177
      %s195 = sphi 0, %s195
      %s197 = sphi 0, %s195
      %s198 = sphi 0, %s197
      %s212 = sphi 0, %s198
      %s216 = sphi 0, %s216
      %s218 = sphi 0, %s216
      %s219 = sphi 0, %s218
      %s233 = sphi 0, %s219
      %s237 = sphi 0, %s237
      %s239 = sphi 0, %s237
      %s240 = sphi 0, %s239
      %s254 = sphi 0, %s240
      %s258 = sphi 0, %s258
      %s260 = sphi 0, %s258
      %s261 = sphi 0, %s260
      %s275 = sphi 0, %s261
      %s279 = sphi 0, %s279
      %s281 = sphi 0, %s279
      %s282 = sphi 0, %s281
      %s296 = sphi 0, %s282
      %s300 = sphi 0, %s300
      %s302 = sphi 0, %s300
      %s303 = sphi 0, %s302
      %s317 = sphi 0, %s303
      %s321 = sphi 0, %s321
      %s323 = sphi 0, %s321
      %s324 = sphi 0, %s323
      %s338 = sphi 0, %s324
      %s342 = sphi 0, %s342
      %s344 = sphi 0, %s342
      %s345 = sphi 0, %s344
      %s359 = sphi 0, %s345
      %s363 = sphi 0, %s363
      %s365 = sphi 0, %s363
      %s366 = sphi 0, %s365
      %s380 = sphi 0, %s366
      %s384 = sphi 0, %s384
      %s386 = sphi 0, %s384
      %s387 = sphi 0, %s386
      %s401 = sphi 0, %s387
      %s405 = sphi 0, %s405
      %s407 = sphi 0, %s405
      %s408 = sphi 0, %s407
      %s422 = sphi 0, %s408
      %s426 = sphi 0, %s426
      %s428 = sphi 0, %s426
      %s429 = sphi 0, %s428
      %s443 = sphi 0, %s429
      %s447 = sphi 0, %s447
      %s449 = sphi 0, %s447
      %s450 = sphi 0, %s449
      %s464 = sphi 0, %s450
      %s468 = sphi 0, %s468
      %s470 = sphi 0, %s468
      %s471 = sphi 0, %s470
      %s485 = sphi 0, %s471
      %s489 = sphi 0, %s489
      %s491 = sphi 0, %s489
      %s492 = sphi 0, %s491
      %s506 = sphi 0, %s492
      %s512 = sphi 0, %s514
      %s515 = sphi 0, %s512
      %s516 = sphi 0, %s515
      %s532 = sphi 0, %s516
    $region4: #{tpu_custom_call.1} parent=1 // loop_header_branch
      %33 = sbr.rel (%p31) target = $region8
    $region5: #{tpu_custom_call.1} parent=1 // loop_body
      %s35 = ssub.s32 %s30, 1
      %s36 = ssub.s32 %s30, 2
      %s37 = sadd.s32 %s30, 1
      %s38 = ssub.s32 %s30, %s37
      %p39 = scmp.eq.s32.totalorder %s38, 0
      %s41 = sadd.s32 %s40, 1
      %s42 = scalar_select %p39, %s40, %s41
      %p45 = pneg %p39
      %p46 = scmp.eq.s32.totalorder %s30, 1
      %p47 = por %p45, %p46
      %p48 = scmp.ne.s32.totalorder %s40, %s43
      %p49 = scmp.eq.s32.totalorder %s30, 0
      %p50 = por %p48, %p49
      %p51 = scmp.ne.s32.totalorder %s40, %s43
      %p52 = scmp.eq.s32.totalorder %s35, 1
      %p53 = por %p51, %p52
      %p54 = scmp.ne.s32.totalorder %s43, %s44
      %p55 = scmp.eq.s32.totalorder %s35, 0
      %p56 = por %p54, %p55
      %p57 = scmp.ne.s32.totalorder %s43, %s44
      %p58 = scmp.eq.s32.totalorder %s36, 1
      %p59 = por %p57, %p58
      %p61 = scmp.ne.s32.totalorder %s44, %s60
      %p62 = scmp.eq.s32.totalorder %s36, 0
      %p63 = por %p61, %p62
      %s64 = ssub.s32 %s30, %s37
      %p65 = scmp.eq.s32.totalorder %s64, 0
      %s67 = sadd.s32 %s66, 1
      %s68 = scalar_select %p65, %s66, %s67
      %p71 = pneg %p65
      %p72 = scmp.eq.s32.totalorder %s30, 1
      %p73 = por %p71, %p72
      %p74 = scmp.ne.s32.totalorder %s66, %s69
      %p75 = scmp.eq.s32.totalorder %s30, 0
      %p76 = por %p74, %p75
      %p77 = scmp.ne.s32.totalorder %s66, %s69
      %p78 = scmp.eq.s32.totalorder %s35, 1
      %p79 = por %p77, %p78
      %p80 = scmp.ne.s32.totalorder %s69, %s70
      %p81 = scmp.eq.s32.totalorder %s35, 0
      %p82 = por %p80, %p81
      %p83 = scmp.ne.s32.totalorder %s69, %s70
      %p84 = scmp.eq.s32.totalorder %s36, 1
      %p85 = por %p83, %p84
      %p87 = scmp.ne.s32.totalorder %s70, %s86
      %p88 = scmp.eq.s32.totalorder %s36, 0
      %p89 = por %p87, %p88
      %s91 = sadd.s32 %s90, 1
      %p94 = scmp.eq.s32.totalorder %s30, 1
      %p95 = scmp.ne.s32.totalorder %s90, %s92
      %p96 = scmp.eq.s32.totalorder %s30, 0
      %p97 = por %p95, %p96
      %p98 = scmp.ne.s32.totalorder %s90, %s92
      %p99 = scmp.eq.s32.totalorder %s35, 1
      %p100 = por %p98, %p99
      %p101 = scmp.ne.s32.totalorder %s92, %s93
      %p102 = scmp.eq.s32.totalorder %s35, 0
      %p103 = por %p101, %p102
      %p104 = scmp.ne.s32.totalorder %s92, %s93
      %p105 = scmp.eq.s32.totalorder %s36, 1
      %p106 = por %p104, %p105
      %p108 = scmp.ne.s32.totalorder %s93, %s107
      %p109 = scmp.eq.s32.totalorder %s36, 0
      %p110 = por %p108, %p109
      %s112 = sadd.s32 %s111, 1
      %p115 = scmp.eq.s32.totalorder %s30, 1
      %p116 = scmp.ne.s32.totalorder %s111, %s113
      %p117 = scmp.eq.s32.totalorder %s30, 0
      %p118 = por %p116, %p117
      %p119 = scmp.ne.s32.totalorder %s111, %s113
      %p120 = scmp.eq.s32.totalorder %s35, 1
      %p121 = por %p119, %p120
      %p122 = scmp.ne.s32.totalorder %s113, %s114
      %p123 = scmp.eq.s32.totalorder %s35, 0
      %p124 = por %p122, %p123
      %p125 = scmp.ne.s32.totalorder %s113, %s114
      %p126 = scmp.eq.s32.totalorder %s36, 1
      %p127 = por %p125, %p126
      %p129 = scmp.ne.s32.totalorder %s114, %s128
      %p130 = scmp.eq.s32.totalorder %s36, 0
      %p131 = por %p129, %p130
      %s133 = sadd.s32 %s132, 1
      %p136 = scmp.eq.s32.totalorder %s30, 1
      %p137 = scmp.ne.s32.totalorder %s132, %s134
      %p138 = scmp.eq.s32.totalorder %s30, 0
      %p139 = por %p137, %p138
      %p140 = scmp.ne.s32.totalorder %s132, %s134
      %p141 = scmp.eq.s32.totalorder %s35, 1
      %p142 = por %p140, %p141
      %p143 = scmp.ne.s32.totalorder %s134, %s135
      %p144 = scmp.eq.s32.totalorder %s35, 0
      %p145 = por %p143, %p144
      %p146 = scmp.ne.s32.totalorder %s134, %s135
      %p147 = scmp.eq.s32.totalorder %s36, 1
      %p148 = por %p146, %p147
      %p150 = scmp.ne.s32.totalorder %s135, %s149
      %p151 = scmp.eq.s32.totalorder %s36, 0
      %p152 = por %p150, %p151
      %s154 = sadd.s32 %s153, 1
      %p157 = scmp.eq.s32.totalorder %s30, 1
      %p158 = scmp.ne.s32.totalorder %s153, %s155
      %p159 = scmp.eq.s32.totalorder %s30, 0
      %p160 = por %p158, %p159
      %p161 = scmp.ne.s32.totalorder %s153, %s155
      %p162 = scmp.eq.s32.totalorder %s35, 1
      %p163 = por %p161, %p162
      %p164 = scmp.ne.s32.totalorder %s155, %s156
      %p165 = scmp.eq.s32.totalorder %s35, 0
      %p166 = por %p164, %p165
      %p167 = scmp.ne.s32.totalorder %s155, %s156
      %p168 = scmp.eq.s32.totalorder %s36, 1
      %p169 = por %p167, %p168
      %p171 = scmp.ne.s32.totalorder %s156, %s170
      %p172 = scmp.eq.s32.totalorder %s36, 0
      %p173 = por %p171, %p172
      %s175 = sadd.s32 %s174, 1
      %p178 = scmp.eq.s32.totalorder %s30, 1
      %p179 = scmp.ne.s32.totalorder %s174, %s176
      %p180 = scmp.eq.s32.totalorder %s30, 0
      %p181 = por %p179, %p180
      %p182 = scmp.ne.s32.totalorder %s174, %s176
      %p183 = scmp.eq.s32.totalorder %s35, 1
      %p184 = por %p182, %p183
      %p185 = scmp.ne.s32.totalorder %s176, %s177
      %p186 = scmp.eq.s32.totalorder %s35, 0
      %p187 = por %p185, %p186
      %p188 = scmp.ne.s32.totalorder %s176, %s177
      %p189 = scmp.eq.s32.totalorder %s36, 1
      %p190 = por %p188, %p189
      %p192 = scmp.ne.s32.totalorder %s177, %s191
      %p193 = scmp.eq.s32.totalorder %s36, 0
      %p194 = por %p192, %p193
      %s196 = sadd.s32 %s195, 1
      %p199 = scmp.eq.s32.totalorder %s30, 1
      %p200 = scmp.ne.s32.totalorder %s195, %s197
      %p201 = scmp.eq.s32.totalorder %s30, 0
      %p202 = por %p200, %p201
      %p203 = scmp.ne.s32.totalorder %s195, %s197
      %p204 = scmp.eq.s32.totalorder %s35, 1
      %p205 = por %p203, %p204
      %p206 = scmp.ne.s32.totalorder %s197, %s198
      %p207 = scmp.eq.s32.totalorder %s35, 0
      %p208 = por %p206, %p207
      %p209 = scmp.ne.s32.totalorder %s197, %s198
      %p210 = scmp.eq.s32.totalorder %s36, 1
      %p211 = por %p209, %p210
      %p213 = scmp.ne.s32.totalorder %s198, %s212
      %p214 = scmp.eq.s32.totalorder %s36, 0
      %p215 = por %p213, %p214
      %s217 = sadd.s32 %s216, 1
      %p220 = scmp.eq.s32.totalorder %s30, 1
      %p221 = scmp.ne.s32.totalorder %s216, %s218
      %p222 = scmp.eq.s32.totalorder %s30, 0
      %p223 = por %p221, %p222
      %p224 = scmp.ne.s32.totalorder %s216, %s218
      %p225 = scmp.eq.s32.totalorder %s35, 1
      %p226 = por %p224, %p225
      %p227 = scmp.ne.s32.totalorder %s218, %s219
      %p228 = scmp.eq.s32.totalorder %s35, 0
      %p229 = por %p227, %p228
      %p230 = scmp.ne.s32.totalorder %s218, %s219
      %p231 = scmp.eq.s32.totalorder %s36, 1
      %p232 = por %p230, %p231
      %p234 = scmp.ne.s32.totalorder %s219, %s233
      %p235 = scmp.eq.s32.totalorder %s36, 0
      %p236 = por %p234, %p235
      %s238 = sadd.s32 %s237, 1
      %p241 = scmp.eq.s32.totalorder %s30, 1
      %p242 = scmp.ne.s32.totalorder %s237, %s239
      %p243 = scmp.eq.s32.totalorder %s30, 0
      %p244 = por %p242, %p243
      %p245 = scmp.ne.s32.totalorder %s237, %s239
      %p246 = scmp.eq.s32.totalorder %s35, 1
      %p247 = por %p245, %p246
      %p248 = scmp.ne.s32.totalorder %s239, %s240
      %p249 = scmp.eq.s32.totalorder %s35, 0
      %p250 = por %p248, %p249
      %p251 = scmp.ne.s32.totalorder %s239, %s240
      %p252 = scmp.eq.s32.totalorder %s36, 1
      %p253 = por %p251, %p252
      %p255 = scmp.ne.s32.totalorder %s240, %s254
      %p256 = scmp.eq.s32.totalorder %s36, 0
      %p257 = por %p255, %p256
      %s259 = sadd.s32 %s258, 1
      %p262 = scmp.eq.s32.totalorder %s30, 1
      %p263 = scmp.ne.s32.totalorder %s258, %s260
      %p264 = scmp.eq.s32.totalorder %s30, 0
      %p265 = por %p263, %p264
      %p266 = scmp.ne.s32.totalorder %s258, %s260
      %p267 = scmp.eq.s32.totalorder %s35, 1
      %p268 = por %p266, %p267
      %p269 = scmp.ne.s32.totalorder %s260, %s261
      %p270 = scmp.eq.s32.totalorder %s35, 0
      %p271 = por %p269, %p270
      %p272 = scmp.ne.s32.totalorder %s260, %s261
      %p273 = scmp.eq.s32.totalorder %s36, 1
      %p274 = por %p272, %p273
      %p276 = scmp.ne.s32.totalorder %s261, %s275
      %p277 = scmp.eq.s32.totalorder %s36, 0
      %p278 = por %p276, %p277
      %s280 = sadd.s32 %s279, 1
      %p283 = scmp.eq.s32.totalorder %s30, 1
      %p284 = scmp.ne.s32.totalorder %s279, %s281
      %p285 = scmp.eq.s32.totalorder %s30, 0
      %p286 = por %p284, %p285
      %p287 = scmp.ne.s32.totalorder %s279, %s281
      %p288 = scmp.eq.s32.totalorder %s35, 1
      %p289 = por %p287, %p288
      %p290 = scmp.ne.s32.totalorder %s281, %s282
      %p291 = scmp.eq.s32.totalorder %s35, 0
      %p292 = por %p290, %p291
      %p293 = scmp.ne.s32.totalorder %s281, %s282
      %p294 = scmp.eq.s32.totalorder %s36, 1
      %p295 = por %p293, %p294
      %p297 = scmp.ne.s32.totalorder %s282, %s296
      %p298 = scmp.eq.s32.totalorder %s36, 0
      %p299 = por %p297, %p298
      %s301 = sadd.s32 %s300, 1
      %p304 = scmp.eq.s32.totalorder %s30, 1
      %p305 = scmp.ne.s32.totalorder %s300, %s302
      %p306 = scmp.eq.s32.totalorder %s30, 0
      %p307 = por %p305, %p306
      %p308 = scmp.ne.s32.totalorder %s300, %s302
      %p309 = scmp.eq.s32.totalorder %s35, 1
      %p310 = por %p308, %p309
      %p311 = scmp.ne.s32.totalorder %s302, %s303
      %p312 = scmp.eq.s32.totalorder %s35, 0
      %p313 = por %p311, %p312
      %p314 = scmp.ne.s32.totalorder %s302, %s303
      %p315 = scmp.eq.s32.totalorder %s36, 1
      %p316 = por %p314, %p315
      %p318 = scmp.ne.s32.totalorder %s303, %s317
      %p319 = scmp.eq.s32.totalorder %s36, 0
      %p320 = por %p318, %p319
      %s322 = sadd.s32 %s321, 1
      %p325 = scmp.eq.s32.totalorder %s30, 1
      %p326 = scmp.ne.s32.totalorder %s321, %s323
      %p327 = scmp.eq.s32.totalorder %s30, 0
      %p328 = por %p326, %p327
      %p329 = scmp.ne.s32.totalorder %s321, %s323
      %p330 = scmp.eq.s32.totalorder %s35, 1
      %p331 = por %p329, %p330
      %p332 = scmp.ne.s32.totalorder %s323, %s324
      %p333 = scmp.eq.s32.totalorder %s35, 0
      %p334 = por %p332, %p333
      %p335 = scmp.ne.s32.totalorder %s323, %s324
      %p336 = scmp.eq.s32.totalorder %s36, 1
      %p337 = por %p335, %p336
      %p339 = scmp.ne.s32.totalorder %s324, %s338
      %p340 = scmp.eq.s32.totalorder %s36, 0
      %p341 = por %p339, %p340
      %s343 = sadd.s32 %s342, 1
      %p346 = scmp.eq.s32.totalorder %s30, 1
      %p347 = scmp.ne.s32.totalorder %s342, %s344
      %p348 = scmp.eq.s32.totalorder %s30, 0
      %p349 = por %p347, %p348
      %p350 = scmp.ne.s32.totalorder %s342, %s344
      %p351 = scmp.eq.s32.totalorder %s35, 1
      %p352 = por %p350, %p351
      %p353 = scmp.ne.s32.totalorder %s344, %s345
      %p354 = scmp.eq.s32.totalorder %s35, 0
      %p355 = por %p353, %p354
      %p356 = scmp.ne.s32.totalorder %s344, %s345
      %p357 = scmp.eq.s32.totalorder %s36, 1
      %p358 = por %p356, %p357
      %p360 = scmp.ne.s32.totalorder %s345, %s359
      %p361 = scmp.eq.s32.totalorder %s36, 0
      %p362 = por %p360, %p361
      %s364 = sadd.s32 %s363, 1
      %p367 = scmp.eq.s32.totalorder %s30, 1
      %p368 = scmp.ne.s32.totalorder %s363, %s365
      %p369 = scmp.eq.s32.totalorder %s30, 0
      %p370 = por %p368, %p369
      %p371 = scmp.ne.s32.totalorder %s363, %s365
      %p372 = scmp.eq.s32.totalorder %s35, 1
      %p373 = por %p371, %p372
      %p374 = scmp.ne.s32.totalorder %s365, %s366
      %p375 = scmp.eq.s32.totalorder %s35, 0
      %p376 = por %p374, %p375
      %p377 = scmp.ne.s32.totalorder %s365, %s366
      %p378 = scmp.eq.s32.totalorder %s36, 1
      %p379 = por %p377, %p378
      %p381 = scmp.ne.s32.totalorder %s366, %s380
      %p382 = scmp.eq.s32.totalorder %s36, 0
      %p383 = por %p381, %p382
      %s385 = sadd.s32 %s384, 1
      %p388 = scmp.eq.s32.totalorder %s30, 1
      %p389 = scmp.ne.s32.totalorder %s384, %s386
      %p390 = scmp.eq.s32.totalorder %s30, 0
      %p391 = por %p389, %p390
      %p392 = scmp.ne.s32.totalorder %s384, %s386
      %p393 = scmp.eq.s32.totalorder %s35, 1
      %p394 = por %p392, %p393
      %p395 = scmp.ne.s32.totalorder %s386, %s387
      %p396 = scmp.eq.s32.totalorder %s35, 0
      %p397 = por %p395, %p396
      %p398 = scmp.ne.s32.totalorder %s386, %s387
      %p399 = scmp.eq.s32.totalorder %s36, 1
      %p400 = por %p398, %p399
      %p402 = scmp.ne.s32.totalorder %s387, %s401
      %p403 = scmp.eq.s32.totalorder %s36, 0
      %p404 = por %p402, %p403
      %s406 = sadd.s32 %s405, 1
      %p409 = scmp.eq.s32.totalorder %s30, 1
      %p410 = scmp.ne.s32.totalorder %s405, %s407
      %p411 = scmp.eq.s32.totalorder %s30, 0
      %p412 = por %p410, %p411
      %p413 = scmp.ne.s32.totalorder %s405, %s407
      %p414 = scmp.eq.s32.totalorder %s35, 1
      %p415 = por %p413, %p414
      %p416 = scmp.ne.s32.totalorder %s407, %s408
      %p417 = scmp.eq.s32.totalorder %s35, 0
      %p418 = por %p416, %p417
      %p419 = scmp.ne.s32.totalorder %s407, %s408
      %p420 = scmp.eq.s32.totalorder %s36, 1
      %p421 = por %p419, %p420
      %p423 = scmp.ne.s32.totalorder %s408, %s422
      %p424 = scmp.eq.s32.totalorder %s36, 0
      %p425 = por %p423, %p424
      %s427 = sadd.s32 %s426, 1
      %p430 = scmp.eq.s32.totalorder %s30, 1
      %p431 = scmp.ne.s32.totalorder %s426, %s428
      %p432 = scmp.eq.s32.totalorder %s30, 0
      %p433 = por %p431, %p432
      %p434 = scmp.ne.s32.totalorder %s426, %s428
      %p435 = scmp.eq.s32.totalorder %s35, 1
      %p436 = por %p434, %p435
      %p437 = scmp.ne.s32.totalorder %s428, %s429
      %p438 = scmp.eq.s32.totalorder %s35, 0
      %p439 = por %p437, %p438
      %p440 = scmp.ne.s32.totalorder %s428, %s429
      %p441 = scmp.eq.s32.totalorder %s36, 1
      %p442 = por %p440, %p441
      %p444 = scmp.ne.s32.totalorder %s429, %s443
      %p445 = scmp.eq.s32.totalorder %s36, 0
      %p446 = por %p444, %p445
      %s448 = sadd.s32 %s447, 1
      %p451 = scmp.eq.s32.totalorder %s30, 1
      %p452 = scmp.ne.s32.totalorder %s447, %s449
      %p453 = scmp.eq.s32.totalorder %s30, 0
      %p454 = por %p452, %p453
      %p455 = scmp.ne.s32.totalorder %s447, %s449
      %p456 = scmp.eq.s32.totalorder %s35, 1
      %p457 = por %p455, %p456
      %p458 = scmp.ne.s32.totalorder %s449, %s450
      %p459 = scmp.eq.s32.totalorder %s35, 0
      %p460 = por %p458, %p459
      %p461 = scmp.ne.s32.totalorder %s449, %s450
      %p462 = scmp.eq.s32.totalorder %s36, 1
      %p463 = por %p461, %p462
      %p465 = scmp.ne.s32.totalorder %s450, %s464
      %p466 = scmp.eq.s32.totalorder %s36, 0
      %p467 = por %p465, %p466
      %s469 = sadd.s32 %s468, 1
      %p472 = scmp.eq.s32.totalorder %s30, 1
      %p473 = scmp.ne.s32.totalorder %s468, %s470
      %p474 = scmp.eq.s32.totalorder %s30, 0
      %p475 = por %p473, %p474
      %p476 = scmp.ne.s32.totalorder %s468, %s470
      %p477 = scmp.eq.s32.totalorder %s35, 1
      %p478 = por %p476, %p477
      %p479 = scmp.ne.s32.totalorder %s470, %s471
      %p480 = scmp.eq.s32.totalorder %s35, 0
      %p481 = por %p479, %p480
      %p482 = scmp.ne.s32.totalorder %s470, %s471
      %p483 = scmp.eq.s32.totalorder %s36, 1
      %p484 = por %p482, %p483
      %p486 = scmp.ne.s32.totalorder %s471, %s485
      %p487 = scmp.eq.s32.totalorder %s36, 0
      %p488 = por %p486, %p487
      %s490 = sadd.s32 %s489, 1
      %p493 = scmp.eq.s32.totalorder %s30, 1
      %p494 = scmp.ne.s32.totalorder %s489, %s491
      %p495 = scmp.eq.s32.totalorder %s30, 0
      %p496 = por %p494, %p495
      %p497 = scmp.ne.s32.totalorder %s489, %s491
      %p498 = scmp.eq.s32.totalorder %s35, 1
      %p499 = por %p497, %p498
      %p500 = scmp.ne.s32.totalorder %s491, %s492
      %p501 = scmp.eq.s32.totalorder %s35, 0
      %p502 = por %p500, %p501
      %p503 = scmp.ne.s32.totalorder %s491, %s492
      %p504 = scmp.eq.s32.totalorder %s36, 1
      %p505 = por %p503, %p504
      %p507 = scmp.ne.s32.totalorder %s492, %s506
      %p508 = scmp.eq.s32.totalorder %s36, 0
      %p509 = por %p507, %p508
      %s510 = ssub.s32 %s30, %s37
      %p511 = scmp.eq.s32.totalorder %s510, 0
      %s513 = sadd.s32 %s512, 1
      %s514 = scalar_select %p511, %s512, %s513
      %p517 = pneg %p511
      %p518 = scmp.eq.s32.totalorder %s30, 1
      %p519 = por %p517, %p518
      %p520 = scmp.ne.s32.totalorder %s512, %s515
      %p521 = scmp.eq.s32.totalorder %s30, 0
      %p522 = por %p520, %p521
      %p523 = scmp.ne.s32.totalorder %s512, %s515
      %p524 = scmp.eq.s32.totalorder %s35, 1
      %p525 = por %p523, %p524
      %p526 = scmp.ne.s32.totalorder %s515, %s516
      %p527 = scmp.eq.s32.totalorder %s35, 0
      %p528 = por %p526, %p527
      %p529 = scmp.ne.s32.totalorder %s515, %s516
      %p530 = scmp.eq.s32.totalorder %s36, 1
      %p531 = por %p529, %p530
      %p533 = scmp.ne.s32.totalorder %s516, %s532
      %p534 = scmp.eq.s32.totalorder %s36, 0
      %p535 = por %p533, %p534
      %p536 = scmp.le.s32.totalorder 1, %s30
      %p537 = scmp.lt.s32.totalorder %s30, 3
      %p538 = pnand %p536, %p537
      %p539 = pneg %p538
      // Predicated region
      $region9: #{tpu_custom_call.1} parent=5 // pred_check
        _
      $region10: #{tpu_custom_call.1} parent=5 // pred_check_branch
        %541 = sbr.rel (%p538) target = $region12
      $region11: #{tpu_custom_call.1} parent=5 // pred_region
        %s542 = ssub.s32 %s30, 1
        // Predicated region
        $region13: #{tpu_custom_call.1} parent=11 // pred_check
          %p543 = pneg %p103
        $region14: #{tpu_custom_call.1} parent=11 // pred_check_branch
          %545 = sbr.rel (%p543) target = $region16
        $region15: #{tpu_custom_call.1} parent=11 // pred_region
          _
        $region16: #{tpu_custom_call.1} parent=11 // pred_fallthru
          _
        // Predicated region
        $region17: #{tpu_custom_call.1} parent=11 // pred_check
          %p546 = pneg %p124
        $region18: #{tpu_custom_call.1} parent=11 // pred_check_branch
          %548 = sbr.rel (%p546) target = $region20
        $region19: #{tpu_custom_call.1} parent=11 // pred_region
          %s550 = ssub.s32 16, 16
          %551 = vsyncadd [#allocation3], %s550
          %s553 = sshll.u32 [#allocation2], 4
          %s554 = int_to_ptr.vmem [resolvable:$true] %s553
          %556 = dma.hbm_to_vmem [thread:$0]  %s3, 16, %s554, [#allocation3]
        $region20: #{tpu_custom_call.1} parent=11 // pred_fallthru
          _
        // Predicated region
        $region21: #{tpu_custom_call.1} parent=11 // pred_check
          %p557 = pneg %p145
        $region22: #{tpu_custom_call.1} parent=11 // pred_check_branch
          %559 = sbr.rel (%p557) target = $region24
        $region23: #{tpu_custom_call.1} parent=11 // pred_region
          _
        $region24: #{tpu_custom_call.1} parent=11 // pred_fallthru
          _
        // Predicated region
        $region25: #{tpu_custom_call.1} parent=11 // pred_check
          %p560 = pneg %p166
        $region26: #{tpu_custom_call.1} parent=11 // pred_check_branch
          %562 = sbr.rel (%p560) target = $region28
        $region27: #{tpu_custom_call.1} parent=11 // pred_region
          %s564 = ssub.s32 16, 16
          %565 = vsyncadd [#allocation5], %s564
          %s567 = sshll.u32 [#allocation4], 4
          %s568 = int_to_ptr.vmem [resolvable:$true] %s567
          %570 = dma.hbm_to_vmem [thread:$0]  %s5, 16, %s568, [#allocation5]
        $region28: #{tpu_custom_call.1} parent=11 // pred_fallthru
          _
        // Predicated region
        $region29: #{tpu_custom_call.1} parent=11 // pred_check
          %p571 = pneg %p187
        $region30: #{tpu_custom_call.1} parent=11 // pred_check_branch
          %573 = sbr.rel (%p571) target = $region32
        $region31: #{tpu_custom_call.1} parent=11 // pred_region
          _
        $region32: #{tpu_custom_call.1} parent=11 // pred_fallthru
          _
        // Predicated region
        $region33: #{tpu_custom_call.1} parent=11 // pred_check
          %p574 = pneg %p208
        $region34: #{tpu_custom_call.1} parent=11 // pred_check_branch
          %576 = sbr.rel (%p574) target = $region36
        $region35: #{tpu_custom_call.1} parent=11 // pred_region
          _
        $region36: #{tpu_custom_call.1} parent=11 // pred_fallthru
          _
        // Predicated region
        $region37: #{tpu_custom_call.1} parent=11 // pred_check
          %p577 = pneg %p229
        $region38: #{tpu_custom_call.1} parent=11 // pred_check_branch
          %579 = sbr.rel (%p577) target = $region40
        $region39: #{tpu_custom_call.1} parent=11 // pred_region
          _
        $region40: #{tpu_custom_call.1} parent=11 // pred_fallthru
          _
        // Predicated region
        $region41: #{tpu_custom_call.1} parent=11 // pred_check
          %p580 = pneg %p250
        $region42: #{tpu_custom_call.1} parent=11 // pred_check_branch
          %582 = sbr.rel (%p580) target = $region44
        $region43: #{tpu_custom_call.1} parent=11 // pred_region
          _
        $region44: #{tpu_custom_call.1} parent=11 // pred_fallthru
          _
        // Predicated region
        $region45: #{tpu_custom_call.1} parent=11 // pred_check
          %p583 = pneg %p271
        $region46: #{tpu_custom_call.1} parent=11 // pred_check_branch
          %585 = sbr.rel (%p583) target = $region48
        $region47: #{tpu_custom_call.1} parent=11 // pred_region
          _
        $region48: #{tpu_custom_call.1} parent=11 // pred_fallthru
          _
        // Predicated region
        $region49: #{tpu_custom_call.1} parent=11 // pred_check
          %p586 = pneg %p292
        $region50: #{tpu_custom_call.1} parent=11 // pred_check_branch
          %588 = sbr.rel (%p586) target = $region52
        $region51: #{tpu_custom_call.1} parent=11 // pred_region
          _
        $region52: #{tpu_custom_call.1} parent=11 // pred_fallthru
          _
        // Predicated region
        $region53: #{tpu_custom_call.1} parent=11 // pred_check
          %p589 = pneg %p313
        $region54: #{tpu_custom_call.1} parent=11 // pred_check_branch
          %591 = sbr.rel (%p589) target = $region56
        $region55: #{tpu_custom_call.1} parent=11 // pred_region
          _
        $region56: #{tpu_custom_call.1} parent=11 // pred_fallthru
          _
        // Predicated region
        $region57: #{tpu_custom_call.1} parent=11 // pred_check
          %p592 = pneg %p334
        $region58: #{tpu_custom_call.1} parent=11 // pred_check_branch
          %594 = sbr.rel (%p592) target = $region60
        $region59: #{tpu_custom_call.1} parent=11 // pred_region
          _
        $region60: #{tpu_custom_call.1} parent=11 // pred_fallthru
          _
        // Predicated region
        $region61: #{tpu_custom_call.1} parent=11 // pred_check
          %p595 = pneg %p355
        $region62: #{tpu_custom_call.1} parent=11 // pred_check_branch
          %597 = sbr.rel (%p595) target = $region64
        $region63: #{tpu_custom_call.1} parent=11 // pred_region
          _
        $region64: #{tpu_custom_call.1} parent=11 // pred_fallthru
          _
        // Predicated region
        $region65: #{tpu_custom_call.1} parent=11 // pred_check
          %p598 = pneg %p376
        $region66: #{tpu_custom_call.1} parent=11 // pred_check_branch
          %600 = sbr.rel (%p598) target = $region68
        $region67: #{tpu_custom_call.1} parent=11 // pred_region
          _
        $region68: #{tpu_custom_call.1} parent=11 // pred_fallthru
          _
        // Predicated region
        $region69: #{tpu_custom_call.1} parent=11 // pred_check
          %p601 = pneg %p397
        $region70: #{tpu_custom_call.1} parent=11 // pred_check_branch
          %603 = sbr.rel (%p601) target = $region72
        $region71: #{tpu_custom_call.1} parent=11 // pred_region
          _
        $region72: #{tpu_custom_call.1} parent=11 // pred_fallthru
          _
        // Predicated region
        $region73: #{tpu_custom_call.1} parent=11 // pred_check
          %p604 = pneg %p418
        $region74: #{tpu_custom_call.1} parent=11 // pred_check_branch
          %606 = sbr.rel (%p604) target = $region76
        $region75: #{tpu_custom_call.1} parent=11 // pred_region
          _
        $region76: #{tpu_custom_call.1} parent=11 // pred_fallthru
          _
        // Predicated region
        $region77: #{tpu_custom_call.1} parent=11 // pred_check
          %p607 = pneg %p439
        $region78: #{tpu_custom_call.1} parent=11 // pred_check_branch
          %609 = sbr.rel (%p607) target = $region80
        $region79: #{tpu_custom_call.1} parent=11 // pred_region
          _
        $region80: #{tpu_custom_call.1} parent=11 // pred_fallthru
          _
        // Predicated region
        $region81: #{tpu_custom_call.1} parent=11 // pred_check
          %p610 = pneg %p460
        $region82: #{tpu_custom_call.1} parent=11 // pred_check_branch
          %612 = sbr.rel (%p610) target = $region84
        $region83: #{tpu_custom_call.1} parent=11 // pred_region
          _
        $region84: #{tpu_custom_call.1} parent=11 // pred_fallthru
          _
        // Predicated region
        $region85: #{tpu_custom_call.1} parent=11 // pred_check
          %p613 = pneg %p481
        $region86: #{tpu_custom_call.1} parent=11 // pred_check_branch
          %615 = sbr.rel (%p613) target = $region88
        $region87: #{tpu_custom_call.1} parent=11 // pred_region
          _
        $region88: #{tpu_custom_call.1} parent=11 // pred_fallthru
          _
        // Predicated region
        $region89: #{tpu_custom_call.1} parent=11 // pred_check
          %p616 = pneg %p502
        $region90: #{tpu_custom_call.1} parent=11 // pred_check_branch
          %618 = sbr.rel (%p616) target = $region92
        $region91: #{tpu_custom_call.1} parent=11 // pred_region
          _
        $region92: #{tpu_custom_call.1} parent=11 // pred_fallthru
          _
      $region12: #{tpu_custom_call.1} parent=5 // pred_fallthru
        _
      %p619 = scmp.lt.s32.totalorder %s30, 2
      // Predicated region
      $region93: #{tpu_custom_call.1} parent=5 // pred_check
        %p620 = pneg %p619
      $region94: #{tpu_custom_call.1} parent=5 // pred_check_branch
        %622 = sbr.rel (%p620) target = $region96
      $region95: #{tpu_custom_call.1} parent=5 // pred_region
        // Predicated region
        $region97: #{tpu_custom_call.1} parent=95 // pred_check
          %p623 = pneg %p50
        $region98: #{tpu_custom_call.1} parent=95 // pred_check_branch
          %625 = sbr.rel (%p623) target = $region100
        $region99: #{tpu_custom_call.1} parent=95 // pred_region
          %p626 = scmp.lt.s32.totalorder %s30, 1
          %s627 = scalar_select %p626, %s30, 1
          %s628 = smul.addr %s627, 2
          %s629 = smul.addr %s628, 8
          %s630 = scalar_lea.vmem %s0, %s629
        $region100: #{tpu_custom_call.1} parent=95 // pred_fallthru
          _
        // Predicated region
        $region101: #{tpu_custom_call.1} parent=95 // pred_check
          %p631 = pneg %p76
        $region102: #{tpu_custom_call.1} parent=95 // pred_check_branch
          %633 = sbr.rel (%p631) target = $region104
        $region103: #{tpu_custom_call.1} parent=95 // pred_region
          %p634 = scmp.lt.s32.totalorder %s30, 1
          %s635 = scalar_select %p634, %s30, 1
          %s636 = scalar_lea.vmem %s1, %s635
        $region104: #{tpu_custom_call.1} parent=95 // pred_fallthru
          _
      $region96: #{tpu_custom_call.1} parent=5 // pred_fallthru
        _
      %p637 = scmp.le.s32.totalorder 1, %s30
      %p638 = scmp.lt.s32.totalorder %s30, 3
      %p639 = pnand %p637, %p638
      %p640 = pneg %p639
      // Predicated region
      $region105: #{tpu_custom_call.1} parent=5 // pred_check
        _
      $region106: #{tpu_custom_call.1} parent=5 // pred_check_branch
        %642 = sbr.rel (%p639) target = $region108
      $region107: #{tpu_custom_call.1} parent=5 // pred_region
        %s643 = ssub.s32 %s30, 1
        // Predicated region
        $region109: #{tpu_custom_call.1} parent=107 // pred_check
          %p644 = pneg %p124
        $region110: #{tpu_custom_call.1} parent=107 // pred_check_branch
          %646 = sbr.rel (%p644) target = $region112
        $region111: #{tpu_custom_call.1} parent=107 // pred_region
          %647 = dma.done [#allocation3], 16
        $region112: #{tpu_custom_call.1} parent=107 // pred_fallthru
          _
        // Predicated region
        $region113: #{tpu_custom_call.1} parent=107 // pred_check
          %p648 = pneg %p166
        $region114: #{tpu_custom_call.1} parent=107 // pred_check_branch
          %650 = sbr.rel (%p648) target = $region116
        $region115: #{tpu_custom_call.1} parent=107 // pred_region
          %651 = dma.done [#allocation5], 16
        $region116: #{tpu_custom_call.1} parent=107 // pred_fallthru
          _
        %p652 = scmp.lt.s32.totalorder %s35, 1
        %s653 = scalar_select %p652, %s35, 1
        %s654 = smul.addr %s653, 2
        %s655 = smul.addr %s654, 8
        %s656 = scalar_lea.vmem %s0, %s655
        %p657 = pneg %p56
        %p658 = pneg %p53
        %p659 = scmp.lt.s32.totalorder %s35, 1
        %s660 = scalar_select %p659, %s35, 1
        %s661 = scalar_lea.vmem %s1, %s660
        %p662 = pneg %p82
        %p663 = pneg %p79
        %p664 = pneg %p103
        %p665 = pneg %p100
        %p666 = pneg %p124
        %p667 = pneg %p121
        %p668 = pneg %p145
        %p669 = pneg %p142
        %p670 = pneg %p166
        %p671 = pneg %p163
        %p672 = pneg %p187
        %p673 = pneg %p184
        %p674 = pneg %p208
        %p675 = pneg %p205
        %p676 = pneg %p229
        %p677 = pneg %p226
        %p678 = pneg %p250
        %p679 = pneg %p247
        %p680 = pneg %p271
        %p681 = pneg %p268
        %p682 = pneg %p292
        %p683 = pneg %p289
        %p684 = pneg %p313
        %p685 = pneg %p310
        %p686 = pneg %p334
        %p687 = pneg %p331
        %p688 = pneg %p355
        %p689 = pneg %p352
        %p690 = pneg %p376
        %p691 = pneg %p373
        %p692 = pneg %p397
        %p693 = pneg %p394
        %p694 = pneg %p418
        %p695 = pneg %p415
        %p696 = pneg %p439
        %p697 = pneg %p436
        %p698 = pneg %p460
        %p699 = pneg %p457
        %p700 = pneg %p481
        %p701 = pneg %p478
        %p702 = pneg %p502
        %p703 = pneg %p499
        %p704 = pneg %p528
        %p705 = pneg %p525
        %p706 = scmp.lt.s32.totalorder %s35, 1
        %s707 = scalar_select %p706, %s35, 1
        %s708 = smul.addr %s707, 2
        %s709 = smul.addr %s708, 8
        %s710 = scalar_lea.vmem %s22, %s709
        %p711 = scmp.lt.s32.totalorder %s35, 1
        %s712 = scalar_select %p711, %s35, 1
        %s713 = smul.addr %s712, 2
        %s714 = smul.addr %s713, 8
        %s715 = scalar_lea.vmem %s0, %s714
        %p716 = scmp.lt.s32.totalorder %s35, 1
        %s717 = scalar_select %p716, %s35, 1
        %s718 = scalar_lea.vmem %s1, %s717
        %p719 = scmp.lt.s32.totalorder %s35, 1
        %s720 = scalar_select %p719, %s35, 1
        %s721 = smul.addr %s720, 2
        %s722 = smul.addr %s721, 8
        %s723 = scalar_lea.vmem %s22, %s722
        %v724 = vld [vmem:[%s715] sm:$0xff]
        %v725 = vld [vmem:[%s715 + $0x8] sm:$0xff]
        %v726 = vld [vmem:[%s718] sm:$0x1]
        %v727 = vxor.u32 %v726, 2147483648
        %v728 = vmul.f32 %v727, 1.442695
        %v729 = vpow.pop %v728
        %v730 = vadd.f32 %v729, 1.0
        %v731 = vrcp.pop %v730
        %v732 = vmul.f32 1.0, %v731
        %v733 = vmul.f32 %v726, %v732
        %v734 = vlaneseq
        %v735 = vshrl.u32 %v734, 7
        %v736 = vadd.s32 %v735, 8
        %v737 = vlaneseq
        %v738 = vand.u32 %v737, 127
        %v739 = vsub.s32 %v735, 1
        %v740 = vsub.s32 %v736, 1
        %vm741 = vcmp.eq.s32.totalorder %v738, %v739
        %vm742 = vcmp.eq.s32.totalorder %v738, %v740
        %v743 = vsel %vm741, 1, 0
        %v744 = vsel %vm742, 1, 0
        %v745 = vcvt.s32.f32 %v743
        %v746 = vcvt.s32.f32 %v744
        %v747 = vadd.s32 %v735, 1
        %v748 = vadd.s32 %v736, 1
        %vm749 = vcmp.eq.s32.totalorder %v738, %v747
        %vm750 = vcmp.eq.s32.totalorder %v738, %v748
        %v751 = vsel %vm749, 1, 0
        %v752 = vsel %vm750, 1, 0
        %v753 = vcvt.s32.f32 %v751
        %v754 = vcvt.s32.f32 %v752
        %v755 = vxor.u32 %v724, 2147483648
        %v756 = vxor.u32 %v725, 2147483648
        %v757 = vmul.f32 %v755, 1.442695
        %v758 = vpow.pop %v757
        %v759 = vmul.f32 %v756, 1.442695
        %v760 = vpow.pop %v759
        %v761 = vadd.f32 %v758, 1.0
        %v762 = vadd.f32 %v760, 1.0
        %v763 = vrcp.pop %v761
        %v764 = vmul.f32 1.0, %v763
        %v765 = vrcp.pop %v762
        %v766 = vmul.f32 1.0, %v765
        %v767 = vmul.f32 %v724, %v764
        %v768 = vmul.f32 %v725, %v766
        %vm769 = vcmask 130048
        %v771 = vsel %vm769, %v745, 0
        %v774 = vsel %vm769, %v746, 0
        %776 = vmatprep.subr.mxu0 0.0
        %777 = vmatpush1.msra.mxu0 %v767
        %778 = vmatprep.subr.mxu0 0.0
        %779 = vmatpush1.msra.mxu0 %v768
        %780 = vmatprep.subr.mxu0 0.0
        %781 = vmatpush1.msra.mxu0 0.0
        %782 = vmatprep.subr.mxu0 0.0
        %783 = vmatpush1.msra.mxu0 0.0
        %784 = vmatprep.subr.mxu0 0.0
        %785 = vmatpush1.msra.mxu0 0.0
        %786 = vmatprep.subr.mxu0 0.0
        %787 = vmatpush1.msra.mxu0 0.0
        %788 = vmatprep.subr.mxu0 0.0
        %789 = vmatpush1.msra.mxu0 0.0
        %790 = vmatprep.subr.mxu0 0.0
        %791 = vmatpush1.msra.mxu0 0.0
        %792 = vmatprep.subr.mxu0 0.0
        %793 = vmatpush1.msra.mxu0 0.0
        %794 = vmatprep.subr.mxu0 0.0
        %795 = vmatpush1.msra.mxu0 0.0
        %796 = vmatprep.subr.mxu0 0.0
        %797 = vmatpush1.msra.mxu0 0.0
        %798 = vmatprep.subr.mxu0 0.0
        %799 = vmatpush1.msra.mxu0 0.0
        %800 = vmatprep.subr.mxu0 0.0
        %801 = vmatpush1.msra.mxu0 0.0
        %802 = vmatprep.subr.mxu0 0.0
        %803 = vmatpush1.msra.mxu0 0.0
        %804 = vmatprep.subr.mxu0 0.0
        %805 = vmatpush1.msra.mxu0 0.0
        %806 = vmatprep.subr.mxu0 0.0
        %807 = vmatpush1.msra.mxu0 0.0
        %808 = vmatprep.subr.mxu0 0.0
        %809 = vmatpush1.msra.mxu0 0.0
        %810 = vmatprep.subr.mxu0 0.0
        %811 = vmatpush1.msra.mxu0 0.0
        %812 = vmatprep.subr.mxu0 0.0
        %813 = vmatpush1.msra.mxu0 0.0
        %814 = vmatprep.subr.mxu0 0.0
        %815 = vmatpush1.msra.mxu0 0.0
        %816 = vmatprep.subr.mxu0 0.0
        %817 = vmatpush1.msra.mxu0 0.0
        %818 = vmatprep.subr.mxu0 0.0
        %819 = vmatpush1.msra.mxu0 0.0
        %820 = vmatprep.subr.mxu0 0.0
        %821 = vmatpush1.msra.mxu0 0.0
        %822 = vmatprep.subr.mxu0 0.0
        %823 = vmatpush1.msra.mxu0 0.0
        %824 = vmatprep.subr.mxu0 0.0
        %825 = vmatpush1.msra.mxu0 0.0
        %826 = vmatprep.subr.mxu0 0.0
        %827 = vmatpush1.msra.mxu0 0.0
        %828 = vmatprep.subr.mxu0 0.0
        %829 = vmatpush1.msra.mxu0 0.0
        %830 = vmatprep.subr.mxu0 0.0
        %831 = vmatpush1.msra.mxu0 0.0
        %832 = vmatprep.subr.mxu0 0.0
        %833 = vmatpush1.msra.mxu0 0.0
        %834 = vmatprep.subr.mxu0 0.0
        %835 = vmatpush1.msra.mxu0 0.0
        %836 = vmatprep.subr.mxu0 0.0
        %837 = vmatpush1.msra.mxu0 0.0
        %838 = vmatprep.subr.mxu0 0.0
        %839 = vmatpush1.msra.mxu0 0.0
        %840 = vmatprep.mubr.f32.mxu0 0.0
        %841 = vmatmul.mubr.f32.gmra.mrb[0].mxu0 %v771
        %v842 = vpop.f32.mrb[0].mxu0
        %v843 = vadd.f32 0.0, %v842
        %v844 = vpop.f32.mrb[0].mxu0
        %845 = vmatprep.mubr.f32.mxu0 0.0
        %846 = vmatmul.mubr.f32.gmra.mrb[0].mxu0 %v774
        %v847 = vpop.f32.mrb[0].mxu0
        %v848 = vadd.f32 0.0, %v847
        %v849 = vpop.f32.mrb[0].mxu0
        %850 = vdwg.mxu0
        %v852 = vsel %vm769, %v753, 0
        %v855 = vsel %vm769, %v754, 0
        %857 = vmatprep.subr.mxu0 0.0
        %858 = vmatpush1.msra.mxu0 %v767
        %859 = vmatprep.subr.mxu0 0.0
        %860 = vmatpush1.msra.mxu0 %v768
        %861 = vmatprep.subr.mxu0 0.0
        %862 = vmatpush1.msra.mxu0 0.0
        %863 = vmatprep.subr.mxu0 0.0
        %864 = vmatpush1.msra.mxu0 0.0
        %865 = vmatprep.subr.mxu0 0.0
        %866 = vmatpush1.msra.mxu0 0.0
        %867 = vmatprep.subr.mxu0 0.0
        %868 = vmatpush1.msra.mxu0 0.0
        %869 = vmatprep.subr.mxu0 0.0
        %870 = vmatpush1.msra.mxu0 0.0
        %871 = vmatprep.subr.mxu0 0.0
        %872 = vmatpush1.msra.mxu0 0.0
        %873 = vmatprep.subr.mxu0 0.0
        %874 = vmatpush1.msra.mxu0 0.0
        %875 = vmatprep.subr.mxu0 0.0
        %876 = vmatpush1.msra.mxu0 0.0
        %877 = vmatprep.subr.mxu0 0.0
        %878 = vmatpush1.msra.mxu0 0.0
        %879 = vmatprep.subr.mxu0 0.0
        %880 = vmatpush1.msra.mxu0 0.0
        %881 = vmatprep.subr.mxu0 0.0
        %882 = vmatpush1.msra.mxu0 0.0
        %883 = vmatprep.subr.mxu0 0.0
        %884 = vmatpush1.msra.mxu0 0.0
        %885 = vmatprep.subr.mxu0 0.0
        %886 = vmatpush1.msra.mxu0 0.0
        %887 = vmatprep.subr.mxu0 0.0
        %888 = vmatpush1.msra.mxu0 0.0
        %889 = vmatprep.subr.mxu0 0.0
        %890 = vmatpush1.msra.mxu0 0.0
        %891 = vmatprep.subr.mxu0 0.0
        %892 = vmatpush1.msra.mxu0 0.0
        %893 = vmatprep.subr.mxu0 0.0
        %894 = vmatpush1.msra.mxu0 0.0
        %895 = vmatprep.subr.mxu0 0.0
        %896 = vmatpush1.msra.mxu0 0.0
        %897 = vmatprep.subr.mxu0 0.0
        %898 = vmatpush1.msra.mxu0 0.0
        %899 = vmatprep.subr.mxu0 0.0
        %900 = vmatpush1.msra.mxu0 0.0
        %901 = vmatprep.subr.mxu0 0.0
        %902 = vmatpush1.msra.mxu0 0.0
        %903 = vmatprep.subr.mxu0 0.0
        %904 = vmatpush1.msra.mxu0 0.0
        %905 = vmatprep.subr.mxu0 0.0
        %906 = vmatpush1.msra.mxu0 0.0
        %907 = vmatprep.subr.mxu0 0.0
        %908 = vmatpush1.msra.mxu0 0.0
        %909 = vmatprep.subr.mxu0 0.0
        %910 = vmatpush1.msra.mxu0 0.0
        %911 = vmatprep.subr.mxu0 0.0
        %912 = vmatpush1.msra.mxu0 0.0
        %913 = vmatprep.subr.mxu0 0.0
        %914 = vmatpush1.msra.mxu0 0.0
        %915 = vmatprep.subr.mxu0 0.0
        %916 = vmatpush1.msra.mxu0 0.0
        %917 = vmatprep.subr.mxu0 0.0
        %918 = vmatpush1.msra.mxu0 0.0
        %919 = vmatprep.subr.mxu0 0.0
        %920 = vmatpush1.msra.mxu0 0.0
        %921 = vmatprep.mubr.f32.mxu0 0.0
        %922 = vmatmul.mubr.f32.gmra.mrb[0].mxu0 %v852
        %v923 = vpop.f32.mrb[0].mxu0
        %v924 = vadd.f32 0.0, %v923
        %v925 = vpop.f32.mrb[0].mxu0
        %926 = vmatprep.mubr.f32.mxu0 0.0
        %927 = vmatmul.mubr.f32.gmra.mrb[0].mxu0 %v855
        %v928 = vpop.f32.mrb[0].mxu0
        %v929 = vadd.f32 0.0, %v928
        %v930 = vpop.f32.mrb[0].mxu0
        %931 = vdwg.mxu0
        %v932 = vld [vmem:[%s2] sm:$0xff]
        %s933 = scalar_lea.vmem %s2, 8
        %v934 = vld [vmem:[%s933] sm:$0xff]
        %vm935 = vcmask 64512
        %v937 = vsel %vm935, %v767, 0
        %v940 = vsel %vm935, %v768, 0
        %942 = vmatprep.subr.mxu0 0.0
        %943 = vmatpush1.msra.mxu0 %v934
        %944 = vmatprep.subr.mxu0 0.0
        %945 = vmatpush1.msra.mxu0 0.0
        %946 = vmatprep.subr.mxu0 0.0
        %947 = vmatpush1.msra.mxu0 0.0
        %948 = vmatprep.subr.mxu0 0.0
        %949 = vmatpush1.msra.mxu0 0.0
        %950 = vmatprep.subr.mxu0 0.0
        %951 = vmatpush1.msra.mxu0 0.0
        %952 = vmatprep.subr.mxu0 0.0
        %953 = vmatpush1.msra.mxu0 0.0
        %954 = vmatprep.subr.mxu0 0.0
        %955 = vmatpush1.msra.mxu0 0.0
        %956 = vmatprep.subr.mxu0 0.0
        %957 = vmatpush1.msra.mxu0 0.0
        %958 = vmatprep.subr.mxu0 0.0
        %959 = vmatpush1.msra.mxu0 0.0
        %960 = vmatprep.subr.mxu0 0.0
        %961 = vmatpush1.msra.mxu0 0.0
        %962 = vmatprep.subr.mxu0 0.0
        %963 = vmatpush1.msra.mxu0 0.0
        %964 = vmatprep.subr.mxu0 0.0
        %965 = vmatpush1.msra.mxu0 0.0
        %966 = vmatprep.subr.mxu0 0.0
        %967 = vmatpush1.msra.mxu0 0.0
        %968 = vmatprep.subr.mxu0 0.0
        %969 = vmatpush1.msra.mxu0 0.0
        %970 = vmatprep.subr.mxu0 0.0
        %971 = vmatpush1.msra.mxu0 0.0
        %972 = vmatprep.subr.mxu0 0.0
        %973 = vmatpush1.msra.mxu0 0.0
        %974 = vmatprep.subr.mxu0 0.0
        %975 = vmatpush1.msra.mxu0 0.0
        %976 = vmatprep.subr.mxu0 0.0
        %977 = vmatpush1.msra.mxu0 0.0
        %978 = vmatprep.subr.mxu0 0.0
        %979 = vmatpush1.msra.mxu0 0.0
        %980 = vmatprep.subr.mxu0 0.0
        %981 = vmatpush1.msra.mxu0 0.0
        %982 = vmatprep.subr.mxu0 0.0
        %983 = vmatpush1.msra.mxu0 0.0
        %984 = vmatprep.subr.mxu0 0.0
        %985 = vmatpush1.msra.mxu0 0.0
        %986 = vmatprep.subr.mxu0 0.0
        %987 = vmatpush1.msra.mxu0 0.0
        %988 = vmatprep.subr.mxu0 0.0
        %989 = vmatpush1.msra.mxu0 0.0
        %990 = vmatprep.subr.mxu0 0.0
        %991 = vmatpush1.msra.mxu0 0.0
        %992 = vmatprep.subr.mxu0 0.0
        %993 = vmatpush1.msra.mxu0 0.0
        %994 = vmatprep.subr.mxu0 0.0
        %995 = vmatpush1.msra.mxu0 0.0
        %996 = vmatprep.subr.mxu0 0.0
        %997 = vmatpush1.msra.mxu0 0.0
        %998 = vmatprep.subr.mxu0 0.0
        %999 = vmatpush1.msra.mxu0 0.0
        %1000 = vmatprep.subr.mxu0 0.0
        %1001 = vmatpush1.msra.mxu0 0.0
        %1002 = vmatprep.subr.mxu0 0.0
        %1003 = vmatpush1.msra.mxu0 0.0
        %1004 = vmatprep.subr.mxu0 0.0
        %1005 = vmatpush1.msra.mxu0 0.0
        %1006 = vmatprep.mubr.f32.mxu0 0.0
        %1007 = vmatmul.mubr.f32.gmra.mrb[0].mxu0 %v937
        %v1008 = vpop.f32.mrb[0].mxu0
        %v1009 = vadd.f32 0.0, %v1008
        %v1010 = vpop.f32.mrb[0].mxu0
        %1011 = vmatprep.mubr.f32.mxu0 0.0
        %1012 = vmatmul.mubr.f32.gmra.mrb[0].mxu0 %v940
        %v1013 = vpop.f32.mrb[0].mxu0
        %v1014 = vadd.f32 0.0, %v1013
        %v1015 = vpop.f32.mrb[0].mxu0
        %1016 = vdwg.mxu0
        %v1018 = vsel %vm935, %v843, 0
        %v1021 = vsel %vm935, %v848, 0
        %1023 = vmatprep.subr.mxu0 0.0
        %1024 = vmatpush1.msra.mxu0 %v932
        %1025 = vmatprep.subr.mxu0 0.0
        %1026 = vmatpush1.msra.mxu0 0.0
        %1027 = vmatprep.subr.mxu0 0.0
        %1028 = vmatpush1.msra.mxu0 0.0
        %1029 = vmatprep.subr.mxu0 0.0
        %1030 = vmatpush1.msra.mxu0 0.0
        %1031 = vmatprep.subr.mxu0 0.0
        %1032 = vmatpush1.msra.mxu0 0.0
        %1033 = vmatprep.subr.mxu0 0.0
        %1034 = vmatpush1.msra.mxu0 0.0
        %1035 = vmatprep.subr.mxu0 0.0
        %1036 = vmatpush1.msra.mxu0 0.0
        %1037 = vmatprep.subr.mxu0 0.0
        %1038 = vmatpush1.msra.mxu0 0.0
        %1039 = vmatprep.subr.mxu0 0.0
        %1040 = vmatpush1.msra.mxu0 0.0
        %1041 = vmatprep.subr.mxu0 0.0
        %1042 = vmatpush1.msra.mxu0 0.0
        %1043 = vmatprep.subr.mxu0 0.0
        %1044 = vmatpush1.msra.mxu0 0.0
        %1045 = vmatprep.subr.mxu0 0.0
        %1046 = vmatpush1.msra.mxu0 0.0
        %1047 = vmatprep.subr.mxu0 0.0
        %1048 = vmatpush1.msra.mxu0 0.0
        %1049 = vmatprep.subr.mxu0 0.0
        %1050 = vmatpush1.msra.mxu0 0.0
        %1051 = vmatprep.subr.mxu0 0.0
        %1052 = vmatpush1.msra.mxu0 0.0
        %1053 = vmatprep.subr.mxu0 0.0
        %1054 = vmatpush1.msra.mxu0 0.0
        %1055 = vmatprep.subr.mxu0 0.0
        %1056 = vmatpush1.msra.mxu0 0.0
        %1057 = vmatprep.subr.mxu0 0.0
        %1058 = vmatpush1.msra.mxu0 0.0
        %1059 = vmatprep.subr.mxu0 0.0
        %1060 = vmatpush1.msra.mxu0 0.0
        %1061 = vmatprep.subr.mxu0 0.0
        %1062 = vmatpush1.msra.mxu0 0.0
        %1063 = vmatprep.subr.mxu0 0.0
        %1064 = vmatpush1.msra.mxu0 0.0
        %1065 = vmatprep.subr.mxu0 0.0
        %1066 = vmatpush1.msra.mxu0 0.0
        %1067 = vmatprep.subr.mxu0 0.0
        %1068 = vmatpush1.msra.mxu0 0.0
        %1069 = vmatprep.subr.mxu0 0.0
        %1070 = vmatpush1.msra.mxu0 0.0
        %1071 = vmatprep.subr.mxu0 0.0
        %1072 = vmatpush1.msra.mxu0 0.0
        %1073 = vmatprep.subr.mxu0 0.0
        %1074 = vmatpush1.msra.mxu0 0.0
        %1075 = vmatprep.subr.mxu0 0.0
        %1076 = vmatpush1.msra.mxu0 0.0
        %1077 = vmatprep.subr.mxu0 0.0
        %1078 = vmatpush1.msra.mxu0 0.0
        %1079 = vmatprep.subr.mxu0 0.0
        %1080 = vmatpush1.msra.mxu0 0.0
        %1081 = vmatprep.subr.mxu0 0.0
        %1082 = vmatpush1.msra.mxu0 0.0
        %1083 = vmatprep.subr.mxu0 0.0
        %1084 = vmatpush1.msra.mxu0 0.0
        %1085 = vmatprep.subr.mxu0 0.0
        %1086 = vmatpush1.msra.mxu0 0.0
        %1087 = vmatprep.mubr.f32.mxu0 0.0
        %1088 = vmatmul.mubr.f32.gmra.mrb[0].mxu0 %v1018
        %v1089 = vpop.f32.mrb[0].mxu0
        %v1090 = vadd.f32 %v1009, %v1089
        %v1091 = vpop.f32.mrb[0].mxu0
        %1092 = vmatprep.mubr.f32.mxu0 0.0
        %1093 = vmatmul.mubr.f32.gmra.mrb[0].mxu0 %v1021
        %v1094 = vpop.f32.mrb[0].mxu0
        %v1095 = vadd.f32 %v1014, %v1094
        %v1096 = vpop.f32.mrb[0].mxu0
        %1097 = vdwg.mxu0
        %s1098 = scalar_lea.vmem %s2, 16
        %v1099 = vld [vmem:[%s1098] sm:$0xff]
        %v1101 = vsel %vm935, %v924, 0
        %v1104 = vsel %vm935, %v929, 0
        %1106 = vmatprep.subr.mxu0 0.0
        %1107 = vmatpush1.msra.mxu0 %v1099
        %1108 = vmatprep.subr.mxu0 0.0
        %1109 = vmatpush1.msra.mxu0 0.0
        %1110 = vmatprep.subr.mxu0 0.0
        %1111 = vmatpush1.msra.mxu0 0.0
        %1112 = vmatprep.subr.mxu0 0.0
        %1113 = vmatpush1.msra.mxu0 0.0
        %1114 = vmatprep.subr.mxu0 0.0
        %1115 = vmatpush1.msra.mxu0 0.0
        %1116 = vmatprep.subr.mxu0 0.0
        %1117 = vmatpush1.msra.mxu0 0.0
        %1118 = vmatprep.subr.mxu0 0.0
        %1119 = vmatpush1.msra.mxu0 0.0
        %1120 = vmatprep.subr.mxu0 0.0
        %1121 = vmatpush1.msra.mxu0 0.0
        %1122 = vmatprep.subr.mxu0 0.0
        %1123 = vmatpush1.msra.mxu0 0.0
        %1124 = vmatprep.subr.mxu0 0.0
        %1125 = vmatpush1.msra.mxu0 0.0
        %1126 = vmatprep.subr.mxu0 0.0
        %1127 = vmatpush1.msra.mxu0 0.0
        %1128 = vmatprep.subr.mxu0 0.0
        %1129 = vmatpush1.msra.mxu0 0.0
        %1130 = vmatprep.subr.mxu0 0.0
        %1131 = vmatpush1.msra.mxu0 0.0
        %1132 = vmatprep.subr.mxu0 0.0
        %1133 = vmatpush1.msra.mxu0 0.0
        %1134 = vmatprep.subr.mxu0 0.0
        %1135 = vmatpush1.msra.mxu0 0.0
        %1136 = vmatprep.subr.mxu0 0.0
        %1137 = vmatpush1.msra.mxu0 0.0
        %1138 = vmatprep.subr.mxu0 0.0
        %1139 = vmatpush1.msra.mxu0 0.0
        %1140 = vmatprep.subr.mxu0 0.0
        %1141 = vmatpush1.msra.mxu0 0.0
        %1142 = vmatprep.subr.mxu0 0.0
        %1143 = vmatpush1.msra.mxu0 0.0
        %1144 = vmatprep.subr.mxu0 0.0
        %1145 = vmatpush1.msra.mxu0 0.0
        %1146 = vmatprep.subr.mxu0 0.0
        %1147 = vmatpush1.msra.mxu0 0.0
        %1148 = vmatprep.subr.mxu0 0.0
        %1149 = vmatpush1.msra.mxu0 0.0
        %1150 = vmatprep.subr.mxu0 0.0
        %1151 = vmatpush1.msra.mxu0 0.0
        %1152 = vmatprep.subr.mxu0 0.0
        %1153 = vmatpush1.msra.mxu0 0.0
        %1154 = vmatprep.subr.mxu0 0.0
        %1155 = vmatpush1.msra.mxu0 0.0
        %1156 = vmatprep.subr.mxu0 0.0
        %1157 = vmatpush1.msra.mxu0 0.0
        %1158 = vmatprep.subr.mxu0 0.0
        %1159 = vmatpush1.msra.mxu0 0.0
        %1160 = vmatprep.subr.mxu0 0.0
        %1161 = vmatpush1.msra.mxu0 0.0
        %1162 = vmatprep.subr.mxu0 0.0
        %1163 = vmatpush1.msra.mxu0 0.0
        %1164 = vmatprep.subr.mxu0 0.0
        %1165 = vmatpush1.msra.mxu0 0.0
        %1166 = vmatprep.subr.mxu0 0.0
        %1167 = vmatpush1.msra.mxu0 0.0
        %1168 = vmatprep.subr.mxu0 0.0
        %1169 = vmatpush1.msra.mxu0 0.0
        %1170 = vmatprep.mubr.f32.mxu0 0.0
        %1171 = vmatmul.mubr.f32.gmra.mrb[0].mxu0 %v1101
        %v1172 = vpop.f32.mrb[0].mxu0
        %v1173 = vadd.f32 0.0, %v1172
        %v1174 = vpop.f32.mrb[0].mxu0
        %1175 = vmatprep.mubr.f32.mxu0 0.0
        %1176 = vmatmul.mubr.f32.gmra.mrb[0].mxu0 %v1104
        %v1177 = vpop.f32.mrb[0].mxu0
        %v1178 = vadd.f32 0.0, %v1177
        %v1179 = vpop.f32.mrb[0].mxu0
        %1180 = vdwg.mxu0
        %v1181 = vadd.f32 %v1090, %v1173
        %v1182 = vadd.f32 %v1095, %v1178
        %v1183 = vld [vmem:[#allocation2] sm:$0x1]
        %v1185 = vlaneseq
        %v1186 = vshrl.u32 %v1185, 7
        %v1187 = vsub.s32 0, %v1186
        %v1188 = vrot.slane %v1183, %v1187
        %v1190 = vadd.f32 %v1181, %v1188
        %v1191 = vadd.f32 %v1182, %v1188
        %v1192 = vld [vmem:[%s4] sm:$0xff]
        %v1193 = vld [vmem:[%s4 + $0x8] sm:$0xff]
        %v1194 = vld [vmem:[%s4 + $0x10] sm:$0xff]
        %v1195 = vld [vmem:[%s4 + $0x18] sm:$0xff]
        %v1196 = vld [vmem:[#allocation4] sm:$0x1]
        %vm1197 = vcmask 261120
        %v1199 = vsel %vm1197, %v733, 0
        %1201 = vmatprep.subr.mxu0 0.0
        %1202 = vmatpush1.msra.mxu0 %v1192
        %1203 = vmatprep.subr.mxu0 0.0
        %1204 = vmatpush1.msra.mxu0 %v1193
        %1205 = vmatprep.subr.mxu0 0.0
        %1206 = vmatpush1.msra.mxu0 %v1194
        %1207 = vmatprep.subr.mxu0 0.0
        %1208 = vmatpush1.msra.mxu0 %v1195
        %1209 = vmatprep.subr.mxu0 0.0
        %1210 = vmatpush1.msra.mxu0 0.0
        %1211 = vmatprep.subr.mxu0 0.0
        %1212 = vmatpush1.msra.mxu0 0.0
        %1213 = vmatprep.subr.mxu0 0.0
        %1214 = vmatpush1.msra.mxu0 0.0
        %1215 = vmatprep.subr.mxu0 0.0
        %1216 = vmatpush1.msra.mxu0 0.0
        %1217 = vmatprep.subr.mxu0 0.0
        %1218 = vmatpush1.msra.mxu0 0.0
        %1219 = vmatprep.subr.mxu0 0.0
        %1220 = vmatpush1.msra.mxu0 0.0
        %1221 = vmatprep.subr.mxu0 0.0
        %1222 = vmatpush1.msra.mxu0 0.0
        %1223 = vmatprep.subr.mxu0 0.0
        %1224 = vmatpush1.msra.mxu0 0.0
        %1225 = vmatprep.subr.mxu0 0.0
        %1226 = vmatpush1.msra.mxu0 0.0
        %1227 = vmatprep.subr.mxu0 0.0
        %1228 = vmatpush1.msra.mxu0 0.0
        %1229 = vmatprep.subr.mxu0 0.0
        %1230 = vmatpush1.msra.mxu0 0.0
        %1231 = vmatprep.subr.mxu0 0.0
        %1232 = vmatpush1.msra.mxu0 0.0
        %1233 = vmatprep.subr.mxu0 0.0
        %1234 = vmatpush1.msra.mxu0 0.0
        %1235 = vmatprep.subr.mxu0 0.0
        %1236 = vmatpush1.msra.mxu0 0.0
        %1237 = vmatprep.subr.mxu0 0.0
        %1238 = vmatpush1.msra.mxu0 0.0
        %1239 = vmatprep.subr.mxu0 0.0
        %1240 = vmatpush1.msra.mxu0 0.0
        %1241 = vmatprep.subr.mxu0 0.0
        %1242 = vmatpush1.msra.mxu0 0.0
        %1243 = vmatprep.subr.mxu0 0.0
        %1244 = vmatpush1.msra.mxu0 0.0
        %1245 = vmatprep.subr.mxu0 0.0
        %1246 = vmatpush1.msra.mxu0 0.0
        %1247 = vmatprep.subr.mxu0 0.0
        %1248 = vmatpush1.msra.mxu0 0.0
        %1249 = vmatprep.subr.mxu0 0.0
        %1250 = vmatpush1.msra.mxu0 0.0
        %1251 = vmatprep.subr.mxu0 0.0
        %1252 = vmatpush1.msra.mxu0 0.0
        %1253 = vmatprep.subr.mxu0 0.0
        %1254 = vmatpush1.msra.mxu0 0.0
        %1255 = vmatprep.subr.mxu0 0.0
        %1256 = vmatpush1.msra.mxu0 0.0
        %1257 = vmatprep.subr.mxu0 0.0
        %1258 = vmatpush1.msra.mxu0 0.0
        %1259 = vmatprep.subr.mxu0 0.0
        %1260 = vmatpush1.msra.mxu0 0.0
        %1261 = vmatprep.subr.mxu0 0.0
        %1262 = vmatpush1.msra.mxu0 0.0
        %1263 = vmatprep.subr.mxu0 0.0
        %1264 = vmatpush1.msra.mxu0 0.0
        %1265 = vmatprep.mubr.f32.mxu0 0.0
        %1266 = vmatmul.mubr.f32.gmra.mrb[0].mxu0 %v1199
        %v1267 = vpop.f32.mrb[0].mxu0
        %v1268 = vadd.f32 %v1196, %v1267
        %v1269 = vpop.f32.mrb[0].mxu0
        %1270 = vdwg.mxu0
        %v1271 = vlaneseq
        %v1272 = vshrl.u32 %v1271, 7
        %v1273 = vsub.s32 0, %v1272
        %v1274 = vrot.slane %v1268, %v1273
        %v1275 = vadd.f32 %v1190, %v1274
        %v1276 = vadd.f32 %v1191, %v1274
        %v1277 = vxor.u32 %v1275, 2147483648
        %v1278 = vxor.u32 %v1276, 2147483648
        %v1279 = vmul.f32 %v1277, 1.442695
        %v1280 = vpow.pop %v1279
        %v1281 = vmul.f32 %v1278, 1.442695
        %v1282 = vpow.pop %v1281
        %v1283 = vadd.f32 %v1280, 1.0
        %v1284 = vadd.f32 %v1282, 1.0
        %v1285 = vrcp.pop %v1283
        %v1286 = vmul.f32 1.0, %v1285
        %v1287 = vrcp.pop %v1284
        %v1288 = vmul.f32 1.0, %v1287
        %v1289 = vmul.f32 %v1275, %v1286
        %v1290 = vmul.f32 %v1276, %v1288
        %1291 = vmatprep.subr.mxu0 0.0
        %1292 = vmatpush1.msra.mxu0 %v1289
        %1293 = vmatprep.subr.mxu0 0.0
        %1294 = vmatpush1.msra.mxu0 %v1290
        %1295 = vmatprep.subr.mxu0 0.0
        %1296 = vmatpush1.msra.mxu0 0.0
        %1297 = vmatprep.subr.mxu0 0.0
        %1298 = vmatpush1.msra.mxu0 0.0
        %1299 = vmatprep.subr.mxu0 0.0
        %1300 = vmatpush1.msra.mxu0 0.0
        %1301 = vmatprep.subr.mxu0 0.0
        %1302 = vmatpush1.msra.mxu0 0.0
        %1303 = vmatprep.subr.mxu0 0.0
        %1304 = vmatpush1.msra.mxu0 0.0
        %1305 = vmatprep.subr.mxu0 0.0
        %1306 = vmatpush1.msra.mxu0 0.0
        %1307 = vmatprep.subr.mxu0 0.0
        %1308 = vmatpush1.msra.mxu0 0.0
        %1309 = vmatprep.subr.mxu0 0.0
        %1310 = vmatpush1.msra.mxu0 0.0
        %1311 = vmatprep.subr.mxu0 0.0
        %1312 = vmatpush1.msra.mxu0 0.0
        %1313 = vmatprep.subr.mxu0 0.0
        %1314 = vmatpush1.msra.mxu0 0.0
        %1315 = vmatprep.subr.mxu0 0.0
        %1316 = vmatpush1.msra.mxu0 0.0
        %1317 = vmatprep.subr.mxu0 0.0
        %1318 = vmatpush1.msra.mxu0 0.0
        %1319 = vmatprep.subr.mxu0 0.0
        %1320 = vmatpush1.msra.mxu0 0.0
        %1321 = vmatprep.subr.mxu0 0.0
        %1322 = vmatpush1.msra.mxu0 0.0
        %1323 = vmatprep.subr.mxu0 0.0
        %1324 = vmatpush1.msra.mxu0 0.0
        %1325 = vmatprep.subr.mxu0 0.0
        %1326 = vmatpush1.msra.mxu0 0.0
        %1327 = vmatprep.subr.mxu0 0.0
        %1328 = vmatpush1.msra.mxu0 0.0
        %1329 = vmatprep.subr.mxu0 0.0
        %1330 = vmatpush1.msra.mxu0 0.0
        %1331 = vmatprep.subr.mxu0 0.0
        %1332 = vmatpush1.msra.mxu0 0.0
        %1333 = vmatprep.subr.mxu0 0.0
        %1334 = vmatpush1.msra.mxu0 0.0
        %1335 = vmatprep.subr.mxu0 0.0
        %1336 = vmatpush1.msra.mxu0 0.0
        %1337 = vmatprep.subr.mxu0 0.0
        %1338 = vmatpush1.msra.mxu0 0.0
        %1339 = vmatprep.subr.mxu0 0.0
        %1340 = vmatpush1.msra.mxu0 0.0
        %1341 = vmatprep.subr.mxu0 0.0
        %1342 = vmatpush1.msra.mxu0 0.0
        %1343 = vmatprep.subr.mxu0 0.0
        %1344 = vmatpush1.msra.mxu0 0.0
        %1345 = vmatprep.subr.mxu0 0.0
        %1346 = vmatpush1.msra.mxu0 0.0
        %1347 = vmatprep.subr.mxu0 0.0
        %1348 = vmatpush1.msra.mxu0 0.0
        %1349 = vmatprep.subr.mxu0 0.0
        %1350 = vmatpush1.msra.mxu0 0.0
        %1351 = vmatprep.subr.mxu0 0.0
        %1352 = vmatpush1.msra.mxu0 0.0
        %1353 = vmatprep.subr.mxu0 0.0
        %1354 = vmatpush1.msra.mxu0 0.0
        %1355 = vmatprep.mubr.f32.mxu0 0.0
        %1356 = vmatmul.mubr.f32.gmra.mrb[0].mxu0 %v771
        %v1357 = vpop.f32.mrb[0].mxu0
        %v1358 = vadd.f32 0.0, %v1357
        %v1359 = vpop.f32.mrb[0].mxu0
        %1360 = vmatprep.mubr.f32.mxu0 0.0
        %1361 = vmatmul.mubr.f32.gmra.mrb[0].mxu0 %v774
        %v1362 = vpop.f32.mrb[0].mxu0
        %v1363 = vadd.f32 0.0, %v1362
        %v1364 = vpop.f32.mrb[0].mxu0
        %1365 = vdwg.mxu0
        %1366 = vmatprep.subr.mxu0 0.0
        %1367 = vmatpush1.msra.mxu0 %v1289
        %1368 = vmatprep.subr.mxu0 0.0
        %1369 = vmatpush1.msra.mxu0 %v1290
        %1370 = vmatprep.subr.mxu0 0.0
        %1371 = vmatpush1.msra.mxu0 0.0
        %1372 = vmatprep.subr.mxu0 0.0
        %1373 = vmatpush1.msra.mxu0 0.0
        %1374 = vmatprep.subr.mxu0 0.0
        %1375 = vmatpush1.msra.mxu0 0.0
        %1376 = vmatprep.subr.mxu0 0.0
        %1377 = vmatpush1.msra.mxu0 0.0
        %1378 = vmatprep.subr.mxu0 0.0
        %1379 = vmatpush1.msra.mxu0 0.0
        %1380 = vmatprep.subr.mxu0 0.0
        %1381 = vmatpush1.msra.mxu0 0.0
        %1382 = vmatprep.subr.mxu0 0.0
        %1383 = vmatpush1.msra.mxu0 0.0
        %1384 = vmatprep.subr.mxu0 0.0
        %1385 = vmatpush1.msra.mxu0 0.0
        %1386 = vmatprep.subr.mxu0 0.0
        %1387 = vmatpush1.msra.mxu0 0.0
        %1388 = vmatprep.subr.mxu0 0.0
        %1389 = vmatpush1.msra.mxu0 0.0
        %1390 = vmatprep.subr.mxu0 0.0
        %1391 = vmatpush1.msra.mxu0 0.0
        %1392 = vmatprep.subr.mxu0 0.0
        %1393 = vmatpush1.msra.mxu0 0.0
        %1394 = vmatprep.subr.mxu0 0.0
        %1395 = vmatpush1.msra.mxu0 0.0
        %1396 = vmatprep.subr.mxu0 0.0
        %1397 = vmatpush1.msra.mxu0 0.0
        %1398 = vmatprep.subr.mxu0 0.0
        %1399 = vmatpush1.msra.mxu0 0.0
        %1400 = vmatprep.subr.mxu0 0.0
        %1401 = vmatpush1.msra.mxu0 0.0
        %1402 = vmatprep.subr.mxu0 0.0
        %1403 = vmatpush1.msra.mxu0 0.0
        %1404 = vmatprep.subr.mxu0 0.0
        %1405 = vmatpush1.msra.mxu0 0.0
        %1406 = vmatprep.subr.mxu0 0.0
        %1407 = vmatpush1.msra.mxu0 0.0
        %1408 = vmatprep.subr.mxu0 0.0
        %1409 = vmatpush1.msra.mxu0 0.0
        %1410 = vmatprep.subr.mxu0 0.0
        %1411 = vmatpush1.msra.mxu0 0.0
        %1412 = vmatprep.subr.mxu0 0.0
        %1413 = vmatpush1.msra.mxu0 0.0
        %1414 = vmatprep.subr.mxu0 0.0
        %1415 = vmatpush1.msra.mxu0 0.0
        %1416 = vmatprep.subr.mxu0 0.0
        %1417 = vmatpush1.msra.mxu0 0.0
        %1418 = vmatprep.subr.mxu0 0.0
        %1419 = vmatpush1.msra.mxu0 0.0
        %1420 = vmatprep.subr.mxu0 0.0
        %1421 = vmatpush1.msra.mxu0 0.0
        %1422 = vmatprep.subr.mxu0 0.0
        %1423 = vmatpush1.msra.mxu0 0.0
        %1424 = vmatprep.subr.mxu0 0.0
        %1425 = vmatpush1.msra.mxu0 0.0
        %1426 = vmatprep.subr.mxu0 0.0
        %1427 = vmatpush1.msra.mxu0 0.0
        %1428 = vmatprep.subr.mxu0 0.0
        %1429 = vmatpush1.msra.mxu0 0.0
        %1430 = vmatprep.mubr.f32.mxu0 0.0
        %1431 = vmatmul.mubr.f32.gmra.mrb[0].mxu0 %v852
        %v1432 = vpop.f32.mrb[0].mxu0
        %v1433 = vadd.f32 0.0, %v1432
        %v1434 = vpop.f32.mrb[0].mxu0
        %1435 = vmatprep.mubr.f32.mxu0 0.0
        %1436 = vmatmul.mubr.f32.gmra.mrb[0].mxu0 %v855
        %v1437 = vpop.f32.mrb[0].mxu0
        %v1438 = vadd.f32 0.0, %v1437
        %v1439 = vpop.f32.mrb[0].mxu0
        %1440 = vdwg.mxu0
        %v1441 = vld [vmem:[%s6] sm:$0xff]
        %s1442 = scalar_lea.vmem %s6, 8
        %v1443 = vld [vmem:[%s1442] sm:$0xff]
        %v1445 = vsel %vm935, %v1289, 0
        %v1448 = vsel %vm935, %v1290, 0
        %1450 = vmatprep.subr.mxu0 0.0
        %1451 = vmatpush1.msra.mxu0 %v1443
        %1452 = vmatprep.subr.mxu0 0.0
        %1453 = vmatpush1.msra.mxu0 0.0
        %1454 = vmatprep.subr.mxu0 0.0
        %1455 = vmatpush1.msra.mxu0 0.0
        %1456 = vmatprep.subr.mxu0 0.0
        %1457 = vmatpush1.msra.mxu0 0.0
        %1458 = vmatprep.subr.mxu0 0.0
        %1459 = vmatpush1.msra.mxu0 0.0
        %1460 = vmatprep.subr.mxu0 0.0
        %1461 = vmatpush1.msra.mxu0 0.0
        %1462 = vmatprep.subr.mxu0 0.0
        %1463 = vmatpush1.msra.mxu0 0.0
        %1464 = vmatprep.subr.mxu0 0.0
        %1465 = vmatpush1.msra.mxu0 0.0
        %1466 = vmatprep.subr.mxu0 0.0
        %1467 = vmatpush1.msra.mxu0 0.0
        %1468 = vmatprep.subr.mxu0 0.0
        %1469 = vmatpush1.msra.mxu0 0.0
        %1470 = vmatprep.subr.mxu0 0.0
        %1471 = vmatpush1.msra.mxu0 0.0
        %1472 = vmatprep.subr.mxu0 0.0
        %1473 = vmatpush1.msra.mxu0 0.0
        %1474 = vmatprep.subr.mxu0 0.0
        %1475 = vmatpush1.msra.mxu0 0.0
        %1476 = vmatprep.subr.mxu0 0.0
        %1477 = vmatpush1.msra.mxu0 0.0
        %1478 = vmatprep.subr.mxu0 0.0
        %1479 = vmatpush1.msra.mxu0 0.0
        %1480 = vmatprep.subr.mxu0 0.0
        %1481 = vmatpush1.msra.mxu0 0.0
        %1482 = vmatprep.subr.mxu0 0.0
        %1483 = vmatpush1.msra.mxu0 0.0
        %1484 = vmatprep.subr.mxu0 0.0
        %1485 = vmatpush1.msra.mxu0 0.0
        %1486 = vmatprep.subr.mxu0 0.0
        %1487 = vmatpush1.msra.mxu0 0.0
        %1488 = vmatprep.subr.mxu0 0.0
        %1489 = vmatpush1.msra.mxu0 0.0
        %1490 = vmatprep.subr.mxu0 0.0
        %1491 = vmatpush1.msra.mxu0 0.0
        %1492 = vmatprep.subr.mxu0 0.0
        %1493 = vmatpush1.msra.mxu0 0.0
        %1494 = vmatprep.subr.mxu0 0.0
        %1495 = vmatpush1.msra.mxu0 0.0
        %1496 = vmatprep.subr.mxu0 0.0
        %1497 = vmatpush1.msra.mxu0 0.0
        %1498 = vmatprep.subr.mxu0 0.0
        %1499 = vmatpush1.msra.mxu0 0.0
        %1500 = vmatprep.subr.mxu0 0.0
        %1501 = vmatpush1.msra.mxu0 0.0
        %1502 = vmatprep.subr.mxu0 0.0
        %1503 = vmatpush1.msra.mxu0 0.0
        %1504 = vmatprep.subr.mxu0 0.0
        %1505 = vmatpush1.msra.mxu0 0.0
        %1506 = vmatprep.subr.mxu0 0.0
        %1507 = vmatpush1.msra.mxu0 0.0
        %1508 = vmatprep.subr.mxu0 0.0
        %1509 = vmatpush1.msra.mxu0 0.0
        %1510 = vmatprep.subr.mxu0 0.0
        %1511 = vmatpush1.msra.mxu0 0.0
        %1512 = vmatprep.subr.mxu0 0.0
        %1513 = vmatpush1.msra.mxu0 0.0
        %1514 = vmatprep.mubr.f32.mxu0 0.0
        %1515 = vmatmul.mubr.f32.gmra.mrb[0].mxu0 %v1445
        %v1516 = vpop.f32.mrb[0].mxu0
        %v1517 = vadd.f32 0.0, %v1516
        %v1518 = vpop.f32.mrb[0].mxu0
        %1519 = vmatprep.mubr.f32.mxu0 0.0
        %1520 = vmatmul.mubr.f32.gmra.mrb[0].mxu0 %v1448
        %v1521 = vpop.f32.mrb[0].mxu0
        %v1522 = vadd.f32 0.0, %v1521
        %v1523 = vpop.f32.mrb[0].mxu0
        %1524 = vdwg.mxu0
        %v1526 = vsel %vm935, %v1358, 0
        %v1529 = vsel %vm935, %v1363, 0
        %1531 = vmatprep.subr.mxu0 0.0
        %1532 = vmatpush1.msra.mxu0 %v1441
        %1533 = vmatprep.subr.mxu0 0.0
        %1534 = vmatpush1.msra.mxu0 0.0
        %1535 = vmatprep.subr.mxu0 0.0
        %1536 = vmatpush1.msra.mxu0 0.0
        %1537 = vmatprep.subr.mxu0 0.0
        %1538 = vmatpush1.msra.mxu0 0.0
        %1539 = vmatprep.subr.mxu0 0.0
        %1540 = vmatpush1.msra.mxu0 0.0
        %1541 = vmatprep.subr.mxu0 0.0
        %1542 = vmatpush1.msra.mxu0 0.0
        %1543 = vmatprep.subr.mxu0 0.0
        %1544 = vmatpush1.msra.mxu0 0.0
        %1545 = vmatprep.subr.mxu0 0.0
        %1546 = vmatpush1.msra.mxu0 0.0
        %1547 = vmatprep.subr.mxu0 0.0
        %1548 = vmatpush1.msra.mxu0 0.0
        %1549 = vmatprep.subr.mxu0 0.0
        %1550 = vmatpush1.msra.mxu0 0.0
        %1551 = vmatprep.subr.mxu0 0.0
        %1552 = vmatpush1.msra.mxu0 0.0
        %1553 = vmatprep.subr.mxu0 0.0
        %1554 = vmatpush1.msra.mxu0 0.0
        %1555 = vmatprep.subr.mxu0 0.0
        %1556 = vmatpush1.msra.mxu0 0.0
        %1557 = vmatprep.subr.mxu0 0.0
        %1558 = vmatpush1.msra.mxu0 0.0
        %1559 = vmatprep.subr.mxu0 0.0
        %1560 = vmatpush1.msra.mxu0 0.0
        %1561 = vmatprep.subr.mxu0 0.0
        %1562 = vmatpush1.msra.mxu0 0.0
        %1563 = vmatprep.subr.mxu0 0.0
        %1564 = vmatpush1.msra.mxu0 0.0
        %1565 = vmatprep.subr.mxu0 0.0
        %1566 = vmatpush1.msra.mxu0 0.0
        %1567 = vmatprep.subr.mxu0 0.0
        %1568 = vmatpush1.msra.mxu0 0.0
        %1569 = vmatprep.subr.mxu0 0.0
        %1570 = vmatpush1.msra.mxu0 0.0
        %1571 = vmatprep.subr.mxu0 0.0
        %1572 = vmatpush1.msra.mxu0 0.0
        %1573 = vmatprep.subr.mxu0 0.0
        %1574 = vmatpush1.msra.mxu0 0.0
        %1575 = vmatprep.subr.mxu0 0.0
        %1576 = vmatpush1.msra.mxu0 0.0
        %1577 = vmatprep.subr.mxu0 0.0
        %1578 = vmatpush1.msra.mxu0 0.0
        %1579 = vmatprep.subr.mxu0 0.0
        %1580 = vmatpush1.msra.mxu0 0.0
        %1581 = vmatprep.subr.mxu0 0.0
        %1582 = vmatpush1.msra.mxu0 0.0
        %1583 = vmatprep.subr.mxu0 0.0
        %1584 = vmatpush1.msra.mxu0 0.0
        %1585 = vmatprep.subr.mxu0 0.0
        %1586 = vmatpush1.msra.mxu0 0.0
        %1587 = vmatprep.subr.mxu0 0.0
        %1588 = vmatpush1.msra.mxu0 0.0
        %1589 = vmatprep.subr.mxu0 0.0
        %1590 = vmatpush1.msra.mxu0 0.0
        %1591 = vmatprep.subr.mxu0 0.0
        %1592 = vmatpush1.msra.mxu0 0.0
        %1593 = vmatprep.subr.mxu0 0.0
        %1594 = vmatpush1.msra.mxu0 0.0
        %1595 = vmatprep.mubr.f32.mxu0 0.0
        %1596 = vmatmul.mubr.f32.gmra.mrb[0].mxu0 %v1526
        %v1597 = vpop.f32.mrb[0].mxu0
        %v1598 = vadd.f32 %v1517, %v1597
        %v1599 = vpop.f32.mrb[0].mxu0
        %1600 = vmatprep.mubr.f32.mxu0 0.0
        %1601 = vmatmul.mubr.f32.gmra.mrb[0].mxu0 %v1529
        %v1602 = vpop.f32.mrb[0].mxu0
        %v1603 = vadd.f32 %v1522, %v1602
        %v1604 = vpop.f32.mrb[0].mxu0
        %1605 = vdwg.mxu0
        %s1606 = scalar_lea.vmem %s6, 16
        %v1607 = vld [vmem:[%s1606] sm:$0xff]
        %v1609 = vsel %vm935, %v1433, 0
        %v1612 = vsel %vm935, %v1438, 0
        %1614 = vmatprep.subr.mxu0 0.0
        %1615 = vmatpush1.msra.mxu0 %v1607
        %1616 = vmatprep.subr.mxu0 0.0
        %1617 = vmatpush1.msra.mxu0 0.0
        %1618 = vmatprep.subr.mxu0 0.0
        %1619 = vmatpush1.msra.mxu0 0.0
        %1620 = vmatprep.subr.mxu0 0.0
        %1621 = vmatpush1.msra.mxu0 0.0
        %1622 = vmatprep.subr.mxu0 0.0
        %1623 = vmatpush1.msra.mxu0 0.0
        %1624 = vmatprep.subr.mxu0 0.0
        %1625 = vmatpush1.msra.mxu0 0.0
        %1626 = vmatprep.subr.mxu0 0.0
        %1627 = vmatpush1.msra.mxu0 0.0
        %1628 = vmatprep.subr.mxu0 0.0
        %1629 = vmatpush1.msra.mxu0 0.0
        %1630 = vmatprep.subr.mxu0 0.0
        %1631 = vmatpush1.msra.mxu0 0.0
        %1632 = vmatprep.subr.mxu0 0.0
        %1633 = vmatpush1.msra.mxu0 0.0
        %1634 = vmatprep.subr.mxu0 0.0
        %1635 = vmatpush1.msra.mxu0 0.0
        %1636 = vmatprep.subr.mxu0 0.0
        %1637 = vmatpush1.msra.mxu0 0.0
        %1638 = vmatprep.subr.mxu0 0.0
        %1639 = vmatpush1.msra.mxu0 0.0
        %1640 = vmatprep.subr.mxu0 0.0
        %1641 = vmatpush1.msra.mxu0 0.0
        %1642 = vmatprep.subr.mxu0 0.0
        %1643 = vmatpush1.msra.mxu0 0.0
        %1644 = vmatprep.subr.mxu0 0.0
        %1645 = vmatpush1.msra.mxu0 0.0
        %1646 = vmatprep.subr.mxu0 0.0
        %1647 = vmatpush1.msra.mxu0 0.0
        %1648 = vmatprep.subr.mxu0 0.0
        %1649 = vmatpush1.msra.mxu0 0.0
        %1650 = vmatprep.subr.mxu0 0.0
        %1651 = vmatpush1.msra.mxu0 0.0
        %1652 = vmatprep.subr.mxu0 0.0
        %1653 = vmatpush1.msra.mxu0 0.0
        %1654 = vmatprep.subr.mxu0 0.0
        %1655 = vmatpush1.msra.mxu0 0.0
        %1656 = vmatprep.subr.mxu0 0.0
        %1657 = vmatpush1.msra.mxu0 0.0
        %1658 = vmatprep.subr.mxu0 0.0
        %1659 = vmatpush1.msra.mxu0 0.0
        %1660 = vmatprep.subr.mxu0 0.0
        %1661 = vmatpush1.msra.mxu0 0.0
        %1662 = vmatprep.subr.mxu0 0.0
        %1663 = vmatpush1.msra.mxu0 0.0
        %1664 = vmatprep.subr.mxu0 0.0
        %1665 = vmatpush1.msra.mxu0 0.0
        %1666 = vmatprep.subr.mxu0 0.0
        %1667 = vmatpush1.msra.mxu0 0.0
        %1668 = vmatprep.subr.mxu0 0.0
        %1669 = vmatpush1.msra.mxu0 0.0
        %1670 = vmatprep.subr.mxu0 0.0
        %1671 = vmatpush1.msra.mxu0 0.0
        %1672 = vmatprep.subr.mxu0 0.0
        %1673 = vmatpush1.msra.mxu0 0.0
        %1674 = vmatprep.subr.mxu0 0.0
        %1675 = vmatpush1.msra.mxu0 0.0
        %1676 = vmatprep.subr.mxu0 0.0
        %1677 = vmatpush1.msra.mxu0 0.0
        %1678 = vmatprep.mubr.f32.mxu0 0.0
        %1679 = vmatmul.mubr.f32.gmra.mrb[0].mxu0 %v1609
        %v1680 = vpop.f32.mrb[0].mxu0
        %v1681 = vadd.f32 0.0, %v1680
        %v1682 = vpop.f32.mrb[0].mxu0
        %1683 = vmatprep.mubr.f32.mxu0 0.0
        %1684 = vmatmul.mubr.f32.gmra.mrb[0].mxu0 %v1612
        %v1685 = vpop.f32.mrb[0].mxu0
        %v1686 = vadd.f32 0.0, %v1685
        %v1687 = vpop.f32.mrb[0].mxu0
        %1688 = vdwg.mxu0
        %v1689 = vadd.f32 %v1598, %v1681
        %v1690 = vadd.f32 %v1603, %v1686
        %v1691 = vld [vmem:[%s7] sm:$0x1]
        %v1693 = vlaneseq
        %v1694 = vshrl.u32 %v1693, 7
        %v1695 = vsub.s32 0, %v1694
        %v1696 = vrot.slane %v1691, %v1695
        %v1698 = vadd.f32 %v1689, %v1696
        %v1699 = vadd.f32 %v1690, %v1696
        %v1700 = vadd.f32 %v1698, %v724
        %v1701 = vadd.f32 %v1699, %v725
        %v1702 = vld [vmem:[%s8] sm:$0xff]
        %v1703 = vld [vmem:[%s9] sm:$0x1]
        %v1705 = vlaneseq
        %v1706 = vshrl.u32 %v1705, 7
        %v1707 = vsub.s32 0, %v1706
        %v1708 = vrot.slane %v1703, %v1707
        %v1711 = vsel %vm935, %v1700, 0
        %v1714 = vsel %vm935, %v1701, 0
        %1716 = vmatprep.subr.mxu0 0.0
        %1717 = vmatpush1.msra.mxu0 %v1702
        %1718 = vmatprep.subr.mxu0 0.0
        %1719 = vmatpush1.msra.mxu0 0.0
        %1720 = vmatprep.subr.mxu0 0.0
        %1721 = vmatpush1.msra.mxu0 0.0
        %1722 = vmatprep.subr.mxu0 0.0
        %1723 = vmatpush1.msra.mxu0 0.0
        %1724 = vmatprep.subr.mxu0 0.0
        %1725 = vmatpush1.msra.mxu0 0.0
        %1726 = vmatprep.subr.mxu0 0.0
        %1727 = vmatpush1.msra.mxu0 0.0
        %1728 = vmatprep.subr.mxu0 0.0
        %1729 = vmatpush1.msra.mxu0 0.0
        %1730 = vmatprep.subr.mxu0 0.0
        %1731 = vmatpush1.msra.mxu0 0.0
        %1732 = vmatprep.subr.mxu0 0.0
        %1733 = vmatpush1.msra.mxu0 0.0
        %1734 = vmatprep.subr.mxu0 0.0
        %1735 = vmatpush1.msra.mxu0 0.0
        %1736 = vmatprep.subr.mxu0 0.0
        %1737 = vmatpush1.msra.mxu0 0.0
        %1738 = vmatprep.subr.mxu0 0.0
        %1739 = vmatpush1.msra.mxu0 0.0
        %1740 = vmatprep.subr.mxu0 0.0
        %1741 = vmatpush1.msra.mxu0 0.0
        %1742 = vmatprep.subr.mxu0 0.0
        %1743 = vmatpush1.msra.mxu0 0.0
        %1744 = vmatprep.subr.mxu0 0.0
        %1745 = vmatpush1.msra.mxu0 0.0
        %1746 = vmatprep.subr.mxu0 0.0
        %1747 = vmatpush1.msra.mxu0 0.0
        %1748 = vmatprep.subr.mxu0 0.0
        %1749 = vmatpush1.msra.mxu0 0.0
        %1750 = vmatprep.subr.mxu0 0.0
        %1751 = vmatpush1.msra.mxu0 0.0
        %1752 = vmatprep.subr.mxu0 0.0
        %1753 = vmatpush1.msra.mxu0 0.0
        %1754 = vmatprep.subr.mxu0 0.0
        %1755 = vmatpush1.msra.mxu0 0.0
        %1756 = vmatprep.subr.mxu0 0.0
        %1757 = vmatpush1.msra.mxu0 0.0
        %1758 = vmatprep.subr.mxu0 0.0
        %1759 = vmatpush1.msra.mxu0 0.0
        %1760 = vmatprep.subr.mxu0 0.0
        %1761 = vmatpush1.msra.mxu0 0.0
        %1762 = vmatprep.subr.mxu0 0.0
        %1763 = vmatpush1.msra.mxu0 0.0
        %1764 = vmatprep.subr.mxu0 0.0
        %1765 = vmatpush1.msra.mxu0 0.0
        %1766 = vmatprep.subr.mxu0 0.0
        %1767 = vmatpush1.msra.mxu0 0.0
        %1768 = vmatprep.subr.mxu0 0.0
        %1769 = vmatpush1.msra.mxu0 0.0
        %1770 = vmatprep.subr.mxu0 0.0
        %1771 = vmatpush1.msra.mxu0 0.0
        %1772 = vmatprep.subr.mxu0 0.0
        %1773 = vmatpush1.msra.mxu0 0.0
        %1774 = vmatprep.subr.mxu0 0.0
        %1775 = vmatpush1.msra.mxu0 0.0
        %1776 = vmatprep.subr.mxu0 0.0
        %1777 = vmatpush1.msra.mxu0 0.0
        %1778 = vmatprep.subr.mxu0 0.0
        %1779 = vmatpush1.msra.mxu0 0.0
        %1780 = vmatprep.mubr.f32.mxu0 0.0
        %1781 = vmatmul.mubr.f32.gmra.mrb[0].mxu0 %v1711
        %v1782 = vpop.f32.mrb[0].mxu0
        %v1783 = vadd.f32 %v1708, %v1782
        %v1784 = vpop.f32.mrb[0].mxu0
        %1785 = vmatprep.mubr.f32.mxu0 0.0
        %1786 = vmatmul.mubr.f32.gmra.mrb[0].mxu0 %v1714
        %v1787 = vpop.f32.mrb[0].mxu0
        %v1788 = vadd.f32 %v1708, %v1787
        %v1789 = vpop.f32.mrb[0].mxu0
        %1790 = vdwg.mxu0
        %v1791 = vld [vmem:[%s10] sm:$0xff]
        %v1792 = vld [vmem:[%s11] sm:$0x1]
        %v1794 = vlaneseq
        %v1795 = vshrl.u32 %v1794, 7
        %v1796 = vsub.s32 0, %v1795
        %v1797 = vrot.slane %v1792, %v1796
        %1799 = vmatprep.subr.mxu0 0.0
        %1800 = vmatpush1.msra.mxu0 %v1791
        %1801 = vmatprep.subr.mxu0 0.0
        %1802 = vmatpush1.msra.mxu0 0.0
        %1803 = vmatprep.subr.mxu0 0.0
        %1804 = vmatpush1.msra.mxu0 0.0
        %1805 = vmatprep.subr.mxu0 0.0
        %1806 = vmatpush1.msra.mxu0 0.0
        %1807 = vmatprep.subr.mxu0 0.0
        %1808 = vmatpush1.msra.mxu0 0.0
        %1809 = vmatprep.subr.mxu0 0.0
        %1810 = vmatpush1.msra.mxu0 0.0
        %1811 = vmatprep.subr.mxu0 0.0
        %1812 = vmatpush1.msra.mxu0 0.0
        %1813 = vmatprep.subr.mxu0 0.0
        %1814 = vmatpush1.msra.mxu0 0.0
        %1815 = vmatprep.subr.mxu0 0.0
        %1816 = vmatpush1.msra.mxu0 0.0
        %1817 = vmatprep.subr.mxu0 0.0
        %1818 = vmatpush1.msra.mxu0 0.0
        %1819 = vmatprep.subr.mxu0 0.0
        %1820 = vmatpush1.msra.mxu0 0.0
        %1821 = vmatprep.subr.mxu0 0.0
        %1822 = vmatpush1.msra.mxu0 0.0
        %1823 = vmatprep.subr.mxu0 0.0
        %1824 = vmatpush1.msra.mxu0 0.0
        %1825 = vmatprep.subr.mxu0 0.0
        %1826 = vmatpush1.msra.mxu0 0.0
        %1827 = vmatprep.subr.mxu0 0.0
        %1828 = vmatpush1.msra.mxu0 0.0
        %1829 = vmatprep.subr.mxu0 0.0
        %1830 = vmatpush1.msra.mxu0 0.0
        %1831 = vmatprep.subr.mxu0 0.0
        %1832 = vmatpush1.msra.mxu0 0.0
        %1833 = vmatprep.subr.mxu0 0.0
        %1834 = vmatpush1.msra.mxu0 0.0
        %1835 = vmatprep.subr.mxu0 0.0
        %1836 = vmatpush1.msra.mxu0 0.0
        %1837 = vmatprep.subr.mxu0 0.0
        %1838 = vmatpush1.msra.mxu0 0.0
        %1839 = vmatprep.subr.mxu0 0.0
        %1840 = vmatpush1.msra.mxu0 0.0
        %1841 = vmatprep.subr.mxu0 0.0
        %1842 = vmatpush1.msra.mxu0 0.0
        %1843 = vmatprep.subr.mxu0 0.0
        %1844 = vmatpush1.msra.mxu0 0.0
        %1845 = vmatprep.subr.mxu0 0.0
        %1846 = vmatpush1.msra.mxu0 0.0
        %1847 = vmatprep.subr.mxu0 0.0
        %1848 = vmatpush1.msra.mxu0 0.0
        %1849 = vmatprep.subr.mxu0 0.0
        %1850 = vmatpush1.msra.mxu0 0.0
        %1851 = vmatprep.subr.mxu0 0.0
        %1852 = vmatpush1.msra.mxu0 0.0
        %1853 = vmatprep.subr.mxu0 0.0
        %1854 = vmatpush1.msra.mxu0 0.0
        %1855 = vmatprep.subr.mxu0 0.0
        %1856 = vmatpush1.msra.mxu0 0.0
        %1857 = vmatprep.subr.mxu0 0.0
        %1858 = vmatpush1.msra.mxu0 0.0
        %1859 = vmatprep.subr.mxu0 0.0
        %1860 = vmatpush1.msra.mxu0 0.0
        %1861 = vmatprep.subr.mxu0 0.0
        %1862 = vmatpush1.msra.mxu0 0.0
        %1863 = vmatprep.mubr.f32.mxu0 0.0
        %1864 = vmatmul.mubr.f32.gmra.mrb[0].mxu0 %v1711
        %v1865 = vpop.f32.mrb[0].mxu0
        %v1866 = vadd.f32 %v1797, %v1865
        %v1867 = vpop.f32.mrb[0].mxu0
        %1868 = vmatprep.mubr.f32.mxu0 0.0
        %1869 = vmatmul.mubr.f32.gmra.mrb[0].mxu0 %v1714
        %v1870 = vpop.f32.mrb[0].mxu0
        %v1871 = vadd.f32 %v1797, %v1870
        %v1872 = vpop.f32.mrb[0].mxu0
        %1873 = vdwg.mxu0
        %v1874 = vld [vmem:[%s12] sm:$0xff]
        %v1875 = vld [vmem:[%s13] sm:$0x1]
        %v1877 = vlaneseq
        %v1878 = vshrl.u32 %v1877, 7
        %v1879 = vsub.s32 0, %v1878
        %v1880 = vrot.slane %v1875, %v1879
        %1882 = vmatprep.subr.mxu0 0.0
        %1883 = vmatpush1.msra.mxu0 %v1874
        %1884 = vmatprep.subr.mxu0 0.0
        %1885 = vmatpush1.msra.mxu0 0.0
        %1886 = vmatprep.subr.mxu0 0.0
        %1887 = vmatpush1.msra.mxu0 0.0
        %1888 = vmatprep.subr.mxu0 0.0
        %1889 = vmatpush1.msra.mxu0 0.0
        %1890 = vmatprep.subr.mxu0 0.0
        %1891 = vmatpush1.msra.mxu0 0.0
        %1892 = vmatprep.subr.mxu0 0.0
        %1893 = vmatpush1.msra.mxu0 0.0
        %1894 = vmatprep.subr.mxu0 0.0
        %1895 = vmatpush1.msra.mxu0 0.0
        %1896 = vmatprep.subr.mxu0 0.0
        %1897 = vmatpush1.msra.mxu0 0.0
        %1898 = vmatprep.subr.mxu0 0.0
        %1899 = vmatpush1.msra.mxu0 0.0
        %1900 = vmatprep.subr.mxu0 0.0
        %1901 = vmatpush1.msra.mxu0 0.0
        %1902 = vmatprep.subr.mxu0 0.0
        %1903 = vmatpush1.msra.mxu0 0.0
        %1904 = vmatprep.subr.mxu0 0.0
        %1905 = vmatpush1.msra.mxu0 0.0
        %1906 = vmatprep.subr.mxu0 0.0
        %1907 = vmatpush1.msra.mxu0 0.0
        %1908 = vmatprep.subr.mxu0 0.0
        %1909 = vmatpush1.msra.mxu0 0.0
        %1910 = vmatprep.subr.mxu0 0.0
        %1911 = vmatpush1.msra.mxu0 0.0
        %1912 = vmatprep.subr.mxu0 0.0
        %1913 = vmatpush1.msra.mxu0 0.0
        %1914 = vmatprep.subr.mxu0 0.0
        %1915 = vmatpush1.msra.mxu0 0.0
        %1916 = vmatprep.subr.mxu0 0.0
        %1917 = vmatpush1.msra.mxu0 0.0
        %1918 = vmatprep.subr.mxu0 0.0
        %1919 = vmatpush1.msra.mxu0 0.0
        %1920 = vmatprep.subr.mxu0 0.0
        %1921 = vmatpush1.msra.mxu0 0.0
        %1922 = vmatprep.subr.mxu0 0.0
        %1923 = vmatpush1.msra.mxu0 0.0
        %1924 = vmatprep.subr.mxu0 0.0
        %1925 = vmatpush1.msra.mxu0 0.0
        %1926 = vmatprep.subr.mxu0 0.0
        %1927 = vmatpush1.msra.mxu0 0.0
        %1928 = vmatprep.subr.mxu0 0.0
        %1929 = vmatpush1.msra.mxu0 0.0
        %1930 = vmatprep.subr.mxu0 0.0
        %1931 = vmatpush1.msra.mxu0 0.0
        %1932 = vmatprep.subr.mxu0 0.0
        %1933 = vmatpush1.msra.mxu0 0.0
        %1934 = vmatprep.subr.mxu0 0.0
        %1935 = vmatpush1.msra.mxu0 0.0
        %1936 = vmatprep.subr.mxu0 0.0
        %1937 = vmatpush1.msra.mxu0 0.0
        %1938 = vmatprep.subr.mxu0 0.0
        %1939 = vmatpush1.msra.mxu0 0.0
        %1940 = vmatprep.subr.mxu0 0.0
        %1941 = vmatpush1.msra.mxu0 0.0
        %1942 = vmatprep.subr.mxu0 0.0
        %1943 = vmatpush1.msra.mxu0 0.0
        %1944 = vmatprep.subr.mxu0 0.0
        %1945 = vmatpush1.msra.mxu0 0.0
        %1946 = vmatprep.mubr.f32.mxu0 0.0
        %1947 = vmatmul.mubr.f32.gmra.mrb[0].mxu0 %v1711
        %v1948 = vpop.f32.mrb[0].mxu0
        %v1949 = vadd.f32 %v1880, %v1948
        %v1950 = vpop.f32.mrb[0].mxu0
        %1951 = vmatprep.mubr.f32.mxu0 0.0
        %1952 = vmatmul.mubr.f32.gmra.mrb[0].mxu0 %v1714
        %v1953 = vpop.f32.mrb[0].mxu0
        %v1954 = vadd.f32 %v1880, %v1953
        %v1955 = vpop.f32.mrb[0].mxu0
        %1956 = vdwg.mxu0
        %v1958 = vsel %vm935, %v1783, 0
        %v1961 = vsel %vm935, %v1788, 0
        %v1964 = vsel %vm935, %v1866, 0
        %v1967 = vsel %vm935, %v1871, 0
        %1969 = vmatprep.subr.mxu0 0.0
        %1970 = vmatpush1.xpose.msra.mxu0 %v1964
        %1971 = vmatprep.subr.mxu0 0.0
        %1972 = vmatpush1.xpose.msra.mxu0 %v1967
        %1973 = vmatprep.subr.mxu0 0.0
        %1974 = vmatpush1.xpose.msra.mxu0 0.0
        %1975 = vmatprep.subr.mxu0 0.0
        %1976 = vmatpush1.xpose.msra.mxu0 0.0
        %1977 = vmatprep.subr.mxu0 0.0
        %1978 = vmatpush1.xpose.msra.mxu0 0.0
        %1979 = vmatprep.subr.mxu0 0.0
        %1980 = vmatpush1.xpose.msra.mxu0 0.0
        %1981 = vmatprep.subr.mxu0 0.0
        %1982 = vmatpush1.xpose.msra.mxu0 0.0
        %1983 = vmatprep.subr.mxu0 0.0
        %1984 = vmatpush1.xpose.msra.mxu0 0.0
        %1985 = vmatprep.subr.mxu0 0.0
        %1986 = vmatpush1.xpose.msra.mxu0 0.0
        %1987 = vmatprep.subr.mxu0 0.0
        %1988 = vmatpush1.xpose.msra.mxu0 0.0
        %1989 = vmatprep.subr.mxu0 0.0
        %1990 = vmatpush1.xpose.msra.mxu0 0.0
        %1991 = vmatprep.subr.mxu0 0.0
        %1992 = vmatpush1.xpose.msra.mxu0 0.0
        %1993 = vmatprep.subr.mxu0 0.0
        %1994 = vmatpush1.xpose.msra.mxu0 0.0
        %1995 = vmatprep.subr.mxu0 0.0
        %1996 = vmatpush1.xpose.msra.mxu0 0.0
        %1997 = vmatprep.subr.mxu0 0.0
        %1998 = vmatpush1.xpose.msra.mxu0 0.0
        %1999 = vmatprep.subr.mxu0 0.0
        %2000 = vmatpush1.xpose.msra.mxu0 0.0
        %2001 = vmatprep.subr.mxu0 0.0
        %2002 = vmatpush1.xpose.msra.mxu0 0.0
        %2003 = vmatprep.subr.mxu0 0.0
        %2004 = vmatpush1.xpose.msra.mxu0 0.0
        %2005 = vmatprep.subr.mxu0 0.0
        %2006 = vmatpush1.xpose.msra.mxu0 0.0
        %2007 = vmatprep.subr.mxu0 0.0
        %2008 = vmatpush1.xpose.msra.mxu0 0.0
        %2009 = vmatprep.subr.mxu0 0.0
        %2010 = vmatpush1.xpose.msra.mxu0 0.0
        %2011 = vmatprep.subr.mxu0 0.0
        %2012 = vmatpush1.xpose.msra.mxu0 0.0
        %2013 = vmatprep.subr.mxu0 0.0
        %2014 = vmatpush1.xpose.msra.mxu0 0.0
        %2015 = vmatprep.subr.mxu0 0.0
        %2016 = vmatpush1.xpose.msra.mxu0 0.0
        %2017 = vmatprep.subr.mxu0 0.0
        %2018 = vmatpush1.xpose.msra.mxu0 0.0
        %2019 = vmatprep.subr.mxu0 0.0
        %2020 = vmatpush1.xpose.msra.mxu0 0.0
        %2021 = vmatprep.subr.mxu0 0.0
        %2022 = vmatpush1.xpose.msra.mxu0 0.0
        %2023 = vmatprep.subr.mxu0 0.0
        %2024 = vmatpush1.xpose.msra.mxu0 0.0
        %2025 = vmatprep.subr.mxu0 0.0
        %2026 = vmatpush1.xpose.msra.mxu0 0.0
        %2027 = vmatprep.subr.mxu0 0.0
        %2028 = vmatpush1.xpose.msra.mxu0 0.0
        %2029 = vmatprep.subr.mxu0 0.0
        %2030 = vmatpush1.xpose.msra.mxu0 0.0
        %2031 = vmatprep.subr.mxu0 0.0
        %2032 = vmatpush1.xpose.msra.mxu0 0.0
        %2033 = vmatprep.mubr.f32.mxu0 0.0
        %2034 = vmatmul.mubr.f32.gmra.mrb[0].mxu0 %v1958
        %v2035 = vpop.f32.mrb[0].mxu0
        %v2036 = vadd.f32 0.0, %v2035
        %v2037 = vpop.f32.mrb[0].mxu0
        %2038 = vmatprep.mubr.f32.mxu0 0.0
        %2039 = vmatmul.mubr.f32.gmra.mrb[0].mxu0 %v1961
        %v2040 = vpop.f32.mrb[0].mxu0
        %v2041 = vadd.f32 0.0, %v2040
        %v2042 = vpop.f32.mrb[0].mxu0
        %2043 = vdwg.mxu0
        %v2044 = vmul.f32 %v2036, 0.35355338
        %v2045 = vmul.f32 %v2041, 0.35355338
        %v2046 = vsel %vm769, %v2044, -inf
        %2047 = vmax.xlane.f32.xlu0 %v2046
        %v2048 = vpop.xlane.xlu0 %2047
        %v2049 = vsel %vm769, %v2045, -inf
        %2050 = vmax.xlane.f32.xlu0 %v2049
        %v2051 = vpop.xlane.xlu0 %2050
        %v2052 = vsub.f32 %v2044, %v2048
        %v2053 = vsub.f32 %v2045, %v2051
        %v2054 = vmul.f32 %v2052, 1.442695
        %v2055 = vpow.pop %v2054
        %v2056 = vmul.f32 %v2053, 1.442695
        %v2057 = vpow.pop %v2056
        %v2058 = vsel %vm769, %v2055, 0.0
        %2059 = vadd.xlane.f32.xlu0 %v2058
        %v2060 = vpop.xlane.xlu0 %2059
        %v2061 = vsel %vm769, %v2057, 0.0
        %2062 = vadd.xlane.f32.xlu0 %v2061
        %v2063 = vpop.xlane.xlu0 %2062
        %v2064 = vrcp.pop %v2060
        %v2065 = vmul.f32 %v2055, %v2064
        %v2066 = vrcp.pop %v2063
        %v2067 = vmul.f32 %v2057, %v2066
        %v2069 = vsel %vm769, %v2065, 0
        %v2072 = vsel %vm769, %v2067, 0
        %2074 = vmatprep.subr.mxu0 0.0
        %2075 = vmatpush1.msra.mxu0 %v1949
        %2076 = vmatprep.subr.mxu0 0.0
        %2077 = vmatpush1.msra.mxu0 %v1954
        %2078 = vmatprep.subr.mxu0 0.0
        %2079 = vmatpush1.msra.mxu0 0.0
        %2080 = vmatprep.subr.mxu0 0.0
        %2081 = vmatpush1.msra.mxu0 0.0
        %2082 = vmatprep.subr.mxu0 0.0
        %2083 = vmatpush1.msra.mxu0 0.0
        %2084 = vmatprep.subr.mxu0 0.0
        %2085 = vmatpush1.msra.mxu0 0.0
        %2086 = vmatprep.subr.mxu0 0.0
        %2087 = vmatpush1.msra.mxu0 0.0
        %2088 = vmatprep.subr.mxu0 0.0
        %2089 = vmatpush1.msra.mxu0 0.0
        %2090 = vmatprep.subr.mxu0 0.0
        %2091 = vmatpush1.msra.mxu0 0.0
        %2092 = vmatprep.subr.mxu0 0.0
        %2093 = vmatpush1.msra.mxu0 0.0
        %2094 = vmatprep.subr.mxu0 0.0
        %2095 = vmatpush1.msra.mxu0 0.0
        %2096 = vmatprep.subr.mxu0 0.0
        %2097 = vmatpush1.msra.mxu0 0.0
        %2098 = vmatprep.subr.mxu0 0.0
        %2099 = vmatpush1.msra.mxu0 0.0
        %2100 = vmatprep.subr.mxu0 0.0
        %2101 = vmatpush1.msra.mxu0 0.0
        %2102 = vmatprep.subr.mxu0 0.0
        %2103 = vmatpush1.msra.mxu0 0.0
        %2104 = vmatprep.subr.mxu0 0.0
        %2105 = vmatpush1.msra.mxu0 0.0
        %2106 = vmatprep.subr.mxu0 0.0
        %2107 = vmatpush1.msra.mxu0 0.0
        %2108 = vmatprep.subr.mxu0 0.0
        %2109 = vmatpush1.msra.mxu0 0.0
        %2110 = vmatprep.subr.mxu0 0.0
        %2111 = vmatpush1.msra.mxu0 0.0
        %2112 = vmatprep.subr.mxu0 0.0
        %2113 = vmatpush1.msra.mxu0 0.0
        %2114 = vmatprep.subr.mxu0 0.0
        %2115 = vmatpush1.msra.mxu0 0.0
        %2116 = vmatprep.subr.mxu0 0.0
        %2117 = vmatpush1.msra.mxu0 0.0
        %2118 = vmatprep.subr.mxu0 0.0
        %2119 = vmatpush1.msra.mxu0 0.0
        %2120 = vmatprep.subr.mxu0 0.0
        %2121 = vmatpush1.msra.mxu0 0.0
        %2122 = vmatprep.subr.mxu0 0.0
        %2123 = vmatpush1.msra.mxu0 0.0
        %2124 = vmatprep.subr.mxu0 0.0
        %2125 = vmatpush1.msra.mxu0 0.0
        %2126 = vmatprep.subr.mxu0 0.0
        %2127 = vmatpush1.msra.mxu0 0.0
        %2128 = vmatprep.subr.mxu0 0.0
        %2129 = vmatpush1.msra.mxu0 0.0
        %2130 = vmatprep.subr.mxu0 0.0
        %2131 = vmatpush1.msra.mxu0 0.0
        %2132 = vmatprep.subr.mxu0 0.0
        %2133 = vmatpush1.msra.mxu0 0.0
        %2134 = vmatprep.subr.mxu0 0.0
        %2135 = vmatpush1.msra.mxu0 0.0
        %2136 = vmatprep.subr.mxu0 0.0
        %2137 = vmatpush1.msra.mxu0 0.0
        %2138 = vmatprep.mubr.f32.mxu0 0.0
        %2139 = vmatmul.mubr.f32.gmra.mrb[0].mxu0 %v2069
        %v2140 = vpop.f32.mrb[0].mxu0
        %v2141 = vadd.f32 0.0, %v2140
        %v2142 = vpop.f32.mrb[0].mxu0
        %2143 = vmatprep.mubr.f32.mxu0 0.0
        %2144 = vmatmul.mubr.f32.gmra.mrb[0].mxu0 %v2072
        %v2145 = vpop.f32.mrb[0].mxu0
        %v2146 = vadd.f32 0.0, %v2145
        %v2147 = vpop.f32.mrb[0].mxu0
        %2148 = vdwg.mxu0
        %v2149 = vld [vmem:[%s14] sm:$0xff]
        %v2150 = vld [vmem:[%s15] sm:$0x1]
        %v2152 = vlaneseq
        %v2153 = vshrl.u32 %v2152, 7
        %v2154 = vsub.s32 0, %v2153
        %v2155 = vrot.slane %v2150, %v2154
        %v2158 = vsel %vm935, %v2141, 0
        %v2161 = vsel %vm935, %v2146, 0
        %2163 = vmatprep.subr.mxu0 0.0
        %2164 = vmatpush1.msra.mxu0 %v2149
        %2165 = vmatprep.subr.mxu0 0.0
        %2166 = vmatpush1.msra.mxu0 0.0
        %2167 = vmatprep.subr.mxu0 0.0
        %2168 = vmatpush1.msra.mxu0 0.0
        %2169 = vmatprep.subr.mxu0 0.0
        %2170 = vmatpush1.msra.mxu0 0.0
        %2171 = vmatprep.subr.mxu0 0.0
        %2172 = vmatpush1.msra.mxu0 0.0
        %2173 = vmatprep.subr.mxu0 0.0
        %2174 = vmatpush1.msra.mxu0 0.0
        %2175 = vmatprep.subr.mxu0 0.0
        %2176 = vmatpush1.msra.mxu0 0.0
        %2177 = vmatprep.subr.mxu0 0.0
        %2178 = vmatpush1.msra.mxu0 0.0
        %2179 = vmatprep.subr.mxu0 0.0
        %2180 = vmatpush1.msra.mxu0 0.0
        %2181 = vmatprep.subr.mxu0 0.0
        %2182 = vmatpush1.msra.mxu0 0.0
        %2183 = vmatprep.subr.mxu0 0.0
        %2184 = vmatpush1.msra.mxu0 0.0
        %2185 = vmatprep.subr.mxu0 0.0
        %2186 = vmatpush1.msra.mxu0 0.0
        %2187 = vmatprep.subr.mxu0 0.0
        %2188 = vmatpush1.msra.mxu0 0.0
        %2189 = vmatprep.subr.mxu0 0.0
        %2190 = vmatpush1.msra.mxu0 0.0
        %2191 = vmatprep.subr.mxu0 0.0
        %2192 = vmatpush1.msra.mxu0 0.0
        %2193 = vmatprep.subr.mxu0 0.0
        %2194 = vmatpush1.msra.mxu0 0.0
        %2195 = vmatprep.subr.mxu0 0.0
        %2196 = vmatpush1.msra.mxu0 0.0
        %2197 = vmatprep.subr.mxu0 0.0
        %2198 = vmatpush1.msra.mxu0 0.0
        %2199 = vmatprep.subr.mxu0 0.0
        %2200 = vmatpush1.msra.mxu0 0.0
        %2201 = vmatprep.subr.mxu0 0.0
        %2202 = vmatpush1.msra.mxu0 0.0
        %2203 = vmatprep.subr.mxu0 0.0
        %2204 = vmatpush1.msra.mxu0 0.0
        %2205 = vmatprep.subr.mxu0 0.0
        %2206 = vmatpush1.msra.mxu0 0.0
        %2207 = vmatprep.subr.mxu0 0.0
        %2208 = vmatpush1.msra.mxu0 0.0
        %2209 = vmatprep.subr.mxu0 0.0
        %2210 = vmatpush1.msra.mxu0 0.0
        %2211 = vmatprep.subr.mxu0 0.0
        %2212 = vmatpush1.msra.mxu0 0.0
        %2213 = vmatprep.subr.mxu0 0.0
        %2214 = vmatpush1.msra.mxu0 0.0
        %2215 = vmatprep.subr.mxu0 0.0
        %2216 = vmatpush1.msra.mxu0 0.0
        %2217 = vmatprep.subr.mxu0 0.0
        %2218 = vmatpush1.msra.mxu0 0.0
        %2219 = vmatprep.subr.mxu0 0.0
        %2220 = vmatpush1.msra.mxu0 0.0
        %2221 = vmatprep.subr.mxu0 0.0
        %2222 = vmatpush1.msra.mxu0 0.0
        %2223 = vmatprep.subr.mxu0 0.0
        %2224 = vmatpush1.msra.mxu0 0.0
        %2225 = vmatprep.subr.mxu0 0.0
        %2226 = vmatpush1.msra.mxu0 0.0
        %2227 = vmatprep.mubr.f32.mxu0 0.0
        %2228 = vmatmul.mubr.f32.gmra.mrb[0].mxu0 %v2158
        %v2229 = vpop.f32.mrb[0].mxu0
        %v2230 = vadd.f32 %v2155, %v2229
        %v2231 = vpop.f32.mrb[0].mxu0
        %2232 = vmatprep.mubr.f32.mxu0 0.0
        %2233 = vmatmul.mubr.f32.gmra.mrb[0].mxu0 %v2161
        %v2234 = vpop.f32.mrb[0].mxu0
        %v2235 = vadd.f32 %v2155, %v2234
        %v2236 = vpop.f32.mrb[0].mxu0
        %2237 = vdwg.mxu0
        %v2238 = vadd.f32 %v2230, %v1700
        %v2239 = vadd.f32 %v2235, %v1701
        %v2240 = vxor.u32 %v2238, 2147483648
        %v2241 = vxor.u32 %v2239, 2147483648
        %v2242 = vmul.f32 %v2240, 1.442695
        %v2243 = vpow.pop %v2242
        %v2244 = vmul.f32 %v2241, 1.442695
        %v2245 = vpow.pop %v2244
        %v2246 = vadd.f32 %v2243, 1.0
        %v2247 = vadd.f32 %v2245, 1.0
        %v2248 = vrcp.pop %v2246
        %v2249 = vmul.f32 1.0, %v2248
        %v2250 = vrcp.pop %v2247
        %v2251 = vmul.f32 1.0, %v2250
        %v2252 = vmul.f32 %v2238, %v2249
        %v2253 = vmul.f32 %v2239, %v2251
        %2254 = vmatprep.subr.mxu0 0.0
        %2255 = vmatpush1.msra.mxu0 %v2252
        %2256 = vmatprep.subr.mxu0 0.0
        %2257 = vmatpush1.msra.mxu0 %v2253
        %2258 = vmatprep.subr.mxu0 0.0
        %2259 = vmatpush1.msra.mxu0 0.0
        %2260 = vmatprep.subr.mxu0 0.0
        %2261 = vmatpush1.msra.mxu0 0.0
        %2262 = vmatprep.subr.mxu0 0.0
        %2263 = vmatpush1.msra.mxu0 0.0
        %2264 = vmatprep.subr.mxu0 0.0
        %2265 = vmatpush1.msra.mxu0 0.0
        %2266 = vmatprep.subr.mxu0 0.0
        %2267 = vmatpush1.msra.mxu0 0.0
        %2268 = vmatprep.subr.mxu0 0.0
        %2269 = vmatpush1.msra.mxu0 0.0
        %2270 = vmatprep.subr.mxu0 0.0
        %2271 = vmatpush1.msra.mxu0 0.0
        %2272 = vmatprep.subr.mxu0 0.0
        %2273 = vmatpush1.msra.mxu0 0.0
        %2274 = vmatprep.subr.mxu0 0.0
        %2275 = vmatpush1.msra.mxu0 0.0
        %2276 = vmatprep.subr.mxu0 0.0
        %2277 = vmatpush1.msra.mxu0 0.0
        %2278 = vmatprep.subr.mxu0 0.0
        %2279 = vmatpush1.msra.mxu0 0.0
        %2280 = vmatprep.subr.mxu0 0.0
        %2281 = vmatpush1.msra.mxu0 0.0
        %2282 = vmatprep.subr.mxu0 0.0
        %2283 = vmatpush1.msra.mxu0 0.0
        %2284 = vmatprep.subr.mxu0 0.0
        %2285 = vmatpush1.msra.mxu0 0.0
        %2286 = vmatprep.subr.mxu0 0.0
        %2287 = vmatpush1.msra.mxu0 0.0
        %2288 = vmatprep.subr.mxu0 0.0
        %2289 = vmatpush1.msra.mxu0 0.0
        %2290 = vmatprep.subr.mxu0 0.0
        %2291 = vmatpush1.msra.mxu0 0.0
        %2292 = vmatprep.subr.mxu0 0.0
        %2293 = vmatpush1.msra.mxu0 0.0
        %2294 = vmatprep.subr.mxu0 0.0
        %2295 = vmatpush1.msra.mxu0 0.0
        %2296 = vmatprep.subr.mxu0 0.0
        %2297 = vmatpush1.msra.mxu0 0.0
        %2298 = vmatprep.subr.mxu0 0.0
        %2299 = vmatpush1.msra.mxu0 0.0
        %2300 = vmatprep.subr.mxu0 0.0
        %2301 = vmatpush1.msra.mxu0 0.0
        %2302 = vmatprep.subr.mxu0 0.0
        %2303 = vmatpush1.msra.mxu0 0.0
        %2304 = vmatprep.subr.mxu0 0.0
        %2305 = vmatpush1.msra.mxu0 0.0
        %2306 = vmatprep.subr.mxu0 0.0
        %2307 = vmatpush1.msra.mxu0 0.0
        %2308 = vmatprep.subr.mxu0 0.0
        %2309 = vmatpush1.msra.mxu0 0.0
        %2310 = vmatprep.subr.mxu0 0.0
        %2311 = vmatpush1.msra.mxu0 0.0
        %2312 = vmatprep.subr.mxu0 0.0
        %2313 = vmatpush1.msra.mxu0 0.0
        %2314 = vmatprep.subr.mxu0 0.0
        %2315 = vmatpush1.msra.mxu0 0.0
        %2316 = vmatprep.subr.mxu0 0.0
        %2317 = vmatpush1.msra.mxu0 0.0
        %2318 = vmatprep.mubr.f32.mxu0 0.0
        %2319 = vmatmul.mubr.f32.gmra.mrb[0].mxu0 %v771
        %v2320 = vpop.f32.mrb[0].mxu0
        %v2321 = vadd.f32 0.0, %v2320
        %v2322 = vpop.f32.mrb[0].mxu0
        %2323 = vmatprep.mubr.f32.mxu0 0.0
        %2324 = vmatmul.mubr.f32.gmra.mrb[0].mxu0 %v774
        %v2325 = vpop.f32.mrb[0].mxu0
        %v2326 = vadd.f32 0.0, %v2325
        %v2327 = vpop.f32.mrb[0].mxu0
        %2328 = vdwg.mxu0
        %2329 = vmatprep.subr.mxu0 0.0
        %2330 = vmatpush1.msra.mxu0 %v2252
        %2331 = vmatprep.subr.mxu0 0.0
        %2332 = vmatpush1.msra.mxu0 %v2253
        %2333 = vmatprep.subr.mxu0 0.0
        %2334 = vmatpush1.msra.mxu0 0.0
        %2335 = vmatprep.subr.mxu0 0.0
        %2336 = vmatpush1.msra.mxu0 0.0
        %2337 = vmatprep.subr.mxu0 0.0
        %2338 = vmatpush1.msra.mxu0 0.0
        %2339 = vmatprep.subr.mxu0 0.0
        %2340 = vmatpush1.msra.mxu0 0.0
        %2341 = vmatprep.subr.mxu0 0.0
        %2342 = vmatpush1.msra.mxu0 0.0
        %2343 = vmatprep.subr.mxu0 0.0
        %2344 = vmatpush1.msra.mxu0 0.0
        %2345 = vmatprep.subr.mxu0 0.0
        %2346 = vmatpush1.msra.mxu0 0.0
        %2347 = vmatprep.subr.mxu0 0.0
        %2348 = vmatpush1.msra.mxu0 0.0
        %2349 = vmatprep.subr.mxu0 0.0
        %2350 = vmatpush1.msra.mxu0 0.0
        %2351 = vmatprep.subr.mxu0 0.0
        %2352 = vmatpush1.msra.mxu0 0.0
        %2353 = vmatprep.subr.mxu0 0.0
        %2354 = vmatpush1.msra.mxu0 0.0
        %2355 = vmatprep.subr.mxu0 0.0
        %2356 = vmatpush1.msra.mxu0 0.0
        %2357 = vmatprep.subr.mxu0 0.0
        %2358 = vmatpush1.msra.mxu0 0.0
        %2359 = vmatprep.subr.mxu0 0.0
        %2360 = vmatpush1.msra.mxu0 0.0
        %2361 = vmatprep.subr.mxu0 0.0
        %2362 = vmatpush1.msra.mxu0 0.0
        %2363 = vmatprep.subr.mxu0 0.0
        %2364 = vmatpush1.msra.mxu0 0.0
        %2365 = vmatprep.subr.mxu0 0.0
        %2366 = vmatpush1.msra.mxu0 0.0
        %2367 = vmatprep.subr.mxu0 0.0
        %2368 = vmatpush1.msra.mxu0 0.0
        %2369 = vmatprep.subr.mxu0 0.0
        %2370 = vmatpush1.msra.mxu0 0.0
        %2371 = vmatprep.subr.mxu0 0.0
        %2372 = vmatpush1.msra.mxu0 0.0
        %2373 = vmatprep.subr.mxu0 0.0
        %2374 = vmatpush1.msra.mxu0 0.0
        %2375 = vmatprep.subr.mxu0 0.0
        %2376 = vmatpush1.msra.mxu0 0.0
        %2377 = vmatprep.subr.mxu0 0.0
        %2378 = vmatpush1.msra.mxu0 0.0
        %2379 = vmatprep.subr.mxu0 0.0
        %2380 = vmatpush1.msra.mxu0 0.0
        %2381 = vmatprep.subr.mxu0 0.0
        %2382 = vmatpush1.msra.mxu0 0.0
        %2383 = vmatprep.subr.mxu0 0.0
        %2384 = vmatpush1.msra.mxu0 0.0
        %2385 = vmatprep.subr.mxu0 0.0
        %2386 = vmatpush1.msra.mxu0 0.0
        %2387 = vmatprep.subr.mxu0 0.0
        %2388 = vmatpush1.msra.mxu0 0.0
        %2389 = vmatprep.subr.mxu0 0.0
        %2390 = vmatpush1.msra.mxu0 0.0
        %2391 = vmatprep.subr.mxu0 0.0
        %2392 = vmatpush1.msra.mxu0 0.0
        %2393 = vmatprep.mubr.f32.mxu0 0.0
        %2394 = vmatmul.mubr.f32.gmra.mrb[0].mxu0 %v852
        %v2395 = vpop.f32.mrb[0].mxu0
        %v2396 = vadd.f32 0.0, %v2395
        %v2397 = vpop.f32.mrb[0].mxu0
        %2398 = vmatprep.mubr.f32.mxu0 0.0
        %2399 = vmatmul.mubr.f32.gmra.mrb[0].mxu0 %v855
        %v2400 = vpop.f32.mrb[0].mxu0
        %v2401 = vadd.f32 0.0, %v2400
        %v2402 = vpop.f32.mrb[0].mxu0
        %2403 = vdwg.mxu0
        %v2404 = vld [vmem:[%s16] sm:$0xff]
        %s2405 = scalar_lea.vmem %s16, 8
        %v2406 = vld [vmem:[%s2405] sm:$0xff]
        %v2408 = vsel %vm935, %v2252, 0
        %v2411 = vsel %vm935, %v2253, 0
        %2413 = vmatprep.subr.mxu0 0.0
        %2414 = vmatpush1.msra.mxu0 %v2406
        %2415 = vmatprep.subr.mxu0 0.0
        %2416 = vmatpush1.msra.mxu0 0.0
        %2417 = vmatprep.subr.mxu0 0.0
        %2418 = vmatpush1.msra.mxu0 0.0
        %2419 = vmatprep.subr.mxu0 0.0
        %2420 = vmatpush1.msra.mxu0 0.0
        %2421 = vmatprep.subr.mxu0 0.0
        %2422 = vmatpush1.msra.mxu0 0.0
        %2423 = vmatprep.subr.mxu0 0.0
        %2424 = vmatpush1.msra.mxu0 0.0
        %2425 = vmatprep.subr.mxu0 0.0
        %2426 = vmatpush1.msra.mxu0 0.0
        %2427 = vmatprep.subr.mxu0 0.0
        %2428 = vmatpush1.msra.mxu0 0.0
        %2429 = vmatprep.subr.mxu0 0.0
        %2430 = vmatpush1.msra.mxu0 0.0
        %2431 = vmatprep.subr.mxu0 0.0
        %2432 = vmatpush1.msra.mxu0 0.0
        %2433 = vmatprep.subr.mxu0 0.0
        %2434 = vmatpush1.msra.mxu0 0.0
        %2435 = vmatprep.subr.mxu0 0.0
        %2436 = vmatpush1.msra.mxu0 0.0
        %2437 = vmatprep.subr.mxu0 0.0
        %2438 = vmatpush1.msra.mxu0 0.0
        %2439 = vmatprep.subr.mxu0 0.0
        %2440 = vmatpush1.msra.mxu0 0.0
        %2441 = vmatprep.subr.mxu0 0.0
        %2442 = vmatpush1.msra.mxu0 0.0
        %2443 = vmatprep.subr.mxu0 0.0
        %2444 = vmatpush1.msra.mxu0 0.0
        %2445 = vmatprep.subr.mxu0 0.0
        %2446 = vmatpush1.msra.mxu0 0.0
        %2447 = vmatprep.subr.mxu0 0.0
        %2448 = vmatpush1.msra.mxu0 0.0
        %2449 = vmatprep.subr.mxu0 0.0
        %2450 = vmatpush1.msra.mxu0 0.0
        %2451 = vmatprep.subr.mxu0 0.0
        %2452 = vmatpush1.msra.mxu0 0.0
        %2453 = vmatprep.subr.mxu0 0.0
        %2454 = vmatpush1.msra.mxu0 0.0
        %2455 = vmatprep.subr.mxu0 0.0
        %2456 = vmatpush1.msra.mxu0 0.0
        %2457 = vmatprep.subr.mxu0 0.0
        %2458 = vmatpush1.msra.mxu0 0.0
        %2459 = vmatprep.subr.mxu0 0.0
        %2460 = vmatpush1.msra.mxu0 0.0
        %2461 = vmatprep.subr.mxu0 0.0
        %2462 = vmatpush1.msra.mxu0 0.0
        %2463 = vmatprep.subr.mxu0 0.0
        %2464 = vmatpush1.msra.mxu0 0.0
        %2465 = vmatprep.subr.mxu0 0.0
        %2466 = vmatpush1.msra.mxu0 0.0
        %2467 = vmatprep.subr.mxu0 0.0
        %2468 = vmatpush1.msra.mxu0 0.0
        %2469 = vmatprep.subr.mxu0 0.0
        %2470 = vmatpush1.msra.mxu0 0.0
        %2471 = vmatprep.subr.mxu0 0.0
        %2472 = vmatpush1.msra.mxu0 0.0
        %2473 = vmatprep.subr.mxu0 0.0
        %2474 = vmatpush1.msra.mxu0 0.0
        %2475 = vmatprep.subr.mxu0 0.0
        %2476 = vmatpush1.msra.mxu0 0.0
        %2477 = vmatprep.mubr.f32.mxu0 0.0
        %2478 = vmatmul.mubr.f32.gmra.mrb[0].mxu0 %v2408
        %v2479 = vpop.f32.mrb[0].mxu0
        %v2480 = vadd.f32 0.0, %v2479
        %v2481 = vpop.f32.mrb[0].mxu0
        %2482 = vmatprep.mubr.f32.mxu0 0.0
        %2483 = vmatmul.mubr.f32.gmra.mrb[0].mxu0 %v2411
        %v2484 = vpop.f32.mrb[0].mxu0
        %v2485 = vadd.f32 0.0, %v2484
        %v2486 = vpop.f32.mrb[0].mxu0
        %2487 = vdwg.mxu0
        %v2489 = vsel %vm935, %v2321, 0
        %v2492 = vsel %vm935, %v2326, 0
        %2494 = vmatprep.subr.mxu0 0.0
        %2495 = vmatpush1.msra.mxu0 %v2404
        %2496 = vmatprep.subr.mxu0 0.0
        %2497 = vmatpush1.msra.mxu0 0.0
        %2498 = vmatprep.subr.mxu0 0.0
        %2499 = vmatpush1.msra.mxu0 0.0
        %2500 = vmatprep.subr.mxu0 0.0
        %2501 = vmatpush1.msra.mxu0 0.0
        %2502 = vmatprep.subr.mxu0 0.0
        %2503 = vmatpush1.msra.mxu0 0.0
        %2504 = vmatprep.subr.mxu0 0.0
        %2505 = vmatpush1.msra.mxu0 0.0
        %2506 = vmatprep.subr.mxu0 0.0
        %2507 = vmatpush1.msra.mxu0 0.0
        %2508 = vmatprep.subr.mxu0 0.0
        %2509 = vmatpush1.msra.mxu0 0.0
        %2510 = vmatprep.subr.mxu0 0.0
        %2511 = vmatpush1.msra.mxu0 0.0
        %2512 = vmatprep.subr.mxu0 0.0
        %2513 = vmatpush1.msra.mxu0 0.0
        %2514 = vmatprep.subr.mxu0 0.0
        %2515 = vmatpush1.msra.mxu0 0.0
        %2516 = vmatprep.subr.mxu0 0.0
        %2517 = vmatpush1.msra.mxu0 0.0
        %2518 = vmatprep.subr.mxu0 0.0
        %2519 = vmatpush1.msra.mxu0 0.0
        %2520 = vmatprep.subr.mxu0 0.0
        %2521 = vmatpush1.msra.mxu0 0.0
        %2522 = vmatprep.subr.mxu0 0.0
        %2523 = vmatpush1.msra.mxu0 0.0
        %2524 = vmatprep.subr.mxu0 0.0
        %2525 = vmatpush1.msra.mxu0 0.0
        %2526 = vmatprep.subr.mxu0 0.0
        %2527 = vmatpush1.msra.mxu0 0.0
        %2528 = vmatprep.subr.mxu0 0.0
        %2529 = vmatpush1.msra.mxu0 0.0
        %2530 = vmatprep.subr.mxu0 0.0
        %2531 = vmatpush1.msra.mxu0 0.0
        %2532 = vmatprep.subr.mxu0 0.0
        %2533 = vmatpush1.msra.mxu0 0.0
        %2534 = vmatprep.subr.mxu0 0.0
        %2535 = vmatpush1.msra.mxu0 0.0
        %2536 = vmatprep.subr.mxu0 0.0
        %2537 = vmatpush1.msra.mxu0 0.0
        %2538 = vmatprep.subr.mxu0 0.0
        %2539 = vmatpush1.msra.mxu0 0.0
        %2540 = vmatprep.subr.mxu0 0.0
        %2541 = vmatpush1.msra.mxu0 0.0
        %2542 = vmatprep.subr.mxu0 0.0
        %2543 = vmatpush1.msra.mxu0 0.0
        %2544 = vmatprep.subr.mxu0 0.0
        %2545 = vmatpush1.msra.mxu0 0.0
        %2546 = vmatprep.subr.mxu0 0.0
        %2547 = vmatpush1.msra.mxu0 0.0
        %2548 = vmatprep.subr.mxu0 0.0
        %2549 = vmatpush1.msra.mxu0 0.0
        %2550 = vmatprep.subr.mxu0 0.0
        %2551 = vmatpush1.msra.mxu0 0.0
        %2552 = vmatprep.subr.mxu0 0.0
        %2553 = vmatpush1.msra.mxu0 0.0
        %2554 = vmatprep.subr.mxu0 0.0
        %2555 = vmatpush1.msra.mxu0 0.0
        %2556 = vmatprep.subr.mxu0 0.0
        %2557 = vmatpush1.msra.mxu0 0.0
        %2558 = vmatprep.mubr.f32.mxu0 0.0
        %2559 = vmatmul.mubr.f32.gmra.mrb[0].mxu0 %v2489
        %v2560 = vpop.f32.mrb[0].mxu0
        %v2561 = vadd.f32 %v2480, %v2560
        %v2562 = vpop.f32.mrb[0].mxu0
        %2563 = vmatprep.mubr.f32.mxu0 0.0
        %2564 = vmatmul.mubr.f32.gmra.mrb[0].mxu0 %v2492
        %v2565 = vpop.f32.mrb[0].mxu0
        %v2566 = vadd.f32 %v2485, %v2565
        %v2567 = vpop.f32.mrb[0].mxu0
        %2568 = vdwg.mxu0
        %s2569 = scalar_lea.vmem %s16, 16
        %v2570 = vld [vmem:[%s2569] sm:$0xff]
        %v2572 = vsel %vm935, %v2396, 0
        %v2575 = vsel %vm935, %v2401, 0
        %2577 = vmatprep.subr.mxu0 0.0
        %2578 = vmatpush1.msra.mxu0 %v2570
        %2579 = vmatprep.subr.mxu0 0.0
        %2580 = vmatpush1.msra.mxu0 0.0
        %2581 = vmatprep.subr.mxu0 0.0
        %2582 = vmatpush1.msra.mxu0 0.0
        %2583 = vmatprep.subr.mxu0 0.0
        %2584 = vmatpush1.msra.mxu0 0.0
        %2585 = vmatprep.subr.mxu0 0.0
        %2586 = vmatpush1.msra.mxu0 0.0
        %2587 = vmatprep.subr.mxu0 0.0
        %2588 = vmatpush1.msra.mxu0 0.0
        %2589 = vmatprep.subr.mxu0 0.0
        %2590 = vmatpush1.msra.mxu0 0.0
        %2591 = vmatprep.subr.mxu0 0.0
        %2592 = vmatpush1.msra.mxu0 0.0
        %2593 = vmatprep.subr.mxu0 0.0
        %2594 = vmatpush1.msra.mxu0 0.0
        %2595 = vmatprep.subr.mxu0 0.0
        %2596 = vmatpush1.msra.mxu0 0.0
        %2597 = vmatprep.subr.mxu0 0.0
        %2598 = vmatpush1.msra.mxu0 0.0
        %2599 = vmatprep.subr.mxu0 0.0
        %2600 = vmatpush1.msra.mxu0 0.0
        %2601 = vmatprep.subr.mxu0 0.0
        %2602 = vmatpush1.msra.mxu0 0.0
        %2603 = vmatprep.subr.mxu0 0.0
        %2604 = vmatpush1.msra.mxu0 0.0
        %2605 = vmatprep.subr.mxu0 0.0
        %2606 = vmatpush1.msra.mxu0 0.0
        %2607 = vmatprep.subr.mxu0 0.0
        %2608 = vmatpush1.msra.mxu0 0.0
        %2609 = vmatprep.subr.mxu0 0.0
        %2610 = vmatpush1.msra.mxu0 0.0
        %2611 = vmatprep.subr.mxu0 0.0
        %2612 = vmatpush1.msra.mxu0 0.0
        %2613 = vmatprep.subr.mxu0 0.0
        %2614 = vmatpush1.msra.mxu0 0.0
        %2615 = vmatprep.subr.mxu0 0.0
        %2616 = vmatpush1.msra.mxu0 0.0
        %2617 = vmatprep.subr.mxu0 0.0
        %2618 = vmatpush1.msra.mxu0 0.0
        %2619 = vmatprep.subr.mxu0 0.0
        %2620 = vmatpush1.msra.mxu0 0.0
        %2621 = vmatprep.subr.mxu0 0.0
        %2622 = vmatpush1.msra.mxu0 0.0
        %2623 = vmatprep.subr.mxu0 0.0
        %2624 = vmatpush1.msra.mxu0 0.0
        %2625 = vmatprep.subr.mxu0 0.0
        %2626 = vmatpush1.msra.mxu0 0.0
        %2627 = vmatprep.subr.mxu0 0.0
        %2628 = vmatpush1.msra.mxu0 0.0
        %2629 = vmatprep.subr.mxu0 0.0
        %2630 = vmatpush1.msra.mxu0 0.0
        %2631 = vmatprep.subr.mxu0 0.0
        %2632 = vmatpush1.msra.mxu0 0.0
        %2633 = vmatprep.subr.mxu0 0.0
        %2634 = vmatpush1.msra.mxu0 0.0
        %2635 = vmatprep.subr.mxu0 0.0
        %2636 = vmatpush1.msra.mxu0 0.0
        %2637 = vmatprep.subr.mxu0 0.0
        %2638 = vmatpush1.msra.mxu0 0.0
        %2639 = vmatprep.subr.mxu0 0.0
        %2640 = vmatpush1.msra.mxu0 0.0
        %2641 = vmatprep.mubr.f32.mxu0 0.0
        %2642 = vmatmul.mubr.f32.gmra.mrb[0].mxu0 %v2572
        %v2643 = vpop.f32.mrb[0].mxu0
        %v2644 = vadd.f32 0.0, %v2643
        %v2645 = vpop.f32.mrb[0].mxu0
        %2646 = vmatprep.mubr.f32.mxu0 0.0
        %2647 = vmatmul.mubr.f32.gmra.mrb[0].mxu0 %v2575
        %v2648 = vpop.f32.mrb[0].mxu0
        %v2649 = vadd.f32 0.0, %v2648
        %v2650 = vpop.f32.mrb[0].mxu0
        %2651 = vdwg.mxu0
        %v2652 = vadd.f32 %v2561, %v2644
        %v2653 = vadd.f32 %v2566, %v2649
        %v2654 = vld [vmem:[%s17] sm:$0x1]
        %v2656 = vlaneseq
        %v2657 = vshrl.u32 %v2656, 7
        %v2658 = vsub.s32 0, %v2657
        %v2659 = vrot.slane %v2654, %v2658
        %v2661 = vadd.f32 %v2652, %v2659
        %v2662 = vadd.f32 %v2653, %v2659
        %v2663 = vld [vmem:[%s18] sm:$0xff]
        %v2664 = vld [vmem:[%s18 + $0x8] sm:$0xff]
        %v2665 = vld [vmem:[%s18 + $0x10] sm:$0xff]
        %v2666 = vld [vmem:[%s18 + $0x18] sm:$0xff]
        %v2667 = vld [vmem:[%s19] sm:$0x1]
        %2668 = vmatprep.subr.mxu0 0.0
        %2669 = vmatpush1.msra.mxu0 %v2663
        %2670 = vmatprep.subr.mxu0 0.0
        %2671 = vmatpush1.msra.mxu0 %v2664
        %2672 = vmatprep.subr.mxu0 0.0
        %2673 = vmatpush1.msra.mxu0 %v2665
        %2674 = vmatprep.subr.mxu0 0.0
        %2675 = vmatpush1.msra.mxu0 %v2666
        %2676 = vmatprep.subr.mxu0 0.0
        %2677 = vmatpush1.msra.mxu0 0.0
        %2678 = vmatprep.subr.mxu0 0.0
        %2679 = vmatpush1.msra.mxu0 0.0
        %2680 = vmatprep.subr.mxu0 0.0
        %2681 = vmatpush1.msra.mxu0 0.0
        %2682 = vmatprep.subr.mxu0 0.0
        %2683 = vmatpush1.msra.mxu0 0.0
        %2684 = vmatprep.subr.mxu0 0.0
        %2685 = vmatpush1.msra.mxu0 0.0
        %2686 = vmatprep.subr.mxu0 0.0
        %2687 = vmatpush1.msra.mxu0 0.0
        %2688 = vmatprep.subr.mxu0 0.0
        %2689 = vmatpush1.msra.mxu0 0.0
        %2690 = vmatprep.subr.mxu0 0.0
        %2691 = vmatpush1.msra.mxu0 0.0
        %2692 = vmatprep.subr.mxu0 0.0
        %2693 = vmatpush1.msra.mxu0 0.0
        %2694 = vmatprep.subr.mxu0 0.0
        %2695 = vmatpush1.msra.mxu0 0.0
        %2696 = vmatprep.subr.mxu0 0.0
        %2697 = vmatpush1.msra.mxu0 0.0
        %2698 = vmatprep.subr.mxu0 0.0
        %2699 = vmatpush1.msra.mxu0 0.0
        %2700 = vmatprep.subr.mxu0 0.0
        %2701 = vmatpush1.msra.mxu0 0.0
        %2702 = vmatprep.subr.mxu0 0.0
        %2703 = vmatpush1.msra.mxu0 0.0
        %2704 = vmatprep.subr.mxu0 0.0
        %2705 = vmatpush1.msra.mxu0 0.0
        %2706 = vmatprep.subr.mxu0 0.0
        %2707 = vmatpush1.msra.mxu0 0.0
        %2708 = vmatprep.subr.mxu0 0.0
        %2709 = vmatpush1.msra.mxu0 0.0
        %2710 = vmatprep.subr.mxu0 0.0
        %2711 = vmatpush1.msra.mxu0 0.0
        %2712 = vmatprep.subr.mxu0 0.0
        %2713 = vmatpush1.msra.mxu0 0.0
        %2714 = vmatprep.subr.mxu0 0.0
        %2715 = vmatpush1.msra.mxu0 0.0
        %2716 = vmatprep.subr.mxu0 0.0
        %2717 = vmatpush1.msra.mxu0 0.0
        %2718 = vmatprep.subr.mxu0 0.0
        %2719 = vmatpush1.msra.mxu0 0.0
        %2720 = vmatprep.subr.mxu0 0.0
        %2721 = vmatpush1.msra.mxu0 0.0
        %2722 = vmatprep.subr.mxu0 0.0
        %2723 = vmatpush1.msra.mxu0 0.0
        %2724 = vmatprep.subr.mxu0 0.0
        %2725 = vmatpush1.msra.mxu0 0.0
        %2726 = vmatprep.subr.mxu0 0.0
        %2727 = vmatpush1.msra.mxu0 0.0
        %2728 = vmatprep.subr.mxu0 0.0
        %2729 = vmatpush1.msra.mxu0 0.0
        %2730 = vmatprep.subr.mxu0 0.0
        %2731 = vmatpush1.msra.mxu0 0.0
        %2732 = vmatprep.mubr.f32.mxu0 0.0
        %2733 = vmatmul.mubr.f32.gmra.mrb[0].mxu0 %v1199
        %v2734 = vpop.f32.mrb[0].mxu0
        %v2735 = vadd.f32 %v2667, %v2734
        %v2736 = vpop.f32.mrb[0].mxu0
        %2737 = vdwg.mxu0
        %v2738 = vlaneseq
        %v2739 = vshrl.u32 %v2738, 7
        %v2740 = vsub.s32 0, %v2739
        %v2741 = vrot.slane %v2735, %v2740
        %v2742 = vadd.f32 %v2661, %v2741
        %v2743 = vadd.f32 %v2662, %v2741
        %v2744 = vxor.u32 %v2742, 2147483648
        %v2745 = vxor.u32 %v2743, 2147483648
        %v2746 = vmul.f32 %v2744, 1.442695
        %v2747 = vpow.pop %v2746
        %v2748 = vmul.f32 %v2745, 1.442695
        %v2749 = vpow.pop %v2748
        %v2750 = vadd.f32 %v2747, 1.0
        %v2751 = vadd.f32 %v2749, 1.0
        %v2752 = vrcp.pop %v2750
        %v2753 = vmul.f32 1.0, %v2752
        %v2754 = vrcp.pop %v2751
        %v2755 = vmul.f32 1.0, %v2754
        %v2756 = vmul.f32 %v2742, %v2753
        %v2757 = vmul.f32 %v2743, %v2755
        %2758 = vmatprep.subr.mxu0 0.0
        %2759 = vmatpush1.msra.mxu0 %v2756
        %2760 = vmatprep.subr.mxu0 0.0
        %2761 = vmatpush1.msra.mxu0 %v2757
        %2762 = vmatprep.subr.mxu0 0.0
        %2763 = vmatpush1.msra.mxu0 0.0
        %2764 = vmatprep.subr.mxu0 0.0
        %2765 = vmatpush1.msra.mxu0 0.0
        %2766 = vmatprep.subr.mxu0 0.0
        %2767 = vmatpush1.msra.mxu0 0.0
        %2768 = vmatprep.subr.mxu0 0.0
        %2769 = vmatpush1.msra.mxu0 0.0
        %2770 = vmatprep.subr.mxu0 0.0
        %2771 = vmatpush1.msra.mxu0 0.0
        %2772 = vmatprep.subr.mxu0 0.0
        %2773 = vmatpush1.msra.mxu0 0.0
        %2774 = vmatprep.subr.mxu0 0.0
        %2775 = vmatpush1.msra.mxu0 0.0
        %2776 = vmatprep.subr.mxu0 0.0
        %2777 = vmatpush1.msra.mxu0 0.0
        %2778 = vmatprep.subr.mxu0 0.0
        %2779 = vmatpush1.msra.mxu0 0.0
        %2780 = vmatprep.subr.mxu0 0.0
        %2781 = vmatpush1.msra.mxu0 0.0
        %2782 = vmatprep.subr.mxu0 0.0
        %2783 = vmatpush1.msra.mxu0 0.0
        %2784 = vmatprep.subr.mxu0 0.0
        %2785 = vmatpush1.msra.mxu0 0.0
        %2786 = vmatprep.subr.mxu0 0.0
        %2787 = vmatpush1.msra.mxu0 0.0
        %2788 = vmatprep.subr.mxu0 0.0
        %2789 = vmatpush1.msra.mxu0 0.0
        %2790 = vmatprep.subr.mxu0 0.0
        %2791 = vmatpush1.msra.mxu0 0.0
        %2792 = vmatprep.subr.mxu0 0.0
        %2793 = vmatpush1.msra.mxu0 0.0
        %2794 = vmatprep.subr.mxu0 0.0
        %2795 = vmatpush1.msra.mxu0 0.0
        %2796 = vmatprep.subr.mxu0 0.0
        %2797 = vmatpush1.msra.mxu0 0.0
        %2798 = vmatprep.subr.mxu0 0.0
        %2799 = vmatpush1.msra.mxu0 0.0
        %2800 = vmatprep.subr.mxu0 0.0
        %2801 = vmatpush1.msra.mxu0 0.0
        %2802 = vmatprep.subr.mxu0 0.0
        %2803 = vmatpush1.msra.mxu0 0.0
        %2804 = vmatprep.subr.mxu0 0.0
        %2805 = vmatpush1.msra.mxu0 0.0
        %2806 = vmatprep.subr.mxu0 0.0
        %2807 = vmatpush1.msra.mxu0 0.0
        %2808 = vmatprep.subr.mxu0 0.0
        %2809 = vmatpush1.msra.mxu0 0.0
        %2810 = vmatprep.subr.mxu0 0.0
        %2811 = vmatpush1.msra.mxu0 0.0
        %2812 = vmatprep.subr.mxu0 0.0
        %2813 = vmatpush1.msra.mxu0 0.0
        %2814 = vmatprep.subr.mxu0 0.0
        %2815 = vmatpush1.msra.mxu0 0.0
        %2816 = vmatprep.subr.mxu0 0.0
        %2817 = vmatpush1.msra.mxu0 0.0
        %2818 = vmatprep.subr.mxu0 0.0
        %2819 = vmatpush1.msra.mxu0 0.0
        %2820 = vmatprep.subr.mxu0 0.0
        %2821 = vmatpush1.msra.mxu0 0.0
        %2822 = vmatprep.mubr.f32.mxu0 0.0
        %2823 = vmatmul.mubr.f32.gmra.mrb[0].mxu0 %v771
        %v2824 = vpop.f32.mrb[0].mxu0
        %v2825 = vadd.f32 0.0, %v2824
        %v2826 = vpop.f32.mrb[0].mxu0
        %2827 = vmatprep.mubr.f32.mxu0 0.0
        %2828 = vmatmul.mubr.f32.gmra.mrb[0].mxu0 %v774
        %v2829 = vpop.f32.mrb[0].mxu0
        %v2830 = vadd.f32 0.0, %v2829
        %v2831 = vpop.f32.mrb[0].mxu0
        %2832 = vdwg.mxu0
        %2833 = vmatprep.subr.mxu0 0.0
        %2834 = vmatpush1.msra.mxu0 %v2756
        %2835 = vmatprep.subr.mxu0 0.0
        %2836 = vmatpush1.msra.mxu0 %v2757
        %2837 = vmatprep.subr.mxu0 0.0
        %2838 = vmatpush1.msra.mxu0 0.0
        %2839 = vmatprep.subr.mxu0 0.0
        %2840 = vmatpush1.msra.mxu0 0.0
        %2841 = vmatprep.subr.mxu0 0.0
        %2842 = vmatpush1.msra.mxu0 0.0
        %2843 = vmatprep.subr.mxu0 0.0
        %2844 = vmatpush1.msra.mxu0 0.0
        %2845 = vmatprep.subr.mxu0 0.0
        %2846 = vmatpush1.msra.mxu0 0.0
        %2847 = vmatprep.subr.mxu0 0.0
        %2848 = vmatpush1.msra.mxu0 0.0
        %2849 = vmatprep.subr.mxu0 0.0
        %2850 = vmatpush1.msra.mxu0 0.0
        %2851 = vmatprep.subr.mxu0 0.0
        %2852 = vmatpush1.msra.mxu0 0.0
        %2853 = vmatprep.subr.mxu0 0.0
        %2854 = vmatpush1.msra.mxu0 0.0
        %2855 = vmatprep.subr.mxu0 0.0
        %2856 = vmatpush1.msra.mxu0 0.0
        %2857 = vmatprep.subr.mxu0 0.0
        %2858 = vmatpush1.msra.mxu0 0.0
        %2859 = vmatprep.subr.mxu0 0.0
        %2860 = vmatpush1.msra.mxu0 0.0
        %2861 = vmatprep.subr.mxu0 0.0
        %2862 = vmatpush1.msra.mxu0 0.0
        %2863 = vmatprep.subr.mxu0 0.0
        %2864 = vmatpush1.msra.mxu0 0.0
        %2865 = vmatprep.subr.mxu0 0.0
        %2866 = vmatpush1.msra.mxu0 0.0
        %2867 = vmatprep.subr.mxu0 0.0
        %2868 = vmatpush1.msra.mxu0 0.0
        %2869 = vmatprep.subr.mxu0 0.0
        %2870 = vmatpush1.msra.mxu0 0.0
        %2871 = vmatprep.subr.mxu0 0.0
        %2872 = vmatpush1.msra.mxu0 0.0
        %2873 = vmatprep.subr.mxu0 0.0
        %2874 = vmatpush1.msra.mxu0 0.0
        %2875 = vmatprep.subr.mxu0 0.0
        %2876 = vmatpush1.msra.mxu0 0.0
        %2877 = vmatprep.subr.mxu0 0.0
        %2878 = vmatpush1.msra.mxu0 0.0
        %2879 = vmatprep.subr.mxu0 0.0
        %2880 = vmatpush1.msra.mxu0 0.0
        %2881 = vmatprep.subr.mxu0 0.0
        %2882 = vmatpush1.msra.mxu0 0.0
        %2883 = vmatprep.subr.mxu0 0.0
        %2884 = vmatpush1.msra.mxu0 0.0
        %2885 = vmatprep.subr.mxu0 0.0
        %2886 = vmatpush1.msra.mxu0 0.0
        %2887 = vmatprep.subr.mxu0 0.0
        %2888 = vmatpush1.msra.mxu0 0.0
        %2889 = vmatprep.subr.mxu0 0.0
        %2890 = vmatpush1.msra.mxu0 0.0
        %2891 = vmatprep.subr.mxu0 0.0
        %2892 = vmatpush1.msra.mxu0 0.0
        %2893 = vmatprep.subr.mxu0 0.0
        %2894 = vmatpush1.msra.mxu0 0.0
        %2895 = vmatprep.subr.mxu0 0.0
        %2896 = vmatpush1.msra.mxu0 0.0
        %2897 = vmatprep.mubr.f32.mxu0 0.0
        %2898 = vmatmul.mubr.f32.gmra.mrb[0].mxu0 %v852
        %v2899 = vpop.f32.mrb[0].mxu0
        %v2900 = vadd.f32 0.0, %v2899
        %v2901 = vpop.f32.mrb[0].mxu0
        %2902 = vmatprep.mubr.f32.mxu0 0.0
        %2903 = vmatmul.mubr.f32.gmra.mrb[0].mxu0 %v855
        %v2904 = vpop.f32.mrb[0].mxu0
        %v2905 = vadd.f32 0.0, %v2904
        %v2906 = vpop.f32.mrb[0].mxu0
        %2907 = vdwg.mxu0
        %v2908 = vld [vmem:[%s20] sm:$0xff]
        %s2909 = scalar_lea.vmem %s20, 8
        %v2910 = vld [vmem:[%s2909] sm:$0xff]
        %v2912 = vsel %vm935, %v2756, 0
        %v2915 = vsel %vm935, %v2757, 0
        %2917 = vmatprep.subr.mxu0 0.0
        %2918 = vmatpush1.msra.mxu0 %v2910
        %2919 = vmatprep.subr.mxu0 0.0
        %2920 = vmatpush1.msra.mxu0 0.0
        %2921 = vmatprep.subr.mxu0 0.0
        %2922 = vmatpush1.msra.mxu0 0.0
        %2923 = vmatprep.subr.mxu0 0.0
        %2924 = vmatpush1.msra.mxu0 0.0
        %2925 = vmatprep.subr.mxu0 0.0
        %2926 = vmatpush1.msra.mxu0 0.0
        %2927 = vmatprep.subr.mxu0 0.0
        %2928 = vmatpush1.msra.mxu0 0.0
        %2929 = vmatprep.subr.mxu0 0.0
        %2930 = vmatpush1.msra.mxu0 0.0
        %2931 = vmatprep.subr.mxu0 0.0
        %2932 = vmatpush1.msra.mxu0 0.0
        %2933 = vmatprep.subr.mxu0 0.0
        %2934 = vmatpush1.msra.mxu0 0.0
        %2935 = vmatprep.subr.mxu0 0.0
        %2936 = vmatpush1.msra.mxu0 0.0
        %2937 = vmatprep.subr.mxu0 0.0
        %2938 = vmatpush1.msra.mxu0 0.0
        %2939 = vmatprep.subr.mxu0 0.0
        %2940 = vmatpush1.msra.mxu0 0.0
        %2941 = vmatprep.subr.mxu0 0.0
        %2942 = vmatpush1.msra.mxu0 0.0
        %2943 = vmatprep.subr.mxu0 0.0
        %2944 = vmatpush1.msra.mxu0 0.0
        %2945 = vmatprep.subr.mxu0 0.0
        %2946 = vmatpush1.msra.mxu0 0.0
        %2947 = vmatprep.subr.mxu0 0.0
        %2948 = vmatpush1.msra.mxu0 0.0
        %2949 = vmatprep.subr.mxu0 0.0
        %2950 = vmatpush1.msra.mxu0 0.0
        %2951 = vmatprep.subr.mxu0 0.0
        %2952 = vmatpush1.msra.mxu0 0.0
        %2953 = vmatprep.subr.mxu0 0.0
        %2954 = vmatpush1.msra.mxu0 0.0
        %2955 = vmatprep.subr.mxu0 0.0
        %2956 = vmatpush1.msra.mxu0 0.0
        %2957 = vmatprep.subr.mxu0 0.0
        %2958 = vmatpush1.msra.mxu0 0.0
        %2959 = vmatprep.subr.mxu0 0.0
        %2960 = vmatpush1.msra.mxu0 0.0
        %2961 = vmatprep.subr.mxu0 0.0
        %2962 = vmatpush1.msra.mxu0 0.0
        %2963 = vmatprep.subr.mxu0 0.0
        %2964 = vmatpush1.msra.mxu0 0.0
        %2965 = vmatprep.subr.mxu0 0.0
        %2966 = vmatpush1.msra.mxu0 0.0
        %2967 = vmatprep.subr.mxu0 0.0
        %2968 = vmatpush1.msra.mxu0 0.0
        %2969 = vmatprep.subr.mxu0 0.0
        %2970 = vmatpush1.msra.mxu0 0.0
        %2971 = vmatprep.subr.mxu0 0.0
        %2972 = vmatpush1.msra.mxu0 0.0
        %2973 = vmatprep.subr.mxu0 0.0
        %2974 = vmatpush1.msra.mxu0 0.0
        %2975 = vmatprep.subr.mxu0 0.0
        %2976 = vmatpush1.msra.mxu0 0.0
        %2977 = vmatprep.subr.mxu0 0.0
        %2978 = vmatpush1.msra.mxu0 0.0
        %2979 = vmatprep.subr.mxu0 0.0
        %2980 = vmatpush1.msra.mxu0 0.0
        %2981 = vmatprep.mubr.f32.mxu0 0.0
        %2982 = vmatmul.mubr.f32.gmra.mrb[0].mxu0 %v2912
        %v2983 = vpop.f32.mrb[0].mxu0
        %v2984 = vadd.f32 0.0, %v2983
        %v2985 = vpop.f32.mrb[0].mxu0
        %2986 = vmatprep.mubr.f32.mxu0 0.0
        %2987 = vmatmul.mubr.f32.gmra.mrb[0].mxu0 %v2915
        %v2988 = vpop.f32.mrb[0].mxu0
        %v2989 = vadd.f32 0.0, %v2988
        %v2990 = vpop.f32.mrb[0].mxu0
        %2991 = vdwg.mxu0
        %v2993 = vsel %vm935, %v2825, 0
        %v2996 = vsel %vm935, %v2830, 0
        %2998 = vmatprep.subr.mxu0 0.0
        %2999 = vmatpush1.msra.mxu0 %v2908
        %3000 = vmatprep.subr.mxu0 0.0
        %3001 = vmatpush1.msra.mxu0 0.0
        %3002 = vmatprep.subr.mxu0 0.0
        %3003 = vmatpush1.msra.mxu0 0.0
        %3004 = vmatprep.subr.mxu0 0.0
        %3005 = vmatpush1.msra.mxu0 0.0
        %3006 = vmatprep.subr.mxu0 0.0
        %3007 = vmatpush1.msra.mxu0 0.0
        %3008 = vmatprep.subr.mxu0 0.0
        %3009 = vmatpush1.msra.mxu0 0.0
        %3010 = vmatprep.subr.mxu0 0.0
        %3011 = vmatpush1.msra.mxu0 0.0
        %3012 = vmatprep.subr.mxu0 0.0
        %3013 = vmatpush1.msra.mxu0 0.0
        %3014 = vmatprep.subr.mxu0 0.0
        %3015 = vmatpush1.msra.mxu0 0.0
        %3016 = vmatprep.subr.mxu0 0.0
        %3017 = vmatpush1.msra.mxu0 0.0
        %3018 = vmatprep.subr.mxu0 0.0
        %3019 = vmatpush1.msra.mxu0 0.0
        %3020 = vmatprep.subr.mxu0 0.0
        %3021 = vmatpush1.msra.mxu0 0.0
        %3022 = vmatprep.subr.mxu0 0.0
        %3023 = vmatpush1.msra.mxu0 0.0
        %3024 = vmatprep.subr.mxu0 0.0
        %3025 = vmatpush1.msra.mxu0 0.0
        %3026 = vmatprep.subr.mxu0 0.0
        %3027 = vmatpush1.msra.mxu0 0.0
        %3028 = vmatprep.subr.mxu0 0.0
        %3029 = vmatpush1.msra.mxu0 0.0
        %3030 = vmatprep.subr.mxu0 0.0
        %3031 = vmatpush1.msra.mxu0 0.0
        %3032 = vmatprep.subr.mxu0 0.0
        %3033 = vmatpush1.msra.mxu0 0.0
        %3034 = vmatprep.subr.mxu0 0.0
        %3035 = vmatpush1.msra.mxu0 0.0
        %3036 = vmatprep.subr.mxu0 0.0
        %3037 = vmatpush1.msra.mxu0 0.0
        %3038 = vmatprep.subr.mxu0 0.0
        %3039 = vmatpush1.msra.mxu0 0.0
        %3040 = vmatprep.subr.mxu0 0.0
        %3041 = vmatpush1.msra.mxu0 0.0
        %3042 = vmatprep.subr.mxu0 0.0
        %3043 = vmatpush1.msra.mxu0 0.0
        %3044 = vmatprep.subr.mxu0 0.0
        %3045 = vmatpush1.msra.mxu0 0.0
        %3046 = vmatprep.subr.mxu0 0.0
        %3047 = vmatpush1.msra.mxu0 0.0
        %3048 = vmatprep.subr.mxu0 0.0
        %3049 = vmatpush1.msra.mxu0 0.0
        %3050 = vmatprep.subr.mxu0 0.0
        %3051 = vmatpush1.msra.mxu0 0.0
        %3052 = vmatprep.subr.mxu0 0.0
        %3053 = vmatpush1.msra.mxu0 0.0
        %3054 = vmatprep.subr.mxu0 0.0
        %3055 = vmatpush1.msra.mxu0 0.0
        %3056 = vmatprep.subr.mxu0 0.0
        %3057 = vmatpush1.msra.mxu0 0.0
        %3058 = vmatprep.subr.mxu0 0.0
        %3059 = vmatpush1.msra.mxu0 0.0
        %3060 = vmatprep.subr.mxu0 0.0
        %3061 = vmatpush1.msra.mxu0 0.0
        %3062 = vmatprep.mubr.f32.mxu0 0.0
        %3063 = vmatmul.mubr.f32.gmra.mrb[0].mxu0 %v2993
        %v3064 = vpop.f32.mrb[0].mxu0
        %v3065 = vadd.f32 %v2984, %v3064
        %v3066 = vpop.f32.mrb[0].mxu0
        %3067 = vmatprep.mubr.f32.mxu0 0.0
        %3068 = vmatmul.mubr.f32.gmra.mrb[0].mxu0 %v2996
        %v3069 = vpop.f32.mrb[0].mxu0
        %v3070 = vadd.f32 %v2989, %v3069
        %v3071 = vpop.f32.mrb[0].mxu0
        %3072 = vdwg.mxu0
        %s3073 = scalar_lea.vmem %s20, 16
        %v3074 = vld [vmem:[%s3073] sm:$0xff]
        %v3076 = vsel %vm935, %v2900, 0
        %v3079 = vsel %vm935, %v2905, 0
        %3081 = vmatprep.subr.mxu0 0.0
        %3082 = vmatpush1.msra.mxu0 %v3074
        %3083 = vmatprep.subr.mxu0 0.0
        %3084 = vmatpush1.msra.mxu0 0.0
        %3085 = vmatprep.subr.mxu0 0.0
        %3086 = vmatpush1.msra.mxu0 0.0
        %3087 = vmatprep.subr.mxu0 0.0
        %3088 = vmatpush1.msra.mxu0 0.0
        %3089 = vmatprep.subr.mxu0 0.0
        %3090 = vmatpush1.msra.mxu0 0.0
        %3091 = vmatprep.subr.mxu0 0.0
        %3092 = vmatpush1.msra.mxu0 0.0
        %3093 = vmatprep.subr.mxu0 0.0
        %3094 = vmatpush1.msra.mxu0 0.0
        %3095 = vmatprep.subr.mxu0 0.0
        %3096 = vmatpush1.msra.mxu0 0.0
        %3097 = vmatprep.subr.mxu0 0.0
        %3098 = vmatpush1.msra.mxu0 0.0
        %3099 = vmatprep.subr.mxu0 0.0
        %3100 = vmatpush1.msra.mxu0 0.0
        %3101 = vmatprep.subr.mxu0 0.0
        %3102 = vmatpush1.msra.mxu0 0.0
        %3103 = vmatprep.subr.mxu0 0.0
        %3104 = vmatpush1.msra.mxu0 0.0
        %3105 = vmatprep.subr.mxu0 0.0
        %3106 = vmatpush1.msra.mxu0 0.0
        %3107 = vmatprep.subr.mxu0 0.0
        %3108 = vmatpush1.msra.mxu0 0.0
        %3109 = vmatprep.subr.mxu0 0.0
        %3110 = vmatpush1.msra.mxu0 0.0
        %3111 = vmatprep.subr.mxu0 0.0
        %3112 = vmatpush1.msra.mxu0 0.0
        %3113 = vmatprep.subr.mxu0 0.0
        %3114 = vmatpush1.msra.mxu0 0.0
        %3115 = vmatprep.subr.mxu0 0.0
        %3116 = vmatpush1.msra.mxu0 0.0
        %3117 = vmatprep.subr.mxu0 0.0
        %3118 = vmatpush1.msra.mxu0 0.0
        %3119 = vmatprep.subr.mxu0 0.0
        %3120 = vmatpush1.msra.mxu0 0.0
        %3121 = vmatprep.subr.mxu0 0.0
        %3122 = vmatpush1.msra.mxu0 0.0
        %3123 = vmatprep.subr.mxu0 0.0
        %3124 = vmatpush1.msra.mxu0 0.0
        %3125 = vmatprep.subr.mxu0 0.0
        %3126 = vmatpush1.msra.mxu0 0.0
        %3127 = vmatprep.subr.mxu0 0.0
        %3128 = vmatpush1.msra.mxu0 0.0
        %3129 = vmatprep.subr.mxu0 0.0
        %3130 = vmatpush1.msra.mxu0 0.0
        %3131 = vmatprep.subr.mxu0 0.0
        %3132 = vmatpush1.msra.mxu0 0.0
        %3133 = vmatprep.subr.mxu0 0.0
        %3134 = vmatpush1.msra.mxu0 0.0
        %3135 = vmatprep.subr.mxu0 0.0
        %3136 = vmatpush1.msra.mxu0 0.0
        %3137 = vmatprep.subr.mxu0 0.0
        %3138 = vmatpush1.msra.mxu0 0.0
        %3139 = vmatprep.subr.mxu0 0.0
        %3140 = vmatpush1.msra.mxu0 0.0
        %3141 = vmatprep.subr.mxu0 0.0
        %3142 = vmatpush1.msra.mxu0 0.0
        %3143 = vmatprep.subr.mxu0 0.0
        %3144 = vmatpush1.msra.mxu0 0.0
        %3145 = vmatprep.mubr.f32.mxu0 0.0
        %3146 = vmatmul.mubr.f32.gmra.mrb[0].mxu0 %v3076
        %v3147 = vpop.f32.mrb[0].mxu0
        %v3148 = vadd.f32 0.0, %v3147
        %v3149 = vpop.f32.mrb[0].mxu0
        %3150 = vmatprep.mubr.f32.mxu0 0.0
        %3151 = vmatmul.mubr.f32.gmra.mrb[0].mxu0 %v3079
        %v3152 = vpop.f32.mrb[0].mxu0
        %v3153 = vadd.f32 0.0, %v3152
        %v3154 = vpop.f32.mrb[0].mxu0
        %3155 = vdwg.mxu0
        %v3156 = vadd.f32 %v3065, %v3148
        %v3157 = vadd.f32 %v3070, %v3153
        %v3158 = vld [vmem:[%s21] sm:$0x1]
        %v3160 = vlaneseq
        %v3161 = vshrl.u32 %v3160, 7
        %v3162 = vsub.s32 0, %v3161
        %v3163 = vrot.slane %v3158, %v3162
        %v3165 = vadd.f32 %v3156, %v3163
        %v3166 = vadd.f32 %v3157, %v3163
        %v3167 = vadd.f32 %v3165, %v2238
        %v3168 = vadd.f32 %v3166, %v2239
        %3169 = vst.msk [vmem:[%s723] sm:$0xff] %vm935, %v3167
        %3170 = vst.msk [vmem:[%s723 + $0x8] sm:$0xff] %vm935, %v3168
        %p3171 = scmp.lt.s32.totalorder %s35, 1
        %s3172 = scalar_select %p3171, %s35, 1
        %s3173 = smul.addr %s3172, 2
        %s3174 = smul.addr %s3173, 8
        %s3175 = scalar_lea.vmem %s22, %s3174
        // Predicated region
        $region117: #{tpu_custom_call.1} parent=107 // pred_check
          %p3176 = pneg %p525
        $region118: #{tpu_custom_call.1} parent=107 // pred_check_branch
          %3178 = sbr.rel (%p3176) target = $region120
        $region119: #{tpu_custom_call.1} parent=107 // pred_region
          _
        $region120: #{tpu_custom_call.1} parent=107 // pred_fallthru
          _
      $region108: #{tpu_custom_call.1} parent=5 // pred_fallthru
        _
      %p3179 = scmp.le.s32.totalorder 2, %s30
      // Predicated region
      $region121: #{tpu_custom_call.1} parent=5 // pred_check
        %p3180 = pneg %p3179
      $region122: #{tpu_custom_call.1} parent=5 // pred_check_branch
        %3182 = sbr.rel (%p3180) target = $region124
      $region123: #{tpu_custom_call.1} parent=5 // pred_region
        %s3183 = ssub.s32 %s30, 2
        // Predicated region
        $region125: #{tpu_custom_call.1} parent=123 // pred_check
          %p3184 = pneg %p531
        $region126: #{tpu_custom_call.1} parent=123 // pred_check_branch
          %3186 = sbr.rel (%p3184) target = $region128
        $region127: #{tpu_custom_call.1} parent=123 // pred_region
          %p3187 = scmp.lt.s32.totalorder %s36, 1
          %s3188 = scalar_select %p3187, %s36, 1
          %s3189 = smul.addr %s3188, 2
          %s3190 = smul.addr %s3189, 8
          %s3191 = scalar_lea.vmem %s22, %s3190
        $region128: #{tpu_custom_call.1} parent=123 // pred_fallthru
          _
      $region124: #{tpu_custom_call.1} parent=5 // pred_fallthru
        _
    $region6: #{tpu_custom_call.1} parent=1 // loop_footer
      %s34 = sadd.s32 1, %s30
    $region7: #{tpu_custom_call.1} parent=1 // loop_footer_branch
      %29 = sbr.rel target = $region3
    $region8: #{tpu_custom_call.1} parent=1 // loop_exit
      _
    %3192 = vsyncpa [#allocation3], 1
    %s3193 = scalar_lea.sflag [#allocation3], 1
    %3194 = vsyncpa %s3193, 1
    %3195 = vsyncpa [#allocation5], 1

</llo_original>
